<compile_context>
chip_gen: v7x
topology: tpu7x:2x2x1
jax: 0.10.0
libtpu: 0.0.40
codegen_flags: <defaults>
</compile_context>

<pallas_src>
import math

import jax
import jax.numpy as jnp
from jax.experimental import pallas as pl
from jax.experimental.pallas import tpu as pltpu

WINDOW_SIZE = 11
SIGMA = 1.5
C1 = 0.01 ** 2
C2 = 0.03 ** 2


def _gaussian_1d(window_size, sigma):
    g = [math.exp(-((x - window_size // 2) ** 2) / float(2 * sigma ** 2))
         for x in range(window_size)]
    s = sum(g)
    return [v / s for v in g]


def _band_matrix(n, gauss, window_size):
    """A[i, j] = g[j - i + p] if |j - i| <= p else 0  (zero-padded 'same' conv)."""
    p = window_size // 2
    g = jnp.asarray(gauss, dtype=jnp.float32)
    i = jnp.arange(n)[:, None]
    j = jnp.arange(n)[None, :]
    d = j - i + p
    valid = (d >= 0) & (d < window_size)
    return jnp.where(valid, g[jnp.clip(d, 0, window_size - 1)], 0.0).astype(jnp.float32)


def _pick_block_channels(nc, h, w, max_bc=16, vmem_budget=24 << 20):
    """Largest divisor of nc that keeps the per-step working set within budget."""
    bytes_per_chan = 4 * (24 * h * w + 5 * h * h)
    cap = max(1, min(max_bc, vmem_budget // max(bytes_per_chan, 1)))
    for d in range(int(min(cap, nc)), 0, -1):
        if nc % d == 0:
            return d
    return 1


def _ssim_kernel(x1_ref, x2_ref, ah_ref, awt_ref, out_ref):
    x1 = x1_ref[...]          # (BC, H, W)
    x2 = x2_ref[...]          # (BC, H, W)
    ah = ah_ref[...]          # (H, H)  band matrix (vertical pass)
    awt = awt_ref[...]        # (W, W)  band matrix transposed (horizontal pass)

    bc, h, w = x1.shape
    k = 5 * bc

    # Fuse the five conv inputs along the leading (channel) axis.
    t = jnp.concatenate([x1, x2, x1 * x1, x2 * x2, x1 * x2], axis=0)   # (K, H, W)

    # Vertical pass: batched MXU matmul (flash-attention style einsum pattern).
    ahb = jnp.broadcast_to(ah[None, :, :], (k, h, h))
    y = jnp.einsum('khH,kHw->khw', ahb, t,
                   preferred_element_type=jnp.float32)                 # (K, H, W)

    # Horizontal pass: one wide 2-D MXU matmul with M = 5*BC*H.
    p = jnp.dot(y.reshape(k * h, w), awt,
                preferred_element_type=jnp.float32)                    # (K*H, W)

    chunk = bc * h
    mu1 = p[0 * chunk:1 * chunk]
    mu2 = p[1 * chunk:2 * chunk]
    e11 = p[2 * chunk:3 * chunk]
    e22 = p[3 * chunk:4 * chunk]
    e12 = p[4 * chunk:5 * chunk]

    mu1_sq = mu1 * mu1
    mu2_sq = mu2 * mu2
    mu1_mu2 = mu1 * mu2
    sigma1_sq = e11 - mu1_sq
    sigma2_sq = e22 - mu2_sq
    sigma12 = e12 - mu1_mu2

    ssim_map = ((2.0 * mu1_mu2 + C1) * (2.0 * sigma12 + C2)) / (
        (mu1_sq + mu2_sq + C1) * (sigma1_sq + sigma2_sq + C2))

    # Per-block partial sum, stored as a full (unmasked) lane-dense tile;
    # the wrapper reads element [0, 0] of each block and finishes the mean.
    s = jnp.sum(ssim_map)
    out_ref[...] = jnp.full(out_ref.shape, s, dtype=out_ref.dtype)


def ssim_loss(img1, img2, window_size=WINDOW_SIZE, size_average=True):
    """Matches SSIM_Loss.forward(img1, img2) with size_average=True (scalar)."""
    n, c, h, w = img1.shape
    gauss = _gaussian_1d(window_size, SIGMA)
    a_h = _band_matrix(h, gauss, window_size)          # (H, H)
    a_wt = _band_matrix(w, gauss, window_size).T       # (W, W)

    nc = n * c
    x1 = img1.reshape(nc, h, w).astype(jnp.float32)
    x2 = img2.reshape(nc, h, w).astype(jnp.float32)

    bc = _pick_block_channels(nc, h, w)
    nb = nc // bc

    # Explicit VMEM budget: double-buffered inputs + band matrices + in-kernel
    # intermediates (stacked conv inputs/outputs + broadcast A_h) + output tile.
    per_step_bytes = 4 * (
        2 * 2 * bc * h * w            # x1, x2 blocks, double-buffered
        + 2 * 2 * (h * h + w * w)     # band matrices, double-buffered
        + 2 * 8 * 128                 # output tile, double-buffered
        + 6 * 5 * bc * h * w          # t, y, p + elementwise temporaries
        + 5 * bc * h * h              # broadcast of A_h for the batched matmul
    )
    vmem_limit = int(min(64 << 20, max(32 << 20, 2 * per_step_bytes)))

    out = pl.pallas_call(
        _ssim_kernel,
        out_shape=jax.ShapeDtypeStruct((nb, 8, 128), jnp.float32),
        grid_spec=pltpu.PrefetchScalarGridSpec(
            num_scalar_prefetch=0,
            grid=(nb,),
            in_specs=[
                pl.BlockSpec((bc, h, w), lambda i: (i, 0, 0)),
                pl.BlockSpec((bc, h, w), lambda i: (i, 0, 0)),
                pl.BlockSpec((h, h), lambda i: (0, 0)),
                pl.BlockSpec((w, w), lambda i: (0, 0)),
            ],
            out_specs=pl.BlockSpec((1, 8, 128), lambda i: (i, 0, 0)),
        ),
        compiler_params=pltpu.CompilerParams(
            dimension_semantics=("parallel",),
            vmem_limit_bytes=vmem_limit,
        ),
    )(x1, x2, a_h, a_wt)

    # TODO(synk): size_average=False (per-sample mean) path not implemented.
    total = jnp.sum(out[:, 0, 0])
    return total / jnp.float32(nc * h * w)


def ssim_reference(img1, img2, window_size=WINDOW_SIZE):
    """Plain-JAX reference mirroring the PyTorch _ssim (sanity check)."""
    n, c, h, w = img1.shape
    g = jnp.asarray(_gaussian_1d(window_size, SIGMA), dtype=jnp.float32)
    w2d = jnp.outer(g, g)
    window = jnp.broadcast_to(w2d, (c, 1, window_size, window_size)).astype(jnp.float32)

    def conv(x):
        return jax.lax.conv_general_dilated(
            x.astype(jnp.float32), window, window_strides=(1, 1),
            padding=[(window_size // 2, window_size // 2)] * 2,
            dimension_numbers=("NCHW", "OIHW", "NCHW"),
            feature_group_count=c)

    mu1 = conv(img1)
    mu2 = conv(img2)
    mu1_sq = mu1 * mu1
    mu2_sq = mu2 * mu2
    mu1_mu2 = mu1 * mu2
    sigma1_sq = conv(img1 * img1) - mu1_sq
    sigma2_sq = conv(img2 * img2) - mu2_sq
    sigma12 = conv(img1 * img2) - mu1_mu2
    ssim_map = ((2.0 * mu1_mu2 + C1) * (2.0 * sigma12 + C2)) / (
        (mu1_sq + mu2_sq + C1) * (sigma1_sq + sigma2_sq + C2))
    return jnp.mean(ssim_map)


if __name__ == "__main__":
    key = jax.random.PRNGKey(0)
    k1, k2 = jax.random.split(key)
    img1 = jax.random.uniform(k1, (2, 4, 16, 16), dtype=jnp.float32)
    img2 = jax.random.uniform(k2, (2, 4, 16, 16), dtype=jnp.float32)

    loss = ssim_loss(img1, img2)
    loss = jax.block_until_ready(loss)

    ref = ssim_reference(img1, img2)
    assert jnp.allclose(loss, ref, rtol=1e-3, atol=1e-4), (float(loss), float(ref))

    print("KERNEL_OK")
</pallas_src>

<mosaic_0001>
module attributes {stable_mosaic.version = 11 : i64} {
  func.func @_ssim_kernel(%arg0: i32, %arg1: memref<8x16x16xf32, #tpu.memory_space<vmem>>, %arg2: memref<8x16x16xf32, #tpu.memory_space<vmem>>, %arg3: memref<16x16xf32, #tpu.memory_space<vmem>>, %arg4: memref<16x16xf32, #tpu.memory_space<vmem>>, %arg5: memref<1x8x128xf32, #tpu.memory_space<vmem>>) attributes {dimension_semantics = [#tpu.dimension_semantics<parallel>], iteration_bounds = array<i64: 1>, scalar_prefetch = 0 : i64, scratch_operands = 0 : i64, tpu.core_type = #tpu.core_type<tc>, window_params = [{transform_indices = @transform_0, window_bounds = array<i64: 8, 16, 16>}, {transform_indices = @transform_1, window_bounds = array<i64: 8, 16, 16>}, {pipeline_mode = #tpu.pipeline_mode<synchronous>, transform_indices = @transform_2, window_bounds = array<i64: 16, 16>}, {pipeline_mode = #tpu.pipeline_mode<synchronous>, transform_indices = @transform_3, window_bounds = array<i64: 16, 16>}, {transform_indices = @transform_4, window_bounds = array<i64: 1, 8, 128>}]} {
    %c0 = arith.constant 0 : index
    %c0_0 = arith.constant 0 : index
    %c0_1 = arith.constant 0 : index
    %0 = vector.load %arg1[%c0, %c0_0, %c0_1] : memref<8x16x16xf32, #tpu.memory_space<vmem>>, vector<8x16x16xf32>
    %c0_2 = arith.constant 0 : index
    %c0_3 = arith.constant 0 : index
    %c0_4 = arith.constant 0 : index
    %1 = vector.load %arg2[%c0_2, %c0_3, %c0_4] : memref<8x16x16xf32, #tpu.memory_space<vmem>>, vector<8x16x16xf32>
    %c0_5 = arith.constant 0 : index
    %c0_6 = arith.constant 0 : index
    %2 = vector.load %arg3[%c0_5, %c0_6] : memref<16x16xf32, #tpu.memory_space<vmem>>, vector<16x16xf32>
    %c0_7 = arith.constant 0 : index
    %c0_8 = arith.constant 0 : index
    %3 = vector.load %arg4[%c0_7, %c0_8] : memref<16x16xf32, #tpu.memory_space<vmem>>, vector<16x16xf32>
    %4 = arith.mulf %0, %0 : vector<8x16x16xf32>
    %5 = arith.mulf %1, %1 : vector<8x16x16xf32>
    %6 = arith.mulf %0, %1 : vector<8x16x16xf32>
    %7 = tpu.concatenate %0, %1, %4, %5, %6 in 0 : vector<8x16x16xf32>, vector<8x16x16xf32>, vector<8x16x16xf32>, vector<8x16x16xf32>, vector<8x16x16xf32> -> vector<40x16x16xf32>
    %8 = vector.shape_cast %2 : vector<16x16xf32> to vector<1x16x16xf32>
    %9 = vector.shape_cast %8 : vector<1x16x16xf32> to vector<1x16x16xf32>
    %10 = vector.broadcast %9 : vector<1x16x16xf32> to vector<40x16x16xf32>
    "tpu.trace_start"() <{level = 10 : i32, message = "khH,kHw->khw"}> : () -> ()
    %cst = arith.constant dense<0.000000e+00> : vector<40x16x16xf32>
    %11 = tpu.matmul %10, %7, %cst {dimension_numbers = #tpu.dot_dimension_numbers<[2], [1], [1], [2], [0, 0, 0, 1, 1, 2], [0], [0]>} : vector<40x16x16xf32>, vector<40x16x16xf32>, vector<40x16x16xf32> -> vector<40x16x16xf32>
    "tpu.trace_stop"() : () -> ()
    %12 = vector.shape_cast %11 : vector<40x16x16xf32> to vector<640x16xf32>
    %cst_9 = arith.constant dense<0.000000e+00> : vector<640x16xf32>
    %13 = tpu.matmul %12, %3, %cst_9 {dimension_numbers = #tpu.dot_dimension_numbers<[1], [0], [0], [1], [0, 0, 1, 1], [], []>} : vector<640x16xf32>, vector<16x16xf32>, vector<640x16xf32> -> vector<640x16xf32>
    %14 = vector.extract_strided_slice %13 {offsets = [0, 0], sizes = [128, 16], strides = [1, 1]} : vector<640x16xf32> to vector<128x16xf32>
    %15 = vector.extract_strided_slice %13 {offsets = [128, 0], sizes = [128, 16], strides = [1, 1]} : vector<640x16xf32> to vector<128x16xf32>
    %16 = vector.extract_strided_slice %13 {offsets = [256, 0], sizes = [128, 16], strides = [1, 1]} : vector<640x16xf32> to vector<128x16xf32>
    %17 = vector.extract_strided_slice %13 {offsets = [384, 0], sizes = [128, 16], strides = [1, 1]} : vector<640x16xf32> to vector<128x16xf32>
    %18 = vector.extract_strided_slice %13 {offsets = [512, 0], sizes = [128, 16], strides = [1, 1]} : vector<640x16xf32> to vector<128x16xf32>
    %19 = arith.mulf %14, %14 : vector<128x16xf32>
    %20 = arith.mulf %15, %15 : vector<128x16xf32>
    %21 = arith.mulf %14, %15 : vector<128x16xf32>
    %22 = arith.subf %16, %19 : vector<128x16xf32>
    %23 = arith.subf %17, %20 : vector<128x16xf32>
    %24 = arith.subf %18, %21 : vector<128x16xf32>
    %cst_10 = arith.constant 2.000000e+00 : f32
    %25 = vector.broadcast %cst_10 : f32 to vector<128x16xf32>
    %26 = arith.mulf %25, %21 : vector<128x16xf32>
    %cst_11 = arith.constant 9.99999974E-5 : f32
    %27 = vector.broadcast %cst_11 : f32 to vector<128x16xf32>
    %28 = arith.addf %26, %27 : vector<128x16xf32>
    %cst_12 = arith.constant 2.000000e+00 : f32
    %29 = vector.broadcast %cst_12 : f32 to vector<128x16xf32>
    %30 = arith.mulf %29, %24 : vector<128x16xf32>
    %cst_13 = arith.constant 8.99999984E-4 : f32
    %31 = vector.broadcast %cst_13 : f32 to vector<128x16xf32>
    %32 = arith.addf %30, %31 : vector<128x16xf32>
    %33 = arith.mulf %28, %32 : vector<128x16xf32>
    %34 = arith.addf %19, %20 : vector<128x16xf32>
    %cst_14 = arith.constant 9.99999974E-5 : f32
    %35 = vector.broadcast %cst_14 : f32 to vector<128x16xf32>
    %36 = arith.addf %34, %35 : vector<128x16xf32>
    %37 = arith.addf %22, %23 : vector<128x16xf32>
    %cst_15 = arith.constant 8.99999984E-4 : f32
    %38 = vector.broadcast %cst_15 : f32 to vector<128x16xf32>
    %39 = arith.addf %37, %38 : vector<128x16xf32>
    %40 = arith.mulf %36, %39 : vector<128x16xf32>
    %41 = arith.divf %33, %40 : vector<128x16xf32>
    %42 = vector.shape_cast %41 : vector<128x16xf32> to vector<1x128x16xf32>
    %cst_16 = arith.constant dense<0.000000e+00> : vector<1xf32>
    %43 = vector.multi_reduction <add>, %42, %cst_16 [1, 2] : vector<1x128x16xf32> to vector<1xf32>
    %44 = vector.shape_cast %43 : vector<1xf32> to vector<1x1x1xf32>
    %45 = vector.extract %44[0, 0, 0] : f32 from vector<1x1x1xf32>
    %46 = vector.broadcast %45 : f32 to vector<1x8x128xf32>
    %c0_17 = arith.constant 0 : index
    %c0_18 = arith.constant 0 : index
    %c0_19 = arith.constant 0 : index
    %47 = vector.load %arg5[%c0_17, %c0_18, %c0_19] : memref<1x8x128xf32, #tpu.memory_space<vmem>>, vector<1x8x128xf32>
    tpu.vector_store %arg5[%c0_17, %c0_18, %c0_19], %46 {strides = array<i32>} : memref<1x8x128xf32, #tpu.memory_space<vmem>>, vector<1x8x128xf32>,
    return
  }
  func.func @transform_0(%arg0: i32) -> (i32, i32, i32) {
    %c0_i32 = arith.constant 0 : i32
    %c0_i32_0 = arith.constant 0 : i32
    %c0_i32_1 = arith.constant 0 : i32
    return %arg0, %c0_i32, %c0_i32_0 : i32, i32, i32
  }
  func.func @transform_1(%arg0: i32) -> (i32, i32, i32) {
    %c0_i32 = arith.constant 0 : i32
    %c0_i32_0 = arith.constant 0 : i32
    %c0_i32_1 = arith.constant 0 : i32
    return %arg0, %c0_i32, %c0_i32_0 : i32, i32, i32
  }
  func.func @transform_2(%arg0: i32) -> (i32, i32) {
    %c0_i32 = arith.constant 0 : i32
    %c0_i32_0 = arith.constant 0 : i32
    %c0_i32_1 = arith.constant 0 : i32
    return %c0_i32, %c0_i32_0 : i32, i32
  }
  func.func @transform_3(%arg0: i32) -> (i32, i32) {
    %c0_i32 = arith.constant 0 : i32
    %c0_i32_0 = arith.constant 0 : i32
    %c0_i32_1 = arith.constant 0 : i32
    return %c0_i32, %c0_i32_0 : i32, i32
  }
  func.func @transform_4(%arg0: i32) -> (i32, i32, i32) {
    %c0_i32 = arith.constant 0 : i32
    %c0_i32_0 = arith.constant 0 : i32
    %c0_i32_1 = arith.constant 0 : i32
    return %arg0, %c0_i32, %c0_i32_0 : i32, i32, i32
  }
}

</mosaic_0001>

<llo_original>
// kernel: tpu_custom_call.1
$region0: #{tpu_custom_call.1}
  #allocation0 [shape = 'u32[]', space=smem, size = 0x4, offset = 0x4, fixed_abs, tag = 'smem constant byte address 0x4 - core index']
  #allocation1 [shape = 'u32[144,128]{1,0:T(1,128)}', space=vmem, size = 0x12000, scoped, tag = 'internal scratch']
  %s0 = inlined_call_operand.hbm [shape: f32[8,16,16], index: 0, kind: input, shape index: {}]
  %s1 = inlined_call_operand.hbm [shape: f32[8,16,16], index: 1, kind: input, shape index: {}]
  %s2 = inlined_call_operand.hbm [shape: f32[16,16], index: 2, kind: input, shape index: {}]
  %s3 = inlined_call_operand.hbm [shape: f32[16,16], index: 3, kind: input, shape index: {}]
  %s4 = inlined_call_operand.hbm [shape: f32[1,8,128], index: 4, kind: output, shape index: {}]
  %s5 = sld [smem:[#allocation0]]
  $region42: #{tpu_custom_call.1} parent=0
    _
  %s7 = ssub.s32 1, %s5
  %s8 = scalar_select 0, %s7, %s5
  $region1: #{tpu_custom_call.1} parent=0
    #allocation2 [shape = 'u8[65536]{0}', space=vmem, size = 0x10000, scoped, tag = 'input window, operand 0, single buffered']
    #allocation3 [shape = 's32[1]{0}', space=sflag, size = 0x4, scoped, tag = 'scoped memory for tpu_custom_call.1']
    #allocation4 [shape = 's32[1]{0}', space=sflag, size = 0x4, scoped, tag = 'scoped memory for tpu_custom_call.1']
    #allocation5 [shape = 'u8[65536]{0}', space=vmem, size = 0x10000, scoped, tag = 'input window, operand 1, single buffered']
    #allocation6 [shape = 's32[1]{0}', space=sflag, size = 0x4, scoped, tag = 'scoped memory for tpu_custom_call.1']
    #allocation7 [shape = 'u8[8192]{0}', space=vmem, size = 0x2000, scoped, tag = 'input window, operand 2, single buffered']
    #allocation8 [shape = 'u8[8192]{0}', space=vmem, size = 0x2000, scoped, tag = 'input window, operand 3, single buffered']
    #allocation9 [shape = 's32[1]{0}', space=sflag, size = 0x4, scoped, tag = 'scoped memory for tpu_custom_call.1']
    #allocation10 [shape = 'u8[4096]{0}', space=vmem, size = 0x1000, scoped, tag = 'output window, operand 0, single buffered']
    %9 = vsyncpa [#allocation3], 0
    %10 = vsyncpa [#allocation6], 0
    %11 = vsyncpa [#allocation9], 0
    %12 = vsyncpa [#allocation4], 0
    // Predicated region
    $region2: #{tpu_custom_call.1} parent=1 // pred_check
      _
    $region3: #{tpu_custom_call.1} parent=1 // pred_check_branch
      %14 = sbr.rel (0) target = $region5
    $region4: #{tpu_custom_call.1} parent=1 // pred_region
      %s16 = ssub.s32 2048, 2048
      %17 = vsyncadd [#allocation3], %s16
      %s18 = sshll.u32 [#allocation2], 4
      %s19 = int_to_ptr.vmem [resolvable:$true] %s18
      %24 = dma.hbm_to_vmem [thread:$0]  %s0, 2048, %s19, [#allocation3], 128, 128, 8
    $region5: #{tpu_custom_call.1} parent=1 // pred_fallthru
      _
    // Predicated region
    $region6: #{tpu_custom_call.1} parent=1 // pred_check
      _
    $region7: #{tpu_custom_call.1} parent=1 // pred_check_branch
      %26 = sbr.rel (0) target = $region9
    $region8: #{tpu_custom_call.1} parent=1 // pred_region
      %s28 = ssub.s32 2048, 2048
      %29 = vsyncadd [#allocation6], %s28
      %s30 = sshll.u32 [#allocation5], 4
      %s31 = int_to_ptr.vmem [resolvable:$true] %s30
      %36 = dma.hbm_to_vmem [thread:$0]  %s1, 2048, %s31, [#allocation6], 128, 128, 8
    $region9: #{tpu_custom_call.1} parent=1 // pred_fallthru
      _
    // Predicated region
    $region10: #{tpu_custom_call.1} parent=1 // pred_check
      _
    $region11: #{tpu_custom_call.1} parent=1 // pred_check_branch
      %38 = sbr.rel (0) target = $region13
    $region12: #{tpu_custom_call.1} parent=1 // pred_region
      %s40 = ssub.s32 256, 256
      %41 = vsyncadd [#allocation6], %s40
      %s42 = sshll.u32 [#allocation7], 4
      %s43 = int_to_ptr.vmem [resolvable:$true] %s42
      %48 = dma.hbm_to_vmem [thread:$0]  %s2, 256, %s43, [#allocation6], 128, 128, 8
    $region13: #{tpu_custom_call.1} parent=1 // pred_fallthru
      _
    // Predicated region
    $region14: #{tpu_custom_call.1} parent=1 // pred_check
      _
    $region15: #{tpu_custom_call.1} parent=1 // pred_check_branch
      %50 = sbr.rel (0) target = $region17
    $region16: #{tpu_custom_call.1} parent=1 // pred_region
      %s52 = ssub.s32 256, 256
      %53 = vsyncadd [#allocation9], %s52
      %s54 = sshll.u32 [#allocation8], 4
      %s55 = int_to_ptr.vmem [resolvable:$true] %s54
      %60 = dma.hbm_to_vmem [thread:$0]  %s3, 256, %s55, [#allocation9], 128, 128, 8
    $region17: #{tpu_custom_call.1} parent=1 // pred_fallthru
      _
    // Predicated region
    $region18: #{tpu_custom_call.1} parent=1 // pred_check
      _
    $region19: #{tpu_custom_call.1} parent=1 // pred_check_branch
      %62 = sbr.rel (0) target = $region21
    $region20: #{tpu_custom_call.1} parent=1 // pred_region
      %63 = dma.done [#allocation3], 2048
    $region21: #{tpu_custom_call.1} parent=1 // pred_fallthru
      _
    // Predicated region
    $region22: #{tpu_custom_call.1} parent=1 // pred_check
      _
    $region23: #{tpu_custom_call.1} parent=1 // pred_check_branch
      %65 = sbr.rel (0) target = $region25
    $region24: #{tpu_custom_call.1} parent=1 // pred_region
      %66 = dma.done [#allocation6], 2048
    $region25: #{tpu_custom_call.1} parent=1 // pred_fallthru
      _
    // Predicated region
    $region26: #{tpu_custom_call.1} parent=1 // pred_check
      _
    $region27: #{tpu_custom_call.1} parent=1 // pred_check_branch
      %68 = sbr.rel (0) target = $region29
    $region28: #{tpu_custom_call.1} parent=1 // pred_region
      %69 = dma.done [#allocation6], 256
    $region29: #{tpu_custom_call.1} parent=1 // pred_fallthru
      _
    // Predicated region
    $region30: #{tpu_custom_call.1} parent=1 // pred_check
      _
    $region31: #{tpu_custom_call.1} parent=1 // pred_check_branch
      %71 = sbr.rel (0) target = $region33
    $region32: #{tpu_custom_call.1} parent=1 // pred_region
      %72 = dma.done [#allocation9], 256
    $region33: #{tpu_custom_call.1} parent=1 // pred_fallthru
      _
    %v73 = vld [vmem:[#allocation2] sm:$0xff]
    %v74 = vld [vmem:[#allocation2 + $0x8] sm:$0xff]
    %v75 = vld [vmem:[#allocation2 + $0x10] sm:$0xff]
    %v76 = vld [vmem:[#allocation2 + $0x18] sm:$0xff]
    %v77 = vld [vmem:[#allocation2 + $0x20] sm:$0xff]
    %v78 = vld [vmem:[#allocation2 + $0x28] sm:$0xff]
    %v79 = vld [vmem:[#allocation2 + $0x30] sm:$0xff]
    %v80 = vld [vmem:[#allocation2 + $0x38] sm:$0xff]
    %v81 = vld [vmem:[#allocation2 + $0x40] sm:$0xff]
    %v82 = vld [vmem:[#allocation2 + $0x48] sm:$0xff]
    %v83 = vld [vmem:[#allocation2 + $0x50] sm:$0xff]
    %v84 = vld [vmem:[#allocation2 + $0x58] sm:$0xff]
    %v85 = vld [vmem:[#allocation2 + $0x60] sm:$0xff]
    %v86 = vld [vmem:[#allocation2 + $0x68] sm:$0xff]
    %v87 = vld [vmem:[#allocation2 + $0x70] sm:$0xff]
    %v88 = vld [vmem:[#allocation2 + $0x78] sm:$0xff]
    %v89 = vld [vmem:[#allocation5] sm:$0xff]
    %v90 = vld [vmem:[#allocation5 + $0x8] sm:$0xff]
    %v91 = vld [vmem:[#allocation5 + $0x10] sm:$0xff]
    %v92 = vld [vmem:[#allocation5 + $0x18] sm:$0xff]
    %v93 = vld [vmem:[#allocation5 + $0x20] sm:$0xff]
    %v94 = vld [vmem:[#allocation5 + $0x28] sm:$0xff]
    %v95 = vld [vmem:[#allocation5 + $0x30] sm:$0xff]
    %v96 = vld [vmem:[#allocation5 + $0x38] sm:$0xff]
    %v97 = vld [vmem:[#allocation5 + $0x40] sm:$0xff]
    %v98 = vld [vmem:[#allocation5 + $0x48] sm:$0xff]
    %v99 = vld [vmem:[#allocation5 + $0x50] sm:$0xff]
    %v100 = vld [vmem:[#allocation5 + $0x58] sm:$0xff]
    %v101 = vld [vmem:[#allocation5 + $0x60] sm:$0xff]
    %v102 = vld [vmem:[#allocation5 + $0x68] sm:$0xff]
    %v103 = vld [vmem:[#allocation5 + $0x70] sm:$0xff]
    %v104 = vld [vmem:[#allocation5 + $0x78] sm:$0xff]
    %v105 = vld [vmem:[#allocation7] sm:$0xff]
    %v106 = vld [vmem:[#allocation7 + $0x8] sm:$0xff]
    %v107 = vld [vmem:[#allocation8] sm:$0xff]
    %v108 = vld [vmem:[#allocation8 + $0x8] sm:$0xff]
    %v109 = vmul.f32 %v73, %v73
    %v110 = vmul.f32 %v74, %v74
    %v111 = vmul.f32 %v75, %v75
    %v112 = vmul.f32 %v76, %v76
    %v113 = vmul.f32 %v77, %v77
    %v114 = vmul.f32 %v78, %v78
    %v115 = vmul.f32 %v79, %v79
    %v116 = vmul.f32 %v80, %v80
    %v117 = vmul.f32 %v81, %v81
    %v118 = vmul.f32 %v82, %v82
    %v119 = vmul.f32 %v83, %v83
    %v120 = vmul.f32 %v84, %v84
    %v121 = vmul.f32 %v85, %v85
    %v122 = vmul.f32 %v86, %v86
    %v123 = vmul.f32 %v87, %v87
    %v124 = vmul.f32 %v88, %v88
    %v125 = vmul.f32 %v89, %v89
    %v126 = vmul.f32 %v90, %v90
    %v127 = vmul.f32 %v91, %v91
    %v128 = vmul.f32 %v92, %v92
    %v129 = vmul.f32 %v93, %v93
    %v130 = vmul.f32 %v94, %v94
    %v131 = vmul.f32 %v95, %v95
    %v132 = vmul.f32 %v96, %v96
    %v133 = vmul.f32 %v97, %v97
    %v134 = vmul.f32 %v98, %v98
    %v135 = vmul.f32 %v99, %v99
    %v136 = vmul.f32 %v100, %v100
    %v137 = vmul.f32 %v101, %v101
    %v138 = vmul.f32 %v102, %v102
    %v139 = vmul.f32 %v103, %v103
    %v140 = vmul.f32 %v104, %v104
    %v141 = vmul.f32 %v73, %v89
    %v142 = vmul.f32 %v74, %v90
    %v143 = vmul.f32 %v75, %v91
    %v144 = vmul.f32 %v76, %v92
    %v145 = vmul.f32 %v77, %v93
    %v146 = vmul.f32 %v78, %v94
    %v147 = vmul.f32 %v79, %v95
    %v148 = vmul.f32 %v80, %v96
    %v149 = vmul.f32 %v81, %v97
    %v150 = vmul.f32 %v82, %v98
    %v151 = vmul.f32 %v83, %v99
    %v152 = vmul.f32 %v84, %v100
    %v153 = vmul.f32 %v85, %v101
    %v154 = vmul.f32 %v86, %v102
    %v155 = vmul.f32 %v87, %v103
    %v156 = vmul.f32 %v88, %v104
    %vm157 = vcmask 130048
    %v159 = vsel %vm157, %v105, 0
    %v162 = vsel %vm157, %v106, 0
    %164 = vmatprep.subr.mxu0 0.0
    %165 = vmatpush1.msra.mxu0 %v73
    %166 = vmatprep.subr.mxu0 0.0
    %167 = vmatpush1.msra.mxu0 %v74
    %168 = vmatprep.subr.mxu0 0.0
    %169 = vmatpush1.msra.mxu0 0.0
    %170 = vmatprep.subr.mxu0 0.0
    %171 = vmatpush1.msra.mxu0 0.0
    %172 = vmatprep.subr.mxu0 0.0
    %173 = vmatpush1.msra.mxu0 0.0
    %174 = vmatprep.subr.mxu0 0.0
    %175 = vmatpush1.msra.mxu0 0.0
    %176 = vmatprep.subr.mxu0 0.0
    %177 = vmatpush1.msra.mxu0 0.0
    %178 = vmatprep.subr.mxu0 0.0
    %179 = vmatpush1.msra.mxu0 0.0
    %180 = vmatprep.subr.mxu0 0.0
    %181 = vmatpush1.msra.mxu0 0.0
    %182 = vmatprep.subr.mxu0 0.0
    %183 = vmatpush1.msra.mxu0 0.0
    %184 = vmatprep.subr.mxu0 0.0
    %185 = vmatpush1.msra.mxu0 0.0
    %186 = vmatprep.subr.mxu0 0.0
    %187 = vmatpush1.msra.mxu0 0.0
    %188 = vmatprep.subr.mxu0 0.0
    %189 = vmatpush1.msra.mxu0 0.0
    %190 = vmatprep.subr.mxu0 0.0
    %191 = vmatpush1.msra.mxu0 0.0
    %192 = vmatprep.subr.mxu0 0.0
    %193 = vmatpush1.msra.mxu0 0.0
    %194 = vmatprep.subr.mxu0 0.0
    %195 = vmatpush1.msra.mxu0 0.0
    %196 = vmatprep.subr.mxu0 0.0
    %197 = vmatpush1.msra.mxu0 0.0
    %198 = vmatprep.subr.mxu0 0.0
    %199 = vmatpush1.msra.mxu0 0.0
    %200 = vmatprep.subr.mxu0 0.0
    %201 = vmatpush1.msra.mxu0 0.0
    %202 = vmatprep.subr.mxu0 0.0
    %203 = vmatpush1.msra.mxu0 0.0
    %204 = vmatprep.subr.mxu0 0.0
    %205 = vmatpush1.msra.mxu0 0.0
    %206 = vmatprep.subr.mxu0 0.0
    %207 = vmatpush1.msra.mxu0 0.0
    %208 = vmatprep.subr.mxu0 0.0
    %209 = vmatpush1.msra.mxu0 0.0
    %210 = vmatprep.subr.mxu0 0.0
    %211 = vmatpush1.msra.mxu0 0.0
    %212 = vmatprep.subr.mxu0 0.0
    %213 = vmatpush1.msra.mxu0 0.0
    %214 = vmatprep.subr.mxu0 0.0
    %215 = vmatpush1.msra.mxu0 0.0
    %216 = vmatprep.subr.mxu0 0.0
    %217 = vmatpush1.msra.mxu0 0.0
    %218 = vmatprep.subr.mxu0 0.0
    %219 = vmatpush1.msra.mxu0 0.0
    %220 = vmatprep.subr.mxu0 0.0
    %221 = vmatpush1.msra.mxu0 0.0
    %222 = vmatprep.subr.mxu0 0.0
    %223 = vmatpush1.msra.mxu0 0.0
    %224 = vmatprep.subr.mxu0 0.0
    %225 = vmatpush1.msra.mxu0 0.0
    %226 = vmatprep.subr.mxu0 0.0
    %227 = vmatpush1.msra.mxu0 0.0
    %228 = vmatprep.mubr.f32.mxu0 0.0
    %229 = vmatmul.mubr.f32.gmra.mrb[0].mxu0 %v159
    %v230 = vpop.f32.mrb[0].mxu0
    %v231 = vadd.f32 0.0, %v230
    %v232 = vpop.f32.mrb[0].mxu0
    %233 = vmatprep.mubr.f32.mxu0 0.0
    %234 = vmatmul.mubr.f32.gmra.mrb[0].mxu0 %v162
    %v235 = vpop.f32.mrb[0].mxu0
    %v236 = vadd.f32 0.0, %v235
    %v237 = vpop.f32.mrb[0].mxu0
    %238 = vdwg.mxu0
    %239 = vmatprep.subr.mxu0 0.0
    %240 = vmatpush1.msra.mxu0 %v75
    %241 = vmatprep.subr.mxu0 0.0
    %242 = vmatpush1.msra.mxu0 %v76
    %243 = vmatprep.subr.mxu0 0.0
    %244 = vmatpush1.msra.mxu0 0.0
    %245 = vmatprep.subr.mxu0 0.0
    %246 = vmatpush1.msra.mxu0 0.0
    %247 = vmatprep.subr.mxu0 0.0
    %248 = vmatpush1.msra.mxu0 0.0
    %249 = vmatprep.subr.mxu0 0.0
    %250 = vmatpush1.msra.mxu0 0.0
    %251 = vmatprep.subr.mxu0 0.0
    %252 = vmatpush1.msra.mxu0 0.0
    %253 = vmatprep.subr.mxu0 0.0
    %254 = vmatpush1.msra.mxu0 0.0
    %255 = vmatprep.subr.mxu0 0.0
    %256 = vmatpush1.msra.mxu0 0.0
    %257 = vmatprep.subr.mxu0 0.0
    %258 = vmatpush1.msra.mxu0 0.0
    %259 = vmatprep.subr.mxu0 0.0
    %260 = vmatpush1.msra.mxu0 0.0
    %261 = vmatprep.subr.mxu0 0.0
    %262 = vmatpush1.msra.mxu0 0.0
    %263 = vmatprep.subr.mxu0 0.0
    %264 = vmatpush1.msra.mxu0 0.0
    %265 = vmatprep.subr.mxu0 0.0
    %266 = vmatpush1.msra.mxu0 0.0
    %267 = vmatprep.subr.mxu0 0.0
    %268 = vmatpush1.msra.mxu0 0.0
    %269 = vmatprep.subr.mxu0 0.0
    %270 = vmatpush1.msra.mxu0 0.0
    %271 = vmatprep.subr.mxu0 0.0
    %272 = vmatpush1.msra.mxu0 0.0
    %273 = vmatprep.subr.mxu0 0.0
    %274 = vmatpush1.msra.mxu0 0.0
    %275 = vmatprep.subr.mxu0 0.0
    %276 = vmatpush1.msra.mxu0 0.0
    %277 = vmatprep.subr.mxu0 0.0
    %278 = vmatpush1.msra.mxu0 0.0
    %279 = vmatprep.subr.mxu0 0.0
    %280 = vmatpush1.msra.mxu0 0.0
    %281 = vmatprep.subr.mxu0 0.0
    %282 = vmatpush1.msra.mxu0 0.0
    %283 = vmatprep.subr.mxu0 0.0
    %284 = vmatpush1.msra.mxu0 0.0
    %285 = vmatprep.subr.mxu0 0.0
    %286 = vmatpush1.msra.mxu0 0.0
    %287 = vmatprep.subr.mxu0 0.0
    %288 = vmatpush1.msra.mxu0 0.0
    %289 = vmatprep.subr.mxu0 0.0
    %290 = vmatpush1.msra.mxu0 0.0
    %291 = vmatprep.subr.mxu0 0.0
    %292 = vmatpush1.msra.mxu0 0.0
    %293 = vmatprep.subr.mxu0 0.0
    %294 = vmatpush1.msra.mxu0 0.0
    %295 = vmatprep.subr.mxu0 0.0
    %296 = vmatpush1.msra.mxu0 0.0
    %297 = vmatprep.subr.mxu0 0.0
    %298 = vmatpush1.msra.mxu0 0.0
    %299 = vmatprep.subr.mxu0 0.0
    %300 = vmatpush1.msra.mxu0 0.0
    %301 = vmatprep.subr.mxu0 0.0
    %302 = vmatpush1.msra.mxu0 0.0
    %303 = vmatprep.mubr.f32.mxu0 0.0
    %304 = vmatmul.mubr.f32.gmra.mrb[0].mxu0 %v159
    %v305 = vpop.f32.mrb[0].mxu0
    %v306 = vadd.f32 0.0, %v305
    %v307 = vpop.f32.mrb[0].mxu0
    %308 = vmatprep.mubr.f32.mxu0 0.0
    %309 = vmatmul.mubr.f32.gmra.mrb[0].mxu0 %v162
    %v310 = vpop.f32.mrb[0].mxu0
    %v311 = vadd.f32 0.0, %v310
    %v312 = vpop.f32.mrb[0].mxu0
    %313 = vdwg.mxu0
    %314 = vmatprep.subr.mxu0 0.0
    %315 = vmatpush1.msra.mxu0 %v77
    %316 = vmatprep.subr.mxu0 0.0
    %317 = vmatpush1.msra.mxu0 %v78
    %318 = vmatprep.subr.mxu0 0.0
    %319 = vmatpush1.msra.mxu0 0.0
    %320 = vmatprep.subr.mxu0 0.0
    %321 = vmatpush1.msra.mxu0 0.0
    %322 = vmatprep.subr.mxu0 0.0
    %323 = vmatpush1.msra.mxu0 0.0
    %324 = vmatprep.subr.mxu0 0.0
    %325 = vmatpush1.msra.mxu0 0.0
    %326 = vmatprep.subr.mxu0 0.0
    %327 = vmatpush1.msra.mxu0 0.0
    %328 = vmatprep.subr.mxu0 0.0
    %329 = vmatpush1.msra.mxu0 0.0
    %330 = vmatprep.subr.mxu0 0.0
    %331 = vmatpush1.msra.mxu0 0.0
    %332 = vmatprep.subr.mxu0 0.0
    %333 = vmatpush1.msra.mxu0 0.0
    %334 = vmatprep.subr.mxu0 0.0
    %335 = vmatpush1.msra.mxu0 0.0
    %336 = vmatprep.subr.mxu0 0.0
    %337 = vmatpush1.msra.mxu0 0.0
    %338 = vmatprep.subr.mxu0 0.0
    %339 = vmatpush1.msra.mxu0 0.0
    %340 = vmatprep.subr.mxu0 0.0
    %341 = vmatpush1.msra.mxu0 0.0
    %342 = vmatprep.subr.mxu0 0.0
    %343 = vmatpush1.msra.mxu0 0.0
    %344 = vmatprep.subr.mxu0 0.0
    %345 = vmatpush1.msra.mxu0 0.0
    %346 = vmatprep.subr.mxu0 0.0
    %347 = vmatpush1.msra.mxu0 0.0
    %348 = vmatprep.subr.mxu0 0.0
    %349 = vmatpush1.msra.mxu0 0.0
    %350 = vmatprep.subr.mxu0 0.0
    %351 = vmatpush1.msra.mxu0 0.0
    %352 = vmatprep.subr.mxu0 0.0
    %353 = vmatpush1.msra.mxu0 0.0
    %354 = vmatprep.subr.mxu0 0.0
    %355 = vmatpush1.msra.mxu0 0.0
    %356 = vmatprep.subr.mxu0 0.0
    %357 = vmatpush1.msra.mxu0 0.0
    %358 = vmatprep.subr.mxu0 0.0
    %359 = vmatpush1.msra.mxu0 0.0
    %360 = vmatprep.subr.mxu0 0.0
    %361 = vmatpush1.msra.mxu0 0.0
    %362 = vmatprep.subr.mxu0 0.0
    %363 = vmatpush1.msra.mxu0 0.0
    %364 = vmatprep.subr.mxu0 0.0
    %365 = vmatpush1.msra.mxu0 0.0
    %366 = vmatprep.subr.mxu0 0.0
    %367 = vmatpush1.msra.mxu0 0.0
    %368 = vmatprep.subr.mxu0 0.0
    %369 = vmatpush1.msra.mxu0 0.0
    %370 = vmatprep.subr.mxu0 0.0
    %371 = vmatpush1.msra.mxu0 0.0
    %372 = vmatprep.subr.mxu0 0.0
    %373 = vmatpush1.msra.mxu0 0.0
    %374 = vmatprep.subr.mxu0 0.0
    %375 = vmatpush1.msra.mxu0 0.0
    %376 = vmatprep.subr.mxu0 0.0
    %377 = vmatpush1.msra.mxu0 0.0
    %378 = vmatprep.mubr.f32.mxu0 0.0
    %379 = vmatmul.mubr.f32.gmra.mrb[0].mxu0 %v159
    %v380 = vpop.f32.mrb[0].mxu0
    %v381 = vadd.f32 0.0, %v380
    %v382 = vpop.f32.mrb[0].mxu0
    %383 = vmatprep.mubr.f32.mxu0 0.0
    %384 = vmatmul.mubr.f32.gmra.mrb[0].mxu0 %v162
    %v385 = vpop.f32.mrb[0].mxu0
    %v386 = vadd.f32 0.0, %v385
    %v387 = vpop.f32.mrb[0].mxu0
    %388 = vdwg.mxu0
    %389 = vmatprep.subr.mxu0 0.0
    %390 = vmatpush1.msra.mxu0 %v79
    %391 = vmatprep.subr.mxu0 0.0
    %392 = vmatpush1.msra.mxu0 %v80
    %393 = vmatprep.subr.mxu0 0.0
    %394 = vmatpush1.msra.mxu0 0.0
    %395 = vmatprep.subr.mxu0 0.0
    %396 = vmatpush1.msra.mxu0 0.0
    %397 = vmatprep.subr.mxu0 0.0
    %398 = vmatpush1.msra.mxu0 0.0
    %399 = vmatprep.subr.mxu0 0.0
    %400 = vmatpush1.msra.mxu0 0.0
    %401 = vmatprep.subr.mxu0 0.0
    %402 = vmatpush1.msra.mxu0 0.0
    %403 = vmatprep.subr.mxu0 0.0
    %404 = vmatpush1.msra.mxu0 0.0
    %405 = vmatprep.subr.mxu0 0.0
    %406 = vmatpush1.msra.mxu0 0.0
    %407 = vmatprep.subr.mxu0 0.0
    %408 = vmatpush1.msra.mxu0 0.0
    %409 = vmatprep.subr.mxu0 0.0
    %410 = vmatpush1.msra.mxu0 0.0
    %411 = vmatprep.subr.mxu0 0.0
    %412 = vmatpush1.msra.mxu0 0.0
    %413 = vmatprep.subr.mxu0 0.0
    %414 = vmatpush1.msra.mxu0 0.0
    %415 = vmatprep.subr.mxu0 0.0
    %416 = vmatpush1.msra.mxu0 0.0
    %417 = vmatprep.subr.mxu0 0.0
    %418 = vmatpush1.msra.mxu0 0.0
    %419 = vmatprep.subr.mxu0 0.0
    %420 = vmatpush1.msra.mxu0 0.0
    %421 = vmatprep.subr.mxu0 0.0
    %422 = vmatpush1.msra.mxu0 0.0
    %423 = vmatprep.subr.mxu0 0.0
    %424 = vmatpush1.msra.mxu0 0.0
    %425 = vmatprep.subr.mxu0 0.0
    %426 = vmatpush1.msra.mxu0 0.0
    %427 = vmatprep.subr.mxu0 0.0
    %428 = vmatpush1.msra.mxu0 0.0
    %429 = vmatprep.subr.mxu0 0.0
    %430 = vmatpush1.msra.mxu0 0.0
    %431 = vmatprep.subr.mxu0 0.0
    %432 = vmatpush1.msra.mxu0 0.0
    %433 = vmatprep.subr.mxu0 0.0
    %434 = vmatpush1.msra.mxu0 0.0
    %435 = vmatprep.subr.mxu0 0.0
    %436 = vmatpush1.msra.mxu0 0.0
    %437 = vmatprep.subr.mxu0 0.0
    %438 = vmatpush1.msra.mxu0 0.0
    %439 = vmatprep.subr.mxu0 0.0
    %440 = vmatpush1.msra.mxu0 0.0
    %441 = vmatprep.subr.mxu0 0.0
    %442 = vmatpush1.msra.mxu0 0.0
    %443 = vmatprep.subr.mxu0 0.0
    %444 = vmatpush1.msra.mxu0 0.0
    %445 = vmatprep.subr.mxu0 0.0
    %446 = vmatpush1.msra.mxu0 0.0
    %447 = vmatprep.subr.mxu0 0.0
    %448 = vmatpush1.msra.mxu0 0.0
    %449 = vmatprep.subr.mxu0 0.0
    %450 = vmatpush1.msra.mxu0 0.0
    %451 = vmatprep.subr.mxu0 0.0
    %452 = vmatpush1.msra.mxu0 0.0
    %453 = vmatprep.mubr.f32.mxu0 0.0
    %454 = vmatmul.mubr.f32.gmra.mrb[0].mxu0 %v159
    %v455 = vpop.f32.mrb[0].mxu0
    %v456 = vadd.f32 0.0, %v455
    %v457 = vpop.f32.mrb[0].mxu0
    %458 = vmatprep.mubr.f32.mxu0 0.0
    %459 = vmatmul.mubr.f32.gmra.mrb[0].mxu0 %v162
    %v460 = vpop.f32.mrb[0].mxu0
    %v461 = vadd.f32 0.0, %v460
    %v462 = vpop.f32.mrb[0].mxu0
    %463 = vdwg.mxu0
    %464 = vmatprep.subr.mxu0 0.0
    %465 = vmatpush1.msra.mxu0 %v81
    %466 = vmatprep.subr.mxu0 0.0
    %467 = vmatpush1.msra.mxu0 %v82
    %468 = vmatprep.subr.mxu0 0.0
    %469 = vmatpush1.msra.mxu0 0.0
    %470 = vmatprep.subr.mxu0 0.0
    %471 = vmatpush1.msra.mxu0 0.0
    %472 = vmatprep.subr.mxu0 0.0
    %473 = vmatpush1.msra.mxu0 0.0
    %474 = vmatprep.subr.mxu0 0.0
    %475 = vmatpush1.msra.mxu0 0.0
    %476 = vmatprep.subr.mxu0 0.0
    %477 = vmatpush1.msra.mxu0 0.0
    %478 = vmatprep.subr.mxu0 0.0
    %479 = vmatpush1.msra.mxu0 0.0
    %480 = vmatprep.subr.mxu0 0.0
    %481 = vmatpush1.msra.mxu0 0.0
    %482 = vmatprep.subr.mxu0 0.0
    %483 = vmatpush1.msra.mxu0 0.0
    %484 = vmatprep.subr.mxu0 0.0
    %485 = vmatpush1.msra.mxu0 0.0
    %486 = vmatprep.subr.mxu0 0.0
    %487 = vmatpush1.msra.mxu0 0.0
    %488 = vmatprep.subr.mxu0 0.0
    %489 = vmatpush1.msra.mxu0 0.0
    %490 = vmatprep.subr.mxu0 0.0
    %491 = vmatpush1.msra.mxu0 0.0
    %492 = vmatprep.subr.mxu0 0.0
    %493 = vmatpush1.msra.mxu0 0.0
    %494 = vmatprep.subr.mxu0 0.0
    %495 = vmatpush1.msra.mxu0 0.0
    %496 = vmatprep.subr.mxu0 0.0
    %497 = vmatpush1.msra.mxu0 0.0
    %498 = vmatprep.subr.mxu0 0.0
    %499 = vmatpush1.msra.mxu0 0.0
    %500 = vmatprep.subr.mxu0 0.0
    %501 = vmatpush1.msra.mxu0 0.0
    %502 = vmatprep.subr.mxu0 0.0
    %503 = vmatpush1.msra.mxu0 0.0
    %504 = vmatprep.subr.mxu0 0.0
    %505 = vmatpush1.msra.mxu0 0.0
    %506 = vmatprep.subr.mxu0 0.0
    %507 = vmatpush1.msra.mxu0 0.0
    %508 = vmatprep.subr.mxu0 0.0
    %509 = vmatpush1.msra.mxu0 0.0
    %510 = vmatprep.subr.mxu0 0.0
    %511 = vmatpush1.msra.mxu0 0.0
    %512 = vmatprep.subr.mxu0 0.0
    %513 = vmatpush1.msra.mxu0 0.0
    %514 = vmatprep.subr.mxu0 0.0
    %515 = vmatpush1.msra.mxu0 0.0
    %516 = vmatprep.subr.mxu0 0.0
    %517 = vmatpush1.msra.mxu0 0.0
    %518 = vmatprep.subr.mxu0 0.0
    %519 = vmatpush1.msra.mxu0 0.0
    %520 = vmatprep.subr.mxu0 0.0
    %521 = vmatpush1.msra.mxu0 0.0
    %522 = vmatprep.subr.mxu0 0.0
    %523 = vmatpush1.msra.mxu0 0.0
    %524 = vmatprep.subr.mxu0 0.0
    %525 = vmatpush1.msra.mxu0 0.0
    %526 = vmatprep.subr.mxu0 0.0
    %527 = vmatpush1.msra.mxu0 0.0
    %528 = vmatprep.mubr.f32.mxu0 0.0
    %529 = vmatmul.mubr.f32.gmra.mrb[0].mxu0 %v159
    %v530 = vpop.f32.mrb[0].mxu0
    %v531 = vadd.f32 0.0, %v530
    %v532 = vpop.f32.mrb[0].mxu0
    %533 = vmatprep.mubr.f32.mxu0 0.0
    %534 = vmatmul.mubr.f32.gmra.mrb[0].mxu0 %v162
    %v535 = vpop.f32.mrb[0].mxu0
    %v536 = vadd.f32 0.0, %v535
    %v537 = vpop.f32.mrb[0].mxu0
    %538 = vdwg.mxu0
    %539 = vmatprep.subr.mxu0 0.0
    %540 = vmatpush1.msra.mxu0 %v83
    %541 = vmatprep.subr.mxu0 0.0
    %542 = vmatpush1.msra.mxu0 %v84
    %543 = vmatprep.subr.mxu0 0.0
    %544 = vmatpush1.msra.mxu0 0.0
    %545 = vmatprep.subr.mxu0 0.0
    %546 = vmatpush1.msra.mxu0 0.0
    %547 = vmatprep.subr.mxu0 0.0
    %548 = vmatpush1.msra.mxu0 0.0
    %549 = vmatprep.subr.mxu0 0.0
    %550 = vmatpush1.msra.mxu0 0.0
    %551 = vmatprep.subr.mxu0 0.0
    %552 = vmatpush1.msra.mxu0 0.0
    %553 = vmatprep.subr.mxu0 0.0
    %554 = vmatpush1.msra.mxu0 0.0
    %555 = vmatprep.subr.mxu0 0.0
    %556 = vmatpush1.msra.mxu0 0.0
    %557 = vmatprep.subr.mxu0 0.0
    %558 = vmatpush1.msra.mxu0 0.0
    %559 = vmatprep.subr.mxu0 0.0
    %560 = vmatpush1.msra.mxu0 0.0
    %561 = vmatprep.subr.mxu0 0.0
    %562 = vmatpush1.msra.mxu0 0.0
    %563 = vmatprep.subr.mxu0 0.0
    %564 = vmatpush1.msra.mxu0 0.0
    %565 = vmatprep.subr.mxu0 0.0
    %566 = vmatpush1.msra.mxu0 0.0
    %567 = vmatprep.subr.mxu0 0.0
    %568 = vmatpush1.msra.mxu0 0.0
    %569 = vmatprep.subr.mxu0 0.0
    %570 = vmatpush1.msra.mxu0 0.0
    %571 = vmatprep.subr.mxu0 0.0
    %572 = vmatpush1.msra.mxu0 0.0
    %573 = vmatprep.subr.mxu0 0.0
    %574 = vmatpush1.msra.mxu0 0.0
    %575 = vmatprep.subr.mxu0 0.0
    %576 = vmatpush1.msra.mxu0 0.0
    %577 = vmatprep.subr.mxu0 0.0
    %578 = vmatpush1.msra.mxu0 0.0
    %579 = vmatprep.subr.mxu0 0.0
    %580 = vmatpush1.msra.mxu0 0.0
    %581 = vmatprep.subr.mxu0 0.0
    %582 = vmatpush1.msra.mxu0 0.0
    %583 = vmatprep.subr.mxu0 0.0
    %584 = vmatpush1.msra.mxu0 0.0
    %585 = vmatprep.subr.mxu0 0.0
    %586 = vmatpush1.msra.mxu0 0.0
    %587 = vmatprep.subr.mxu0 0.0
    %588 = vmatpush1.msra.mxu0 0.0
    %589 = vmatprep.subr.mxu0 0.0
    %590 = vmatpush1.msra.mxu0 0.0
    %591 = vmatprep.subr.mxu0 0.0
    %592 = vmatpush1.msra.mxu0 0.0
    %593 = vmatprep.subr.mxu0 0.0
    %594 = vmatpush1.msra.mxu0 0.0
    %595 = vmatprep.subr.mxu0 0.0
    %596 = vmatpush1.msra.mxu0 0.0
    %597 = vmatprep.subr.mxu0 0.0
    %598 = vmatpush1.msra.mxu0 0.0
    %599 = vmatprep.subr.mxu0 0.0
    %600 = vmatpush1.msra.mxu0 0.0
    %601 = vmatprep.subr.mxu0 0.0
    %602 = vmatpush1.msra.mxu0 0.0
    %603 = vmatprep.mubr.f32.mxu0 0.0
    %604 = vmatmul.mubr.f32.gmra.mrb[0].mxu0 %v159
    %v605 = vpop.f32.mrb[0].mxu0
    %v606 = vadd.f32 0.0, %v605
    %v607 = vpop.f32.mrb[0].mxu0
    %608 = vmatprep.mubr.f32.mxu0 0.0
    %609 = vmatmul.mubr.f32.gmra.mrb[0].mxu0 %v162
    %v610 = vpop.f32.mrb[0].mxu0
    %v611 = vadd.f32 0.0, %v610
    %v612 = vpop.f32.mrb[0].mxu0
    %613 = vdwg.mxu0
    %614 = vmatprep.subr.mxu0 0.0
    %615 = vmatpush1.msra.mxu0 %v85
    %616 = vmatprep.subr.mxu0 0.0
    %617 = vmatpush1.msra.mxu0 %v86
    %618 = vmatprep.subr.mxu0 0.0
    %619 = vmatpush1.msra.mxu0 0.0
    %620 = vmatprep.subr.mxu0 0.0
    %621 = vmatpush1.msra.mxu0 0.0
    %622 = vmatprep.subr.mxu0 0.0
    %623 = vmatpush1.msra.mxu0 0.0
    %624 = vmatprep.subr.mxu0 0.0
    %625 = vmatpush1.msra.mxu0 0.0
    %626 = vmatprep.subr.mxu0 0.0
    %627 = vmatpush1.msra.mxu0 0.0
    %628 = vmatprep.subr.mxu0 0.0
    %629 = vmatpush1.msra.mxu0 0.0
    %630 = vmatprep.subr.mxu0 0.0
    %631 = vmatpush1.msra.mxu0 0.0
    %632 = vmatprep.subr.mxu0 0.0
    %633 = vmatpush1.msra.mxu0 0.0
    %634 = vmatprep.subr.mxu0 0.0
    %635 = vmatpush1.msra.mxu0 0.0
    %636 = vmatprep.subr.mxu0 0.0
    %637 = vmatpush1.msra.mxu0 0.0
    %638 = vmatprep.subr.mxu0 0.0
    %639 = vmatpush1.msra.mxu0 0.0
    %640 = vmatprep.subr.mxu0 0.0
    %641 = vmatpush1.msra.mxu0 0.0
    %642 = vmatprep.subr.mxu0 0.0
    %643 = vmatpush1.msra.mxu0 0.0
    %644 = vmatprep.subr.mxu0 0.0
    %645 = vmatpush1.msra.mxu0 0.0
    %646 = vmatprep.subr.mxu0 0.0
    %647 = vmatpush1.msra.mxu0 0.0
    %648 = vmatprep.subr.mxu0 0.0
    %649 = vmatpush1.msra.mxu0 0.0
    %650 = vmatprep.subr.mxu0 0.0
    %651 = vmatpush1.msra.mxu0 0.0
    %652 = vmatprep.subr.mxu0 0.0
    %653 = vmatpush1.msra.mxu0 0.0
    %654 = vmatprep.subr.mxu0 0.0
    %655 = vmatpush1.msra.mxu0 0.0
    %656 = vmatprep.subr.mxu0 0.0
    %657 = vmatpush1.msra.mxu0 0.0
    %658 = vmatprep.subr.mxu0 0.0
    %659 = vmatpush1.msra.mxu0 0.0
    %660 = vmatprep.subr.mxu0 0.0
    %661 = vmatpush1.msra.mxu0 0.0
    %662 = vmatprep.subr.mxu0 0.0
    %663 = vmatpush1.msra.mxu0 0.0
    %664 = vmatprep.subr.mxu0 0.0
    %665 = vmatpush1.msra.mxu0 0.0
    %666 = vmatprep.subr.mxu0 0.0
    %667 = vmatpush1.msra.mxu0 0.0
    %668 = vmatprep.subr.mxu0 0.0
    %669 = vmatpush1.msra.mxu0 0.0
    %670 = vmatprep.subr.mxu0 0.0
    %671 = vmatpush1.msra.mxu0 0.0
    %672 = vmatprep.subr.mxu0 0.0
    %673 = vmatpush1.msra.mxu0 0.0
    %674 = vmatprep.subr.mxu0 0.0
    %675 = vmatpush1.msra.mxu0 0.0
    %676 = vmatprep.subr.mxu0 0.0
    %677 = vmatpush1.msra.mxu0 0.0
    %678 = vmatprep.mubr.f32.mxu0 0.0
    %679 = vmatmul.mubr.f32.gmra.mrb[0].mxu0 %v159
    %v680 = vpop.f32.mrb[0].mxu0
    %v681 = vadd.f32 0.0, %v680
    %v682 = vpop.f32.mrb[0].mxu0
    %683 = vmatprep.mubr.f32.mxu0 0.0
    %684 = vmatmul.mubr.f32.gmra.mrb[0].mxu0 %v162
    %v685 = vpop.f32.mrb[0].mxu0
    %v686 = vadd.f32 0.0, %v685
    %v687 = vpop.f32.mrb[0].mxu0
    %688 = vdwg.mxu0
    %689 = vmatprep.subr.mxu0 0.0
    %690 = vmatpush1.msra.mxu0 %v87
    %691 = vmatprep.subr.mxu0 0.0
    %692 = vmatpush1.msra.mxu0 %v88
    %693 = vmatprep.subr.mxu0 0.0
    %694 = vmatpush1.msra.mxu0 0.0
    %695 = vmatprep.subr.mxu0 0.0
    %696 = vmatpush1.msra.mxu0 0.0
    %697 = vmatprep.subr.mxu0 0.0
    %698 = vmatpush1.msra.mxu0 0.0
    %699 = vmatprep.subr.mxu0 0.0
    %700 = vmatpush1.msra.mxu0 0.0
    %701 = vmatprep.subr.mxu0 0.0
    %702 = vmatpush1.msra.mxu0 0.0
    %703 = vmatprep.subr.mxu0 0.0
    %704 = vmatpush1.msra.mxu0 0.0
    %705 = vmatprep.subr.mxu0 0.0
    %706 = vmatpush1.msra.mxu0 0.0
    %707 = vmatprep.subr.mxu0 0.0
    %708 = vmatpush1.msra.mxu0 0.0
    %709 = vmatprep.subr.mxu0 0.0
    %710 = vmatpush1.msra.mxu0 0.0
    %711 = vmatprep.subr.mxu0 0.0
    %712 = vmatpush1.msra.mxu0 0.0
    %713 = vmatprep.subr.mxu0 0.0
    %714 = vmatpush1.msra.mxu0 0.0
    %715 = vmatprep.subr.mxu0 0.0
    %716 = vmatpush1.msra.mxu0 0.0
    %717 = vmatprep.subr.mxu0 0.0
    %718 = vmatpush1.msra.mxu0 0.0
    %719 = vmatprep.subr.mxu0 0.0
    %720 = vmatpush1.msra.mxu0 0.0
    %721 = vmatprep.subr.mxu0 0.0
    %722 = vmatpush1.msra.mxu0 0.0
    %723 = vmatprep.subr.mxu0 0.0
    %724 = vmatpush1.msra.mxu0 0.0
    %725 = vmatprep.subr.mxu0 0.0
    %726 = vmatpush1.msra.mxu0 0.0
    %727 = vmatprep.subr.mxu0 0.0
    %728 = vmatpush1.msra.mxu0 0.0
    %729 = vmatprep.subr.mxu0 0.0
    %730 = vmatpush1.msra.mxu0 0.0
    %731 = vmatprep.subr.mxu0 0.0
    %732 = vmatpush1.msra.mxu0 0.0
    %733 = vmatprep.subr.mxu0 0.0
    %734 = vmatpush1.msra.mxu0 0.0
    %735 = vmatprep.subr.mxu0 0.0
    %736 = vmatpush1.msra.mxu0 0.0
    %737 = vmatprep.subr.mxu0 0.0
    %738 = vmatpush1.msra.mxu0 0.0
    %739 = vmatprep.subr.mxu0 0.0
    %740 = vmatpush1.msra.mxu0 0.0
    %741 = vmatprep.subr.mxu0 0.0
    %742 = vmatpush1.msra.mxu0 0.0
    %743 = vmatprep.subr.mxu0 0.0
    %744 = vmatpush1.msra.mxu0 0.0
    %745 = vmatprep.subr.mxu0 0.0
    %746 = vmatpush1.msra.mxu0 0.0
    %747 = vmatprep.subr.mxu0 0.0
    %748 = vmatpush1.msra.mxu0 0.0
    %749 = vmatprep.subr.mxu0 0.0
    %750 = vmatpush1.msra.mxu0 0.0
    %751 = vmatprep.subr.mxu0 0.0
    %752 = vmatpush1.msra.mxu0 0.0
    %753 = vmatprep.mubr.f32.mxu0 0.0
    %754 = vmatmul.mubr.f32.gmra.mrb[0].mxu0 %v159
    %v755 = vpop.f32.mrb[0].mxu0
    %v756 = vadd.f32 0.0, %v755
    %v757 = vpop.f32.mrb[0].mxu0
    %758 = vmatprep.mubr.f32.mxu0 0.0
    %759 = vmatmul.mubr.f32.gmra.mrb[0].mxu0 %v162
    %v760 = vpop.f32.mrb[0].mxu0
    %v761 = vadd.f32 0.0, %v760
    %v762 = vpop.f32.mrb[0].mxu0
    %763 = vdwg.mxu0
    %764 = vmatprep.subr.mxu0 0.0
    %765 = vmatpush1.msra.mxu0 %v89
    %766 = vmatprep.subr.mxu0 0.0
    %767 = vmatpush1.msra.mxu0 %v90
    %768 = vmatprep.subr.mxu0 0.0
    %769 = vmatpush1.msra.mxu0 0.0
    %770 = vmatprep.subr.mxu0 0.0
    %771 = vmatpush1.msra.mxu0 0.0
    %772 = vmatprep.subr.mxu0 0.0
    %773 = vmatpush1.msra.mxu0 0.0
    %774 = vmatprep.subr.mxu0 0.0
    %775 = vmatpush1.msra.mxu0 0.0
    %776 = vmatprep.subr.mxu0 0.0
    %777 = vmatpush1.msra.mxu0 0.0
    %778 = vmatprep.subr.mxu0 0.0
    %779 = vmatpush1.msra.mxu0 0.0
    %780 = vmatprep.subr.mxu0 0.0
    %781 = vmatpush1.msra.mxu0 0.0
    %782 = vmatprep.subr.mxu0 0.0
    %783 = vmatpush1.msra.mxu0 0.0
    %784 = vmatprep.subr.mxu0 0.0
    %785 = vmatpush1.msra.mxu0 0.0
    %786 = vmatprep.subr.mxu0 0.0
    %787 = vmatpush1.msra.mxu0 0.0
    %788 = vmatprep.subr.mxu0 0.0
    %789 = vmatpush1.msra.mxu0 0.0
    %790 = vmatprep.subr.mxu0 0.0
    %791 = vmatpush1.msra.mxu0 0.0
    %792 = vmatprep.subr.mxu0 0.0
    %793 = vmatpush1.msra.mxu0 0.0
    %794 = vmatprep.subr.mxu0 0.0
    %795 = vmatpush1.msra.mxu0 0.0
    %796 = vmatprep.subr.mxu0 0.0
    %797 = vmatpush1.msra.mxu0 0.0
    %798 = vmatprep.subr.mxu0 0.0
    %799 = vmatpush1.msra.mxu0 0.0
    %800 = vmatprep.subr.mxu0 0.0
    %801 = vmatpush1.msra.mxu0 0.0
    %802 = vmatprep.subr.mxu0 0.0
    %803 = vmatpush1.msra.mxu0 0.0
    %804 = vmatprep.subr.mxu0 0.0
    %805 = vmatpush1.msra.mxu0 0.0
    %806 = vmatprep.subr.mxu0 0.0
    %807 = vmatpush1.msra.mxu0 0.0
    %808 = vmatprep.subr.mxu0 0.0
    %809 = vmatpush1.msra.mxu0 0.0
    %810 = vmatprep.subr.mxu0 0.0
    %811 = vmatpush1.msra.mxu0 0.0
    %812 = vmatprep.subr.mxu0 0.0
    %813 = vmatpush1.msra.mxu0 0.0
    %814 = vmatprep.subr.mxu0 0.0
    %815 = vmatpush1.msra.mxu0 0.0
    %816 = vmatprep.subr.mxu0 0.0
    %817 = vmatpush1.msra.mxu0 0.0
    %818 = vmatprep.subr.mxu0 0.0
    %819 = vmatpush1.msra.mxu0 0.0
    %820 = vmatprep.subr.mxu0 0.0
    %821 = vmatpush1.msra.mxu0 0.0
    %822 = vmatprep.subr.mxu0 0.0
    %823 = vmatpush1.msra.mxu0 0.0
    %824 = vmatprep.subr.mxu0 0.0
    %825 = vmatpush1.msra.mxu0 0.0
    %826 = vmatprep.subr.mxu0 0.0
    %827 = vmatpush1.msra.mxu0 0.0
    %828 = vmatprep.mubr.f32.mxu0 0.0
    %829 = vmatmul.mubr.f32.gmra.mrb[0].mxu0 %v159
    %v830 = vpop.f32.mrb[0].mxu0
    %v831 = vadd.f32 0.0, %v830
    %v832 = vpop.f32.mrb[0].mxu0
    %833 = vmatprep.mubr.f32.mxu0 0.0
    %834 = vmatmul.mubr.f32.gmra.mrb[0].mxu0 %v162
    %v835 = vpop.f32.mrb[0].mxu0
    %v836 = vadd.f32 0.0, %v835
    %v837 = vpop.f32.mrb[0].mxu0
    %838 = vdwg.mxu0
    %839 = vmatprep.subr.mxu0 0.0
    %840 = vmatpush1.msra.mxu0 %v91
    %841 = vmatprep.subr.mxu0 0.0
    %842 = vmatpush1.msra.mxu0 %v92
    %843 = vmatprep.subr.mxu0 0.0
    %844 = vmatpush1.msra.mxu0 0.0
    %845 = vmatprep.subr.mxu0 0.0
    %846 = vmatpush1.msra.mxu0 0.0
    %847 = vmatprep.subr.mxu0 0.0
    %848 = vmatpush1.msra.mxu0 0.0
    %849 = vmatprep.subr.mxu0 0.0
    %850 = vmatpush1.msra.mxu0 0.0
    %851 = vmatprep.subr.mxu0 0.0
    %852 = vmatpush1.msra.mxu0 0.0
    %853 = vmatprep.subr.mxu0 0.0
    %854 = vmatpush1.msra.mxu0 0.0
    %855 = vmatprep.subr.mxu0 0.0
    %856 = vmatpush1.msra.mxu0 0.0
    %857 = vmatprep.subr.mxu0 0.0
    %858 = vmatpush1.msra.mxu0 0.0
    %859 = vmatprep.subr.mxu0 0.0
    %860 = vmatpush1.msra.mxu0 0.0
    %861 = vmatprep.subr.mxu0 0.0
    %862 = vmatpush1.msra.mxu0 0.0
    %863 = vmatprep.subr.mxu0 0.0
    %864 = vmatpush1.msra.mxu0 0.0
    %865 = vmatprep.subr.mxu0 0.0
    %866 = vmatpush1.msra.mxu0 0.0
    %867 = vmatprep.subr.mxu0 0.0
    %868 = vmatpush1.msra.mxu0 0.0
    %869 = vmatprep.subr.mxu0 0.0
    %870 = vmatpush1.msra.mxu0 0.0
    %871 = vmatprep.subr.mxu0 0.0
    %872 = vmatpush1.msra.mxu0 0.0
    %873 = vmatprep.subr.mxu0 0.0
    %874 = vmatpush1.msra.mxu0 0.0
    %875 = vmatprep.subr.mxu0 0.0
    %876 = vmatpush1.msra.mxu0 0.0
    %877 = vmatprep.subr.mxu0 0.0
    %878 = vmatpush1.msra.mxu0 0.0
    %879 = vmatprep.subr.mxu0 0.0
    %880 = vmatpush1.msra.mxu0 0.0
    %881 = vmatprep.subr.mxu0 0.0
    %882 = vmatpush1.msra.mxu0 0.0
    %883 = vmatprep.subr.mxu0 0.0
    %884 = vmatpush1.msra.mxu0 0.0
    %885 = vmatprep.subr.mxu0 0.0
    %886 = vmatpush1.msra.mxu0 0.0
    %887 = vmatprep.subr.mxu0 0.0
    %888 = vmatpush1.msra.mxu0 0.0
    %889 = vmatprep.subr.mxu0 0.0
    %890 = vmatpush1.msra.mxu0 0.0
    %891 = vmatprep.subr.mxu0 0.0
    %892 = vmatpush1.msra.mxu0 0.0
    %893 = vmatprep.subr.mxu0 0.0
    %894 = vmatpush1.msra.mxu0 0.0
    %895 = vmatprep.subr.mxu0 0.0
    %896 = vmatpush1.msra.mxu0 0.0
    %897 = vmatprep.subr.mxu0 0.0
    %898 = vmatpush1.msra.mxu0 0.0
    %899 = vmatprep.subr.mxu0 0.0
    %900 = vmatpush1.msra.mxu0 0.0
    %901 = vmatprep.subr.mxu0 0.0
    %902 = vmatpush1.msra.mxu0 0.0
    %903 = vmatprep.mubr.f32.mxu0 0.0
    %904 = vmatmul.mubr.f32.gmra.mrb[0].mxu0 %v159
    %v905 = vpop.f32.mrb[0].mxu0
    %v906 = vadd.f32 0.0, %v905
    %v907 = vpop.f32.mrb[0].mxu0
    %908 = vmatprep.mubr.f32.mxu0 0.0
    %909 = vmatmul.mubr.f32.gmra.mrb[0].mxu0 %v162
    %v910 = vpop.f32.mrb[0].mxu0
    %v911 = vadd.f32 0.0, %v910
    %v912 = vpop.f32.mrb[0].mxu0
    %913 = vdwg.mxu0
    %914 = vmatprep.subr.mxu0 0.0
    %915 = vmatpush1.msra.mxu0 %v93
    %916 = vmatprep.subr.mxu0 0.0
    %917 = vmatpush1.msra.mxu0 %v94
    %918 = vmatprep.subr.mxu0 0.0
    %919 = vmatpush1.msra.mxu0 0.0
    %920 = vmatprep.subr.mxu0 0.0
    %921 = vmatpush1.msra.mxu0 0.0
    %922 = vmatprep.subr.mxu0 0.0
    %923 = vmatpush1.msra.mxu0 0.0
    %924 = vmatprep.subr.mxu0 0.0
    %925 = vmatpush1.msra.mxu0 0.0
    %926 = vmatprep.subr.mxu0 0.0
    %927 = vmatpush1.msra.mxu0 0.0
    %928 = vmatprep.subr.mxu0 0.0
    %929 = vmatpush1.msra.mxu0 0.0
    %930 = vmatprep.subr.mxu0 0.0
    %931 = vmatpush1.msra.mxu0 0.0
    %932 = vmatprep.subr.mxu0 0.0
    %933 = vmatpush1.msra.mxu0 0.0
    %934 = vmatprep.subr.mxu0 0.0
    %935 = vmatpush1.msra.mxu0 0.0
    %936 = vmatprep.subr.mxu0 0.0
    %937 = vmatpush1.msra.mxu0 0.0
    %938 = vmatprep.subr.mxu0 0.0
    %939 = vmatpush1.msra.mxu0 0.0
    %940 = vmatprep.subr.mxu0 0.0
    %941 = vmatpush1.msra.mxu0 0.0
    %942 = vmatprep.subr.mxu0 0.0
    %943 = vmatpush1.msra.mxu0 0.0
    %944 = vmatprep.subr.mxu0 0.0
    %945 = vmatpush1.msra.mxu0 0.0
    %946 = vmatprep.subr.mxu0 0.0
    %947 = vmatpush1.msra.mxu0 0.0
    %948 = vmatprep.subr.mxu0 0.0
    %949 = vmatpush1.msra.mxu0 0.0
    %950 = vmatprep.subr.mxu0 0.0
    %951 = vmatpush1.msra.mxu0 0.0
    %952 = vmatprep.subr.mxu0 0.0
    %953 = vmatpush1.msra.mxu0 0.0
    %954 = vmatprep.subr.mxu0 0.0
    %955 = vmatpush1.msra.mxu0 0.0
    %956 = vmatprep.subr.mxu0 0.0
    %957 = vmatpush1.msra.mxu0 0.0
    %958 = vmatprep.subr.mxu0 0.0
    %959 = vmatpush1.msra.mxu0 0.0
    %960 = vmatprep.subr.mxu0 0.0
    %961 = vmatpush1.msra.mxu0 0.0
    %962 = vmatprep.subr.mxu0 0.0
    %963 = vmatpush1.msra.mxu0 0.0
    %964 = vmatprep.subr.mxu0 0.0
    %965 = vmatpush1.msra.mxu0 0.0
    %966 = vmatprep.subr.mxu0 0.0
    %967 = vmatpush1.msra.mxu0 0.0
    %968 = vmatprep.subr.mxu0 0.0
    %969 = vmatpush1.msra.mxu0 0.0
    %970 = vmatprep.subr.mxu0 0.0
    %971 = vmatpush1.msra.mxu0 0.0
    %972 = vmatprep.subr.mxu0 0.0
    %973 = vmatpush1.msra.mxu0 0.0
    %974 = vmatprep.subr.mxu0 0.0
    %975 = vmatpush1.msra.mxu0 0.0
    %976 = vmatprep.subr.mxu0 0.0
    %977 = vmatpush1.msra.mxu0 0.0
    %978 = vmatprep.mubr.f32.mxu0 0.0
    %979 = vmatmul.mubr.f32.gmra.mrb[0].mxu0 %v159
    %v980 = vpop.f32.mrb[0].mxu0
    %v981 = vadd.f32 0.0, %v980
    %v982 = vpop.f32.mrb[0].mxu0
    %983 = vmatprep.mubr.f32.mxu0 0.0
    %984 = vmatmul.mubr.f32.gmra.mrb[0].mxu0 %v162
    %v985 = vpop.f32.mrb[0].mxu0
    %v986 = vadd.f32 0.0, %v985
    %v987 = vpop.f32.mrb[0].mxu0
    %988 = vdwg.mxu0
    %989 = vmatprep.subr.mxu0 0.0
    %990 = vmatpush1.msra.mxu0 %v95
    %991 = vmatprep.subr.mxu0 0.0
    %992 = vmatpush1.msra.mxu0 %v96
    %993 = vmatprep.subr.mxu0 0.0
    %994 = vmatpush1.msra.mxu0 0.0
    %995 = vmatprep.subr.mxu0 0.0
    %996 = vmatpush1.msra.mxu0 0.0
    %997 = vmatprep.subr.mxu0 0.0
    %998 = vmatpush1.msra.mxu0 0.0
    %999 = vmatprep.subr.mxu0 0.0
    %1000 = vmatpush1.msra.mxu0 0.0
    %1001 = vmatprep.subr.mxu0 0.0
    %1002 = vmatpush1.msra.mxu0 0.0
    %1003 = vmatprep.subr.mxu0 0.0
    %1004 = vmatpush1.msra.mxu0 0.0
    %1005 = vmatprep.subr.mxu0 0.0
    %1006 = vmatpush1.msra.mxu0 0.0
    %1007 = vmatprep.subr.mxu0 0.0
    %1008 = vmatpush1.msra.mxu0 0.0
    %1009 = vmatprep.subr.mxu0 0.0
    %1010 = vmatpush1.msra.mxu0 0.0
    %1011 = vmatprep.subr.mxu0 0.0
    %1012 = vmatpush1.msra.mxu0 0.0
    %1013 = vmatprep.subr.mxu0 0.0
    %1014 = vmatpush1.msra.mxu0 0.0
    %1015 = vmatprep.subr.mxu0 0.0
    %1016 = vmatpush1.msra.mxu0 0.0
    %1017 = vmatprep.subr.mxu0 0.0
    %1018 = vmatpush1.msra.mxu0 0.0
    %1019 = vmatprep.subr.mxu0 0.0
    %1020 = vmatpush1.msra.mxu0 0.0
    %1021 = vmatprep.subr.mxu0 0.0
    %1022 = vmatpush1.msra.mxu0 0.0
    %1023 = vmatprep.subr.mxu0 0.0
    %1024 = vmatpush1.msra.mxu0 0.0
    %1025 = vmatprep.subr.mxu0 0.0
    %1026 = vmatpush1.msra.mxu0 0.0
    %1027 = vmatprep.subr.mxu0 0.0
    %1028 = vmatpush1.msra.mxu0 0.0
    %1029 = vmatprep.subr.mxu0 0.0
    %1030 = vmatpush1.msra.mxu0 0.0
    %1031 = vmatprep.subr.mxu0 0.0
    %1032 = vmatpush1.msra.mxu0 0.0
    %1033 = vmatprep.subr.mxu0 0.0
    %1034 = vmatpush1.msra.mxu0 0.0
    %1035 = vmatprep.subr.mxu0 0.0
    %1036 = vmatpush1.msra.mxu0 0.0
    %1037 = vmatprep.subr.mxu0 0.0
    %1038 = vmatpush1.msra.mxu0 0.0
    %1039 = vmatprep.subr.mxu0 0.0
    %1040 = vmatpush1.msra.mxu0 0.0
    %1041 = vmatprep.subr.mxu0 0.0
    %1042 = vmatpush1.msra.mxu0 0.0
    %1043 = vmatprep.subr.mxu0 0.0
    %1044 = vmatpush1.msra.mxu0 0.0
    %1045 = vmatprep.subr.mxu0 0.0
    %1046 = vmatpush1.msra.mxu0 0.0
    %1047 = vmatprep.subr.mxu0 0.0
    %1048 = vmatpush1.msra.mxu0 0.0
    %1049 = vmatprep.subr.mxu0 0.0
    %1050 = vmatpush1.msra.mxu0 0.0
    %1051 = vmatprep.subr.mxu0 0.0
    %1052 = vmatpush1.msra.mxu0 0.0
    %1053 = vmatprep.mubr.f32.mxu0 0.0
    %1054 = vmatmul.mubr.f32.gmra.mrb[0].mxu0 %v159
    %v1055 = vpop.f32.mrb[0].mxu0
    %v1056 = vadd.f32 0.0, %v1055
    %v1057 = vpop.f32.mrb[0].mxu0
    %1058 = vmatprep.mubr.f32.mxu0 0.0
    %1059 = vmatmul.mubr.f32.gmra.mrb[0].mxu0 %v162
    %v1060 = vpop.f32.mrb[0].mxu0
    %v1061 = vadd.f32 0.0, %v1060
    %v1062 = vpop.f32.mrb[0].mxu0
    %1063 = vdwg.mxu0
    %1064 = vmatprep.subr.mxu0 0.0
    %1065 = vmatpush1.msra.mxu0 %v97
    %1066 = vmatprep.subr.mxu0 0.0
    %1067 = vmatpush1.msra.mxu0 %v98
    %1068 = vmatprep.subr.mxu0 0.0
    %1069 = vmatpush1.msra.mxu0 0.0
    %1070 = vmatprep.subr.mxu0 0.0
    %1071 = vmatpush1.msra.mxu0 0.0
    %1072 = vmatprep.subr.mxu0 0.0
    %1073 = vmatpush1.msra.mxu0 0.0
    %1074 = vmatprep.subr.mxu0 0.0
    %1075 = vmatpush1.msra.mxu0 0.0
    %1076 = vmatprep.subr.mxu0 0.0
    %1077 = vmatpush1.msra.mxu0 0.0
    %1078 = vmatprep.subr.mxu0 0.0
    %1079 = vmatpush1.msra.mxu0 0.0
    %1080 = vmatprep.subr.mxu0 0.0
    %1081 = vmatpush1.msra.mxu0 0.0
    %1082 = vmatprep.subr.mxu0 0.0
    %1083 = vmatpush1.msra.mxu0 0.0
    %1084 = vmatprep.subr.mxu0 0.0
    %1085 = vmatpush1.msra.mxu0 0.0
    %1086 = vmatprep.subr.mxu0 0.0
    %1087 = vmatpush1.msra.mxu0 0.0
    %1088 = vmatprep.subr.mxu0 0.0
    %1089 = vmatpush1.msra.mxu0 0.0
    %1090 = vmatprep.subr.mxu0 0.0
    %1091 = vmatpush1.msra.mxu0 0.0
    %1092 = vmatprep.subr.mxu0 0.0
    %1093 = vmatpush1.msra.mxu0 0.0
    %1094 = vmatprep.subr.mxu0 0.0
    %1095 = vmatpush1.msra.mxu0 0.0
    %1096 = vmatprep.subr.mxu0 0.0
    %1097 = vmatpush1.msra.mxu0 0.0
    %1098 = vmatprep.subr.mxu0 0.0
    %1099 = vmatpush1.msra.mxu0 0.0
    %1100 = vmatprep.subr.mxu0 0.0
    %1101 = vmatpush1.msra.mxu0 0.0
    %1102 = vmatprep.subr.mxu0 0.0
    %1103 = vmatpush1.msra.mxu0 0.0
    %1104 = vmatprep.subr.mxu0 0.0
    %1105 = vmatpush1.msra.mxu0 0.0
    %1106 = vmatprep.subr.mxu0 0.0
    %1107 = vmatpush1.msra.mxu0 0.0
    %1108 = vmatprep.subr.mxu0 0.0
    %1109 = vmatpush1.msra.mxu0 0.0
    %1110 = vmatprep.subr.mxu0 0.0
    %1111 = vmatpush1.msra.mxu0 0.0
    %1112 = vmatprep.subr.mxu0 0.0
    %1113 = vmatpush1.msra.mxu0 0.0
    %1114 = vmatprep.subr.mxu0 0.0
    %1115 = vmatpush1.msra.mxu0 0.0
    %1116 = vmatprep.subr.mxu0 0.0
    %1117 = vmatpush1.msra.mxu0 0.0
    %1118 = vmatprep.subr.mxu0 0.0
    %1119 = vmatpush1.msra.mxu0 0.0
    %1120 = vmatprep.subr.mxu0 0.0
    %1121 = vmatpush1.msra.mxu0 0.0
    %1122 = vmatprep.subr.mxu0 0.0
    %1123 = vmatpush1.msra.mxu0 0.0
    %1124 = vmatprep.subr.mxu0 0.0
    %1125 = vmatpush1.msra.mxu0 0.0
    %1126 = vmatprep.subr.mxu0 0.0
    %1127 = vmatpush1.msra.mxu0 0.0
    %1128 = vmatprep.mubr.f32.mxu0 0.0
    %1129 = vmatmul.mubr.f32.gmra.mrb[0].mxu0 %v159
    %v1130 = vpop.f32.mrb[0].mxu0
    %v1131 = vadd.f32 0.0, %v1130
    %v1132 = vpop.f32.mrb[0].mxu0
    %1133 = vmatprep.mubr.f32.mxu0 0.0
    %1134 = vmatmul.mubr.f32.gmra.mrb[0].mxu0 %v162
    %v1135 = vpop.f32.mrb[0].mxu0
    %v1136 = vadd.f32 0.0, %v1135
    %v1137 = vpop.f32.mrb[0].mxu0
    %1138 = vdwg.mxu0
    %1139 = vmatprep.subr.mxu0 0.0
    %1140 = vmatpush1.msra.mxu0 %v99
    %1141 = vmatprep.subr.mxu0 0.0
    %1142 = vmatpush1.msra.mxu0 %v100
    %1143 = vmatprep.subr.mxu0 0.0
    %1144 = vmatpush1.msra.mxu0 0.0
    %1145 = vmatprep.subr.mxu0 0.0
    %1146 = vmatpush1.msra.mxu0 0.0
    %1147 = vmatprep.subr.mxu0 0.0
    %1148 = vmatpush1.msra.mxu0 0.0
    %1149 = vmatprep.subr.mxu0 0.0
    %1150 = vmatpush1.msra.mxu0 0.0
    %1151 = vmatprep.subr.mxu0 0.0
    %1152 = vmatpush1.msra.mxu0 0.0
    %1153 = vmatprep.subr.mxu0 0.0
    %1154 = vmatpush1.msra.mxu0 0.0
    %1155 = vmatprep.subr.mxu0 0.0
    %1156 = vmatpush1.msra.mxu0 0.0
    %1157 = vmatprep.subr.mxu0 0.0
    %1158 = vmatpush1.msra.mxu0 0.0
    %1159 = vmatprep.subr.mxu0 0.0
    %1160 = vmatpush1.msra.mxu0 0.0
    %1161 = vmatprep.subr.mxu0 0.0
    %1162 = vmatpush1.msra.mxu0 0.0
    %1163 = vmatprep.subr.mxu0 0.0
    %1164 = vmatpush1.msra.mxu0 0.0
    %1165 = vmatprep.subr.mxu0 0.0
    %1166 = vmatpush1.msra.mxu0 0.0
    %1167 = vmatprep.subr.mxu0 0.0
    %1168 = vmatpush1.msra.mxu0 0.0
    %1169 = vmatprep.subr.mxu0 0.0
    %1170 = vmatpush1.msra.mxu0 0.0
    %1171 = vmatprep.subr.mxu0 0.0
    %1172 = vmatpush1.msra.mxu0 0.0
    %1173 = vmatprep.subr.mxu0 0.0
    %1174 = vmatpush1.msra.mxu0 0.0
    %1175 = vmatprep.subr.mxu0 0.0
    %1176 = vmatpush1.msra.mxu0 0.0
    %1177 = vmatprep.subr.mxu0 0.0
    %1178 = vmatpush1.msra.mxu0 0.0
    %1179 = vmatprep.subr.mxu0 0.0
    %1180 = vmatpush1.msra.mxu0 0.0
    %1181 = vmatprep.subr.mxu0 0.0
    %1182 = vmatpush1.msra.mxu0 0.0
    %1183 = vmatprep.subr.mxu0 0.0
    %1184 = vmatpush1.msra.mxu0 0.0
    %1185 = vmatprep.subr.mxu0 0.0
    %1186 = vmatpush1.msra.mxu0 0.0
    %1187 = vmatprep.subr.mxu0 0.0
    %1188 = vmatpush1.msra.mxu0 0.0
    %1189 = vmatprep.subr.mxu0 0.0
    %1190 = vmatpush1.msra.mxu0 0.0
    %1191 = vmatprep.subr.mxu0 0.0
    %1192 = vmatpush1.msra.mxu0 0.0
    %1193 = vmatprep.subr.mxu0 0.0
    %1194 = vmatpush1.msra.mxu0 0.0
    %1195 = vmatprep.subr.mxu0 0.0
    %1196 = vmatpush1.msra.mxu0 0.0
    %1197 = vmatprep.subr.mxu0 0.0
    %1198 = vmatpush1.msra.mxu0 0.0
    %1199 = vmatprep.subr.mxu0 0.0
    %1200 = vmatpush1.msra.mxu0 0.0
    %1201 = vmatprep.subr.mxu0 0.0
    %1202 = vmatpush1.msra.mxu0 0.0
    %1203 = vmatprep.mubr.f32.mxu0 0.0
    %1204 = vmatmul.mubr.f32.gmra.mrb[0].mxu0 %v159
    %v1205 = vpop.f32.mrb[0].mxu0
    %v1206 = vadd.f32 0.0, %v1205
    %v1207 = vpop.f32.mrb[0].mxu0
    %1208 = vmatprep.mubr.f32.mxu0 0.0
    %1209 = vmatmul.mubr.f32.gmra.mrb[0].mxu0 %v162
    %v1210 = vpop.f32.mrb[0].mxu0
    %v1211 = vadd.f32 0.0, %v1210
    %v1212 = vpop.f32.mrb[0].mxu0
    %1213 = vdwg.mxu0
    %1214 = vmatprep.subr.mxu0 0.0
    %1215 = vmatpush1.msra.mxu0 %v101
    %1216 = vmatprep.subr.mxu0 0.0
    %1217 = vmatpush1.msra.mxu0 %v102
    %1218 = vmatprep.subr.mxu0 0.0
    %1219 = vmatpush1.msra.mxu0 0.0
    %1220 = vmatprep.subr.mxu0 0.0
    %1221 = vmatpush1.msra.mxu0 0.0
    %1222 = vmatprep.subr.mxu0 0.0
    %1223 = vmatpush1.msra.mxu0 0.0
    %1224 = vmatprep.subr.mxu0 0.0
    %1225 = vmatpush1.msra.mxu0 0.0
    %1226 = vmatprep.subr.mxu0 0.0
    %1227 = vmatpush1.msra.mxu0 0.0
    %1228 = vmatprep.subr.mxu0 0.0
    %1229 = vmatpush1.msra.mxu0 0.0
    %1230 = vmatprep.subr.mxu0 0.0
    %1231 = vmatpush1.msra.mxu0 0.0
    %1232 = vmatprep.subr.mxu0 0.0
    %1233 = vmatpush1.msra.mxu0 0.0
    %1234 = vmatprep.subr.mxu0 0.0
    %1235 = vmatpush1.msra.mxu0 0.0
    %1236 = vmatprep.subr.mxu0 0.0
    %1237 = vmatpush1.msra.mxu0 0.0
    %1238 = vmatprep.subr.mxu0 0.0
    %1239 = vmatpush1.msra.mxu0 0.0
    %1240 = vmatprep.subr.mxu0 0.0
    %1241 = vmatpush1.msra.mxu0 0.0
    %1242 = vmatprep.subr.mxu0 0.0
    %1243 = vmatpush1.msra.mxu0 0.0
    %1244 = vmatprep.subr.mxu0 0.0
    %1245 = vmatpush1.msra.mxu0 0.0
    %1246 = vmatprep.subr.mxu0 0.0
    %1247 = vmatpush1.msra.mxu0 0.0
    %1248 = vmatprep.subr.mxu0 0.0
    %1249 = vmatpush1.msra.mxu0 0.0
    %1250 = vmatprep.subr.mxu0 0.0
    %1251 = vmatpush1.msra.mxu0 0.0
    %1252 = vmatprep.subr.mxu0 0.0
    %1253 = vmatpush1.msra.mxu0 0.0
    %1254 = vmatprep.subr.mxu0 0.0
    %1255 = vmatpush1.msra.mxu0 0.0
    %1256 = vmatprep.subr.mxu0 0.0
    %1257 = vmatpush1.msra.mxu0 0.0
    %1258 = vmatprep.subr.mxu0 0.0
    %1259 = vmatpush1.msra.mxu0 0.0
    %1260 = vmatprep.subr.mxu0 0.0
    %1261 = vmatpush1.msra.mxu0 0.0
    %1262 = vmatprep.subr.mxu0 0.0
    %1263 = vmatpush1.msra.mxu0 0.0
    %1264 = vmatprep.subr.mxu0 0.0
    %1265 = vmatpush1.msra.mxu0 0.0
    %1266 = vmatprep.subr.mxu0 0.0
    %1267 = vmatpush1.msra.mxu0 0.0
    %1268 = vmatprep.subr.mxu0 0.0
    %1269 = vmatpush1.msra.mxu0 0.0
    %1270 = vmatprep.subr.mxu0 0.0
    %1271 = vmatpush1.msra.mxu0 0.0
    %1272 = vmatprep.subr.mxu0 0.0
    %1273 = vmatpush1.msra.mxu0 0.0
    %1274 = vmatprep.subr.mxu0 0.0
    %1275 = vmatpush1.msra.mxu0 0.0
    %1276 = vmatprep.subr.mxu0 0.0
    %1277 = vmatpush1.msra.mxu0 0.0
    %1278 = vmatprep.mubr.f32.mxu0 0.0
    %1279 = vmatmul.mubr.f32.gmra.mrb[0].mxu0 %v159
    %v1280 = vpop.f32.mrb[0].mxu0
    %v1281 = vadd.f32 0.0, %v1280
    %v1282 = vpop.f32.mrb[0].mxu0
    %1283 = vmatprep.mubr.f32.mxu0 0.0
    %1284 = vmatmul.mubr.f32.gmra.mrb[0].mxu0 %v162
    %v1285 = vpop.f32.mrb[0].mxu0
    %v1286 = vadd.f32 0.0, %v1285
    %v1287 = vpop.f32.mrb[0].mxu0
    %1288 = vdwg.mxu0
    %1289 = vmatprep.subr.mxu0 0.0
    %1290 = vmatpush1.msra.mxu0 %v103
    %1291 = vmatprep.subr.mxu0 0.0
    %1292 = vmatpush1.msra.mxu0 %v104
    %1293 = vmatprep.subr.mxu0 0.0
    %1294 = vmatpush1.msra.mxu0 0.0
    %1295 = vmatprep.subr.mxu0 0.0
    %1296 = vmatpush1.msra.mxu0 0.0
    %1297 = vmatprep.subr.mxu0 0.0
    %1298 = vmatpush1.msra.mxu0 0.0
    %1299 = vmatprep.subr.mxu0 0.0
    %1300 = vmatpush1.msra.mxu0 0.0
    %1301 = vmatprep.subr.mxu0 0.0
    %1302 = vmatpush1.msra.mxu0 0.0
    %1303 = vmatprep.subr.mxu0 0.0
    %1304 = vmatpush1.msra.mxu0 0.0
    %1305 = vmatprep.subr.mxu0 0.0
    %1306 = vmatpush1.msra.mxu0 0.0
    %1307 = vmatprep.subr.mxu0 0.0
    %1308 = vmatpush1.msra.mxu0 0.0
    %1309 = vmatprep.subr.mxu0 0.0
    %1310 = vmatpush1.msra.mxu0 0.0
    %1311 = vmatprep.subr.mxu0 0.0
    %1312 = vmatpush1.msra.mxu0 0.0
    %1313 = vmatprep.subr.mxu0 0.0
    %1314 = vmatpush1.msra.mxu0 0.0
    %1315 = vmatprep.subr.mxu0 0.0
    %1316 = vmatpush1.msra.mxu0 0.0
    %1317 = vmatprep.subr.mxu0 0.0
    %1318 = vmatpush1.msra.mxu0 0.0
    %1319 = vmatprep.subr.mxu0 0.0
    %1320 = vmatpush1.msra.mxu0 0.0
    %1321 = vmatprep.subr.mxu0 0.0
    %1322 = vmatpush1.msra.mxu0 0.0
    %1323 = vmatprep.subr.mxu0 0.0
    %1324 = vmatpush1.msra.mxu0 0.0
    %1325 = vmatprep.subr.mxu0 0.0
    %1326 = vmatpush1.msra.mxu0 0.0
    %1327 = vmatprep.subr.mxu0 0.0
    %1328 = vmatpush1.msra.mxu0 0.0
    %1329 = vmatprep.subr.mxu0 0.0
    %1330 = vmatpush1.msra.mxu0 0.0
    %1331 = vmatprep.subr.mxu0 0.0
    %1332 = vmatpush1.msra.mxu0 0.0
    %1333 = vmatprep.subr.mxu0 0.0
    %1334 = vmatpush1.msra.mxu0 0.0
    %1335 = vmatprep.subr.mxu0 0.0
    %1336 = vmatpush1.msra.mxu0 0.0
    %1337 = vmatprep.subr.mxu0 0.0
    %1338 = vmatpush1.msra.mxu0 0.0
    %1339 = vmatprep.subr.mxu0 0.0
    %1340 = vmatpush1.msra.mxu0 0.0
    %1341 = vmatprep.subr.mxu0 0.0
    %1342 = vmatpush1.msra.mxu0 0.0
    %1343 = vmatprep.subr.mxu0 0.0
    %1344 = vmatpush1.msra.mxu0 0.0
    %1345 = vmatprep.subr.mxu0 0.0
    %1346 = vmatpush1.msra.mxu0 0.0
    %1347 = vmatprep.subr.mxu0 0.0
    %1348 = vmatpush1.msra.mxu0 0.0
    %1349 = vmatprep.subr.mxu0 0.0
    %1350 = vmatpush1.msra.mxu0 0.0
    %1351 = vmatprep.subr.mxu0 0.0
    %1352 = vmatpush1.msra.mxu0 0.0
    %1353 = vmatprep.mubr.f32.mxu0 0.0
    %1354 = vmatmul.mubr.f32.gmra.mrb[0].mxu0 %v159
    %v1355 = vpop.f32.mrb[0].mxu0
    %v1356 = vadd.f32 0.0, %v1355
    %v1357 = vpop.f32.mrb[0].mxu0
    %1358 = vmatprep.mubr.f32.mxu0 0.0
    %1359 = vmatmul.mubr.f32.gmra.mrb[0].mxu0 %v162
    %v1360 = vpop.f32.mrb[0].mxu0
    %v1361 = vadd.f32 0.0, %v1360
    %v1362 = vpop.f32.mrb[0].mxu0
    %1363 = vdwg.mxu0
    %1364 = vmatprep.subr.mxu0 0.0
    %1365 = vmatpush1.msra.mxu0 %v109
    %1366 = vmatprep.subr.mxu0 0.0
    %1367 = vmatpush1.msra.mxu0 %v110
    %1368 = vmatprep.subr.mxu0 0.0
    %1369 = vmatpush1.msra.mxu0 0.0
    %1370 = vmatprep.subr.mxu0 0.0
    %1371 = vmatpush1.msra.mxu0 0.0
    %1372 = vmatprep.subr.mxu0 0.0
    %1373 = vmatpush1.msra.mxu0 0.0
    %1374 = vmatprep.subr.mxu0 0.0
    %1375 = vmatpush1.msra.mxu0 0.0
    %1376 = vmatprep.subr.mxu0 0.0
    %1377 = vmatpush1.msra.mxu0 0.0
    %1378 = vmatprep.subr.mxu0 0.0
    %1379 = vmatpush1.msra.mxu0 0.0
    %1380 = vmatprep.subr.mxu0 0.0
    %1381 = vmatpush1.msra.mxu0 0.0
    %1382 = vmatprep.subr.mxu0 0.0
    %1383 = vmatpush1.msra.mxu0 0.0
    %1384 = vmatprep.subr.mxu0 0.0
    %1385 = vmatpush1.msra.mxu0 0.0
    %1386 = vmatprep.subr.mxu0 0.0
    %1387 = vmatpush1.msra.mxu0 0.0
    %1388 = vmatprep.subr.mxu0 0.0
    %1389 = vmatpush1.msra.mxu0 0.0
    %1390 = vmatprep.subr.mxu0 0.0
    %1391 = vmatpush1.msra.mxu0 0.0
    %1392 = vmatprep.subr.mxu0 0.0
    %1393 = vmatpush1.msra.mxu0 0.0
    %1394 = vmatprep.subr.mxu0 0.0
    %1395 = vmatpush1.msra.mxu0 0.0
    %1396 = vmatprep.subr.mxu0 0.0
    %1397 = vmatpush1.msra.mxu0 0.0
    %1398 = vmatprep.subr.mxu0 0.0
    %1399 = vmatpush1.msra.mxu0 0.0
    %1400 = vmatprep.subr.mxu0 0.0
    %1401 = vmatpush1.msra.mxu0 0.0
    %1402 = vmatprep.subr.mxu0 0.0
    %1403 = vmatpush1.msra.mxu0 0.0
    %1404 = vmatprep.subr.mxu0 0.0
    %1405 = vmatpush1.msra.mxu0 0.0
    %1406 = vmatprep.subr.mxu0 0.0
    %1407 = vmatpush1.msra.mxu0 0.0
    %1408 = vmatprep.subr.mxu0 0.0
    %1409 = vmatpush1.msra.mxu0 0.0
    %1410 = vmatprep.subr.mxu0 0.0
    %1411 = vmatpush1.msra.mxu0 0.0
    %1412 = vmatprep.subr.mxu0 0.0
    %1413 = vmatpush1.msra.mxu0 0.0
    %1414 = vmatprep.subr.mxu0 0.0
    %1415 = vmatpush1.msra.mxu0 0.0
    %1416 = vmatprep.subr.mxu0 0.0
    %1417 = vmatpush1.msra.mxu0 0.0
    %1418 = vmatprep.subr.mxu0 0.0
    %1419 = vmatpush1.msra.mxu0 0.0
    %1420 = vmatprep.subr.mxu0 0.0
    %1421 = vmatpush1.msra.mxu0 0.0
    %1422 = vmatprep.subr.mxu0 0.0
    %1423 = vmatpush1.msra.mxu0 0.0
    %1424 = vmatprep.subr.mxu0 0.0
    %1425 = vmatpush1.msra.mxu0 0.0
    %1426 = vmatprep.subr.mxu0 0.0
    %1427 = vmatpush1.msra.mxu0 0.0
    %1428 = vmatprep.mubr.f32.mxu0 0.0
    %1429 = vmatmul.mubr.f32.gmra.mrb[0].mxu0 %v159
    %v1430 = vpop.f32.mrb[0].mxu0
    %v1431 = vadd.f32 0.0, %v1430
    %v1432 = vpop.f32.mrb[0].mxu0
    %1433 = vmatprep.mubr.f32.mxu0 0.0
    %1434 = vmatmul.mubr.f32.gmra.mrb[0].mxu0 %v162
    %v1435 = vpop.f32.mrb[0].mxu0
    %v1436 = vadd.f32 0.0, %v1435
    %v1437 = vpop.f32.mrb[0].mxu0
    %1438 = vdwg.mxu0
    %1439 = vmatprep.subr.mxu0 0.0
    %1440 = vmatpush1.msra.mxu0 %v111
    %1441 = vmatprep.subr.mxu0 0.0
    %1442 = vmatpush1.msra.mxu0 %v112
    %1443 = vmatprep.subr.mxu0 0.0
    %1444 = vmatpush1.msra.mxu0 0.0
    %1445 = vmatprep.subr.mxu0 0.0
    %1446 = vmatpush1.msra.mxu0 0.0
    %1447 = vmatprep.subr.mxu0 0.0
    %1448 = vmatpush1.msra.mxu0 0.0
    %1449 = vmatprep.subr.mxu0 0.0
    %1450 = vmatpush1.msra.mxu0 0.0
    %1451 = vmatprep.subr.mxu0 0.0
    %1452 = vmatpush1.msra.mxu0 0.0
    %1453 = vmatprep.subr.mxu0 0.0
    %1454 = vmatpush1.msra.mxu0 0.0
    %1455 = vmatprep.subr.mxu0 0.0
    %1456 = vmatpush1.msra.mxu0 0.0
    %1457 = vmatprep.subr.mxu0 0.0
    %1458 = vmatpush1.msra.mxu0 0.0
    %1459 = vmatprep.subr.mxu0 0.0
    %1460 = vmatpush1.msra.mxu0 0.0
    %1461 = vmatprep.subr.mxu0 0.0
    %1462 = vmatpush1.msra.mxu0 0.0
    %1463 = vmatprep.subr.mxu0 0.0
    %1464 = vmatpush1.msra.mxu0 0.0
    %1465 = vmatprep.subr.mxu0 0.0
    %1466 = vmatpush1.msra.mxu0 0.0
    %1467 = vmatprep.subr.mxu0 0.0
    %1468 = vmatpush1.msra.mxu0 0.0
    %1469 = vmatprep.subr.mxu0 0.0
    %1470 = vmatpush1.msra.mxu0 0.0
    %1471 = vmatprep.subr.mxu0 0.0
    %1472 = vmatpush1.msra.mxu0 0.0
    %1473 = vmatprep.subr.mxu0 0.0
    %1474 = vmatpush1.msra.mxu0 0.0
    %1475 = vmatprep.subr.mxu0 0.0
    %1476 = vmatpush1.msra.mxu0 0.0
    %1477 = vmatprep.subr.mxu0 0.0
    %1478 = vmatpush1.msra.mxu0 0.0
    %1479 = vmatprep.subr.mxu0 0.0
    %1480 = vmatpush1.msra.mxu0 0.0
    %1481 = vmatprep.subr.mxu0 0.0
    %1482 = vmatpush1.msra.mxu0 0.0
    %1483 = vmatprep.subr.mxu0 0.0
    %1484 = vmatpush1.msra.mxu0 0.0
    %1485 = vmatprep.subr.mxu0 0.0
    %1486 = vmatpush1.msra.mxu0 0.0
    %1487 = vmatprep.subr.mxu0 0.0
    %1488 = vmatpush1.msra.mxu0 0.0
    %1489 = vmatprep.subr.mxu0 0.0
    %1490 = vmatpush1.msra.mxu0 0.0
    %1491 = vmatprep.subr.mxu0 0.0
    %1492 = vmatpush1.msra.mxu0 0.0
    %1493 = vmatprep.subr.mxu0 0.0
    %1494 = vmatpush1.msra.mxu0 0.0
    %1495 = vmatprep.subr.mxu0 0.0
    %1496 = vmatpush1.msra.mxu0 0.0
    %1497 = vmatprep.subr.mxu0 0.0
    %1498 = vmatpush1.msra.mxu0 0.0
    %1499 = vmatprep.subr.mxu0 0.0
    %1500 = vmatpush1.msra.mxu0 0.0
    %1501 = vmatprep.subr.mxu0 0.0
    %1502 = vmatpush1.msra.mxu0 0.0
    %1503 = vmatprep.mubr.f32.mxu0 0.0
    %1504 = vmatmul.mubr.f32.gmra.mrb[0].mxu0 %v159
    %v1505 = vpop.f32.mrb[0].mxu0
    %v1506 = vadd.f32 0.0, %v1505
    %v1507 = vpop.f32.mrb[0].mxu0
    %1508 = vmatprep.mubr.f32.mxu0 0.0
    %1509 = vmatmul.mubr.f32.gmra.mrb[0].mxu0 %v162
    %v1510 = vpop.f32.mrb[0].mxu0
    %v1511 = vadd.f32 0.0, %v1510
    %v1512 = vpop.f32.mrb[0].mxu0
    %1513 = vdwg.mxu0
    %1514 = vmatprep.subr.mxu0 0.0
    %1515 = vmatpush1.msra.mxu0 %v113
    %1516 = vmatprep.subr.mxu0 0.0
    %1517 = vmatpush1.msra.mxu0 %v114
    %1518 = vmatprep.subr.mxu0 0.0
    %1519 = vmatpush1.msra.mxu0 0.0
    %1520 = vmatprep.subr.mxu0 0.0
    %1521 = vmatpush1.msra.mxu0 0.0
    %1522 = vmatprep.subr.mxu0 0.0
    %1523 = vmatpush1.msra.mxu0 0.0
    %1524 = vmatprep.subr.mxu0 0.0
    %1525 = vmatpush1.msra.mxu0 0.0
    %1526 = vmatprep.subr.mxu0 0.0
    %1527 = vmatpush1.msra.mxu0 0.0
    %1528 = vmatprep.subr.mxu0 0.0
    %1529 = vmatpush1.msra.mxu0 0.0
    %1530 = vmatprep.subr.mxu0 0.0
    %1531 = vmatpush1.msra.mxu0 0.0
    %1532 = vmatprep.subr.mxu0 0.0
    %1533 = vmatpush1.msra.mxu0 0.0
    %1534 = vmatprep.subr.mxu0 0.0
    %1535 = vmatpush1.msra.mxu0 0.0
    %1536 = vmatprep.subr.mxu0 0.0
    %1537 = vmatpush1.msra.mxu0 0.0
    %1538 = vmatprep.subr.mxu0 0.0
    %1539 = vmatpush1.msra.mxu0 0.0
    %1540 = vmatprep.subr.mxu0 0.0
    %1541 = vmatpush1.msra.mxu0 0.0
    %1542 = vmatprep.subr.mxu0 0.0
    %1543 = vmatpush1.msra.mxu0 0.0
    %1544 = vmatprep.subr.mxu0 0.0
    %1545 = vmatpush1.msra.mxu0 0.0
    %1546 = vmatprep.subr.mxu0 0.0
    %1547 = vmatpush1.msra.mxu0 0.0
    %1548 = vmatprep.subr.mxu0 0.0
    %1549 = vmatpush1.msra.mxu0 0.0
    %1550 = vmatprep.subr.mxu0 0.0
    %1551 = vmatpush1.msra.mxu0 0.0
    %1552 = vmatprep.subr.mxu0 0.0
    %1553 = vmatpush1.msra.mxu0 0.0
    %1554 = vmatprep.subr.mxu0 0.0
    %1555 = vmatpush1.msra.mxu0 0.0
    %1556 = vmatprep.subr.mxu0 0.0
    %1557 = vmatpush1.msra.mxu0 0.0
    %1558 = vmatprep.subr.mxu0 0.0
    %1559 = vmatpush1.msra.mxu0 0.0
    %1560 = vmatprep.subr.mxu0 0.0
    %1561 = vmatpush1.msra.mxu0 0.0
    %1562 = vmatprep.subr.mxu0 0.0
    %1563 = vmatpush1.msra.mxu0 0.0
    %1564 = vmatprep.subr.mxu0 0.0
    %1565 = vmatpush1.msra.mxu0 0.0
    %1566 = vmatprep.subr.mxu0 0.0
    %1567 = vmatpush1.msra.mxu0 0.0
    %1568 = vmatprep.subr.mxu0 0.0
    %1569 = vmatpush1.msra.mxu0 0.0
    %1570 = vmatprep.subr.mxu0 0.0
    %1571 = vmatpush1.msra.mxu0 0.0
    %1572 = vmatprep.subr.mxu0 0.0
    %1573 = vmatpush1.msra.mxu0 0.0
    %1574 = vmatprep.subr.mxu0 0.0
    %1575 = vmatpush1.msra.mxu0 0.0
    %1576 = vmatprep.subr.mxu0 0.0
    %1577 = vmatpush1.msra.mxu0 0.0
    %1578 = vmatprep.mubr.f32.mxu0 0.0
    %1579 = vmatmul.mubr.f32.gmra.mrb[0].mxu0 %v159
    %v1580 = vpop.f32.mrb[0].mxu0
    %v1581 = vadd.f32 0.0, %v1580
    %v1582 = vpop.f32.mrb[0].mxu0
    %1583 = vmatprep.mubr.f32.mxu0 0.0
    %1584 = vmatmul.mubr.f32.gmra.mrb[0].mxu0 %v162
    %v1585 = vpop.f32.mrb[0].mxu0
    %v1586 = vadd.f32 0.0, %v1585
    %v1587 = vpop.f32.mrb[0].mxu0
    %1588 = vdwg.mxu0
    %1589 = vmatprep.subr.mxu0 0.0
    %1590 = vmatpush1.msra.mxu0 %v115
    %1591 = vmatprep.subr.mxu0 0.0
    %1592 = vmatpush1.msra.mxu0 %v116
    %1593 = vmatprep.subr.mxu0 0.0
    %1594 = vmatpush1.msra.mxu0 0.0
    %1595 = vmatprep.subr.mxu0 0.0
    %1596 = vmatpush1.msra.mxu0 0.0
    %1597 = vmatprep.subr.mxu0 0.0
    %1598 = vmatpush1.msra.mxu0 0.0
    %1599 = vmatprep.subr.mxu0 0.0
    %1600 = vmatpush1.msra.mxu0 0.0
    %1601 = vmatprep.subr.mxu0 0.0
    %1602 = vmatpush1.msra.mxu0 0.0
    %1603 = vmatprep.subr.mxu0 0.0
    %1604 = vmatpush1.msra.mxu0 0.0
    %1605 = vmatprep.subr.mxu0 0.0
    %1606 = vmatpush1.msra.mxu0 0.0
    %1607 = vmatprep.subr.mxu0 0.0
    %1608 = vmatpush1.msra.mxu0 0.0
    %1609 = vmatprep.subr.mxu0 0.0
    %1610 = vmatpush1.msra.mxu0 0.0
    %1611 = vmatprep.subr.mxu0 0.0
    %1612 = vmatpush1.msra.mxu0 0.0
    %1613 = vmatprep.subr.mxu0 0.0
    %1614 = vmatpush1.msra.mxu0 0.0
    %1615 = vmatprep.subr.mxu0 0.0
    %1616 = vmatpush1.msra.mxu0 0.0
    %1617 = vmatprep.subr.mxu0 0.0
    %1618 = vmatpush1.msra.mxu0 0.0
    %1619 = vmatprep.subr.mxu0 0.0
    %1620 = vmatpush1.msra.mxu0 0.0
    %1621 = vmatprep.subr.mxu0 0.0
    %1622 = vmatpush1.msra.mxu0 0.0
    %1623 = vmatprep.subr.mxu0 0.0
    %1624 = vmatpush1.msra.mxu0 0.0
    %1625 = vmatprep.subr.mxu0 0.0
    %1626 = vmatpush1.msra.mxu0 0.0
    %1627 = vmatprep.subr.mxu0 0.0
    %1628 = vmatpush1.msra.mxu0 0.0
    %1629 = vmatprep.subr.mxu0 0.0
    %1630 = vmatpush1.msra.mxu0 0.0
    %1631 = vmatprep.subr.mxu0 0.0
    %1632 = vmatpush1.msra.mxu0 0.0
    %1633 = vmatprep.subr.mxu0 0.0
    %1634 = vmatpush1.msra.mxu0 0.0
    %1635 = vmatprep.subr.mxu0 0.0
    %1636 = vmatpush1.msra.mxu0 0.0
    %1637 = vmatprep.subr.mxu0 0.0
    %1638 = vmatpush1.msra.mxu0 0.0
    %1639 = vmatprep.subr.mxu0 0.0
    %1640 = vmatpush1.msra.mxu0 0.0
    %1641 = vmatprep.subr.mxu0 0.0
    %1642 = vmatpush1.msra.mxu0 0.0
    %1643 = vmatprep.subr.mxu0 0.0
    %1644 = vmatpush1.msra.mxu0 0.0
    %1645 = vmatprep.subr.mxu0 0.0
    %1646 = vmatpush1.msra.mxu0 0.0
    %1647 = vmatprep.subr.mxu0 0.0
    %1648 = vmatpush1.msra.mxu0 0.0
    %1649 = vmatprep.subr.mxu0 0.0
    %1650 = vmatpush1.msra.mxu0 0.0
    %1651 = vmatprep.subr.mxu0 0.0
    %1652 = vmatpush1.msra.mxu0 0.0
    %1653 = vmatprep.mubr.f32.mxu0 0.0
    %1654 = vmatmul.mubr.f32.gmra.mrb[0].mxu0 %v159
    %v1655 = vpop.f32.mrb[0].mxu0
    %v1656 = vadd.f32 0.0, %v1655
    %v1657 = vpop.f32.mrb[0].mxu0
    %1658 = vmatprep.mubr.f32.mxu0 0.0
    %1659 = vmatmul.mubr.f32.gmra.mrb[0].mxu0 %v162
    %v1660 = vpop.f32.mrb[0].mxu0
    %v1661 = vadd.f32 0.0, %v1660
    %v1662 = vpop.f32.mrb[0].mxu0
    %1663 = vdwg.mxu0
    %1664 = vmatprep.subr.mxu0 0.0
    %1665 = vmatpush1.msra.mxu0 %v117
    %1666 = vmatprep.subr.mxu0 0.0
    %1667 = vmatpush1.msra.mxu0 %v118
    %1668 = vmatprep.subr.mxu0 0.0
    %1669 = vmatpush1.msra.mxu0 0.0
    %1670 = vmatprep.subr.mxu0 0.0
    %1671 = vmatpush1.msra.mxu0 0.0
    %1672 = vmatprep.subr.mxu0 0.0
    %1673 = vmatpush1.msra.mxu0 0.0
    %1674 = vmatprep.subr.mxu0 0.0
    %1675 = vmatpush1.msra.mxu0 0.0
    %1676 = vmatprep.subr.mxu0 0.0
    %1677 = vmatpush1.msra.mxu0 0.0
    %1678 = vmatprep.subr.mxu0 0.0
    %1679 = vmatpush1.msra.mxu0 0.0
    %1680 = vmatprep.subr.mxu0 0.0
    %1681 = vmatpush1.msra.mxu0 0.0
    %1682 = vmatprep.subr.mxu0 0.0
    %1683 = vmatpush1.msra.mxu0 0.0
    %1684 = vmatprep.subr.mxu0 0.0
    %1685 = vmatpush1.msra.mxu0 0.0
    %1686 = vmatprep.subr.mxu0 0.0
    %1687 = vmatpush1.msra.mxu0 0.0
    %1688 = vmatprep.subr.mxu0 0.0
    %1689 = vmatpush1.msra.mxu0 0.0
    %1690 = vmatprep.subr.mxu0 0.0
    %1691 = vmatpush1.msra.mxu0 0.0
    %1692 = vmatprep.subr.mxu0 0.0
    %1693 = vmatpush1.msra.mxu0 0.0
    %1694 = vmatprep.subr.mxu0 0.0
    %1695 = vmatpush1.msra.mxu0 0.0
    %1696 = vmatprep.subr.mxu0 0.0
    %1697 = vmatpush1.msra.mxu0 0.0
    %1698 = vmatprep.subr.mxu0 0.0
    %1699 = vmatpush1.msra.mxu0 0.0
    %1700 = vmatprep.subr.mxu0 0.0
    %1701 = vmatpush1.msra.mxu0 0.0
    %1702 = vmatprep.subr.mxu0 0.0
    %1703 = vmatpush1.msra.mxu0 0.0
    %1704 = vmatprep.subr.mxu0 0.0
    %1705 = vmatpush1.msra.mxu0 0.0
    %1706 = vmatprep.subr.mxu0 0.0
    %1707 = vmatpush1.msra.mxu0 0.0
    %1708 = vmatprep.subr.mxu0 0.0
    %1709 = vmatpush1.msra.mxu0 0.0
    %1710 = vmatprep.subr.mxu0 0.0
    %1711 = vmatpush1.msra.mxu0 0.0
    %1712 = vmatprep.subr.mxu0 0.0
    %1713 = vmatpush1.msra.mxu0 0.0
    %1714 = vmatprep.subr.mxu0 0.0
    %1715 = vmatpush1.msra.mxu0 0.0
    %1716 = vmatprep.subr.mxu0 0.0
    %1717 = vmatpush1.msra.mxu0 0.0
    %1718 = vmatprep.subr.mxu0 0.0
    %1719 = vmatpush1.msra.mxu0 0.0
    %1720 = vmatprep.subr.mxu0 0.0
    %1721 = vmatpush1.msra.mxu0 0.0
    %1722 = vmatprep.subr.mxu0 0.0
    %1723 = vmatpush1.msra.mxu0 0.0
    %1724 = vmatprep.subr.mxu0 0.0
    %1725 = vmatpush1.msra.mxu0 0.0
    %1726 = vmatprep.subr.mxu0 0.0
    %1727 = vmatpush1.msra.mxu0 0.0
    %1728 = vmatprep.mubr.f32.mxu0 0.0
    %1729 = vmatmul.mubr.f32.gmra.mrb[0].mxu0 %v159
    %v1730 = vpop.f32.mrb[0].mxu0
    %v1731 = vadd.f32 0.0, %v1730
    %v1732 = vpop.f32.mrb[0].mxu0
    %1733 = vmatprep.mubr.f32.mxu0 0.0
    %1734 = vmatmul.mubr.f32.gmra.mrb[0].mxu0 %v162
    %v1735 = vpop.f32.mrb[0].mxu0
    %v1736 = vadd.f32 0.0, %v1735
    %v1737 = vpop.f32.mrb[0].mxu0
    %1738 = vdwg.mxu0
    %1739 = vmatprep.subr.mxu0 0.0
    %1740 = vmatpush1.msra.mxu0 %v119
    %1741 = vmatprep.subr.mxu0 0.0
    %1742 = vmatpush1.msra.mxu0 %v120
    %1743 = vmatprep.subr.mxu0 0.0
    %1744 = vmatpush1.msra.mxu0 0.0
    %1745 = vmatprep.subr.mxu0 0.0
    %1746 = vmatpush1.msra.mxu0 0.0
    %1747 = vmatprep.subr.mxu0 0.0
    %1748 = vmatpush1.msra.mxu0 0.0
    %1749 = vmatprep.subr.mxu0 0.0
    %1750 = vmatpush1.msra.mxu0 0.0
    %1751 = vmatprep.subr.mxu0 0.0
    %1752 = vmatpush1.msra.mxu0 0.0
    %1753 = vmatprep.subr.mxu0 0.0
    %1754 = vmatpush1.msra.mxu0 0.0
    %1755 = vmatprep.subr.mxu0 0.0
    %1756 = vmatpush1.msra.mxu0 0.0
    %1757 = vmatprep.subr.mxu0 0.0
    %1758 = vmatpush1.msra.mxu0 0.0
    %1759 = vmatprep.subr.mxu0 0.0
    %1760 = vmatpush1.msra.mxu0 0.0
    %1761 = vmatprep.subr.mxu0 0.0
    %1762 = vmatpush1.msra.mxu0 0.0
    %1763 = vmatprep.subr.mxu0 0.0
    %1764 = vmatpush1.msra.mxu0 0.0
    %1765 = vmatprep.subr.mxu0 0.0
    %1766 = vmatpush1.msra.mxu0 0.0
    %1767 = vmatprep.subr.mxu0 0.0
    %1768 = vmatpush1.msra.mxu0 0.0
    %1769 = vmatprep.subr.mxu0 0.0
    %1770 = vmatpush1.msra.mxu0 0.0
    %1771 = vmatprep.subr.mxu0 0.0
    %1772 = vmatpush1.msra.mxu0 0.0
    %1773 = vmatprep.subr.mxu0 0.0
    %1774 = vmatpush1.msra.mxu0 0.0
    %1775 = vmatprep.subr.mxu0 0.0
    %1776 = vmatpush1.msra.mxu0 0.0
    %1777 = vmatprep.subr.mxu0 0.0
    %1778 = vmatpush1.msra.mxu0 0.0
    %1779 = vmatprep.subr.mxu0 0.0
    %1780 = vmatpush1.msra.mxu0 0.0
    %1781 = vmatprep.subr.mxu0 0.0
    %1782 = vmatpush1.msra.mxu0 0.0
    %1783 = vmatprep.subr.mxu0 0.0
    %1784 = vmatpush1.msra.mxu0 0.0
    %1785 = vmatprep.subr.mxu0 0.0
    %1786 = vmatpush1.msra.mxu0 0.0
    %1787 = vmatprep.subr.mxu0 0.0
    %1788 = vmatpush1.msra.mxu0 0.0
    %1789 = vmatprep.subr.mxu0 0.0
    %1790 = vmatpush1.msra.mxu0 0.0
    %1791 = vmatprep.subr.mxu0 0.0
    %1792 = vmatpush1.msra.mxu0 0.0
    %1793 = vmatprep.subr.mxu0 0.0
    %1794 = vmatpush1.msra.mxu0 0.0
    %1795 = vmatprep.subr.mxu0 0.0
    %1796 = vmatpush1.msra.mxu0 0.0
    %1797 = vmatprep.subr.mxu0 0.0
    %1798 = vmatpush1.msra.mxu0 0.0
    %1799 = vmatprep.subr.mxu0 0.0
    %1800 = vmatpush1.msra.mxu0 0.0
    %1801 = vmatprep.subr.mxu0 0.0
    %1802 = vmatpush1.msra.mxu0 0.0
    %1803 = vmatprep.mubr.f32.mxu0 0.0
    %1804 = vmatmul.mubr.f32.gmra.mrb[0].mxu0 %v159
    %v1805 = vpop.f32.mrb[0].mxu0
    %v1806 = vadd.f32 0.0, %v1805
    %v1807 = vpop.f32.mrb[0].mxu0
    %1808 = vmatprep.mubr.f32.mxu0 0.0
    %1809 = vmatmul.mubr.f32.gmra.mrb[0].mxu0 %v162
    %v1810 = vpop.f32.mrb[0].mxu0
    %v1811 = vadd.f32 0.0, %v1810
    %v1812 = vpop.f32.mrb[0].mxu0
    %1813 = vdwg.mxu0
    %1814 = vmatprep.subr.mxu0 0.0
    %1815 = vmatpush1.msra.mxu0 %v121
    %1816 = vmatprep.subr.mxu0 0.0
    %1817 = vmatpush1.msra.mxu0 %v122
    %1818 = vmatprep.subr.mxu0 0.0
    %1819 = vmatpush1.msra.mxu0 0.0
    %1820 = vmatprep.subr.mxu0 0.0
    %1821 = vmatpush1.msra.mxu0 0.0
    %1822 = vmatprep.subr.mxu0 0.0
    %1823 = vmatpush1.msra.mxu0 0.0
    %1824 = vmatprep.subr.mxu0 0.0
    %1825 = vmatpush1.msra.mxu0 0.0
    %1826 = vmatprep.subr.mxu0 0.0
    %1827 = vmatpush1.msra.mxu0 0.0
    %1828 = vmatprep.subr.mxu0 0.0
    %1829 = vmatpush1.msra.mxu0 0.0
    %1830 = vmatprep.subr.mxu0 0.0
    %1831 = vmatpush1.msra.mxu0 0.0
    %1832 = vmatprep.subr.mxu0 0.0
    %1833 = vmatpush1.msra.mxu0 0.0
    %1834 = vmatprep.subr.mxu0 0.0
    %1835 = vmatpush1.msra.mxu0 0.0
    %1836 = vmatprep.subr.mxu0 0.0
    %1837 = vmatpush1.msra.mxu0 0.0
    %1838 = vmatprep.subr.mxu0 0.0
    %1839 = vmatpush1.msra.mxu0 0.0
    %1840 = vmatprep.subr.mxu0 0.0
    %1841 = vmatpush1.msra.mxu0 0.0
    %1842 = vmatprep.subr.mxu0 0.0
    %1843 = vmatpush1.msra.mxu0 0.0
    %1844 = vmatprep.subr.mxu0 0.0
    %1845 = vmatpush1.msra.mxu0 0.0
    %1846 = vmatprep.subr.mxu0 0.0
    %1847 = vmatpush1.msra.mxu0 0.0
    %1848 = vmatprep.subr.mxu0 0.0
    %1849 = vmatpush1.msra.mxu0 0.0
    %1850 = vmatprep.subr.mxu0 0.0
    %1851 = vmatpush1.msra.mxu0 0.0
    %1852 = vmatprep.subr.mxu0 0.0
    %1853 = vmatpush1.msra.mxu0 0.0
    %1854 = vmatprep.subr.mxu0 0.0
    %1855 = vmatpush1.msra.mxu0 0.0
    %1856 = vmatprep.subr.mxu0 0.0
    %1857 = vmatpush1.msra.mxu0 0.0
    %1858 = vmatprep.subr.mxu0 0.0
    %1859 = vmatpush1.msra.mxu0 0.0
    %1860 = vmatprep.subr.mxu0 0.0
    %1861 = vmatpush1.msra.mxu0 0.0
    %1862 = vmatprep.subr.mxu0 0.0
    %1863 = vmatpush1.msra.mxu0 0.0
    %1864 = vmatprep.subr.mxu0 0.0
    %1865 = vmatpush1.msra.mxu0 0.0
    %1866 = vmatprep.subr.mxu0 0.0
    %1867 = vmatpush1.msra.mxu0 0.0
    %1868 = vmatprep.subr.mxu0 0.0
    %1869 = vmatpush1.msra.mxu0 0.0
    %1870 = vmatprep.subr.mxu0 0.0
    %1871 = vmatpush1.msra.mxu0 0.0
    %1872 = vmatprep.subr.mxu0 0.0
    %1873 = vmatpush1.msra.mxu0 0.0
    %1874 = vmatprep.subr.mxu0 0.0
    %1875 = vmatpush1.msra.mxu0 0.0
    %1876 = vmatprep.subr.mxu0 0.0
    %1877 = vmatpush1.msra.mxu0 0.0
    %1878 = vmatprep.mubr.f32.mxu0 0.0
    %1879 = vmatmul.mubr.f32.gmra.mrb[0].mxu0 %v159
    %v1880 = vpop.f32.mrb[0].mxu0
    %v1881 = vadd.f32 0.0, %v1880
    %v1882 = vpop.f32.mrb[0].mxu0
    %1883 = vmatprep.mubr.f32.mxu0 0.0
    %1884 = vmatmul.mubr.f32.gmra.mrb[0].mxu0 %v162
    %v1885 = vpop.f32.mrb[0].mxu0
    %v1886 = vadd.f32 0.0, %v1885
    %v1887 = vpop.f32.mrb[0].mxu0
    %1888 = vdwg.mxu0
    %1889 = vmatprep.subr.mxu0 0.0
    %1890 = vmatpush1.msra.mxu0 %v123
    %1891 = vmatprep.subr.mxu0 0.0
    %1892 = vmatpush1.msra.mxu0 %v124
    %1893 = vmatprep.subr.mxu0 0.0
    %1894 = vmatpush1.msra.mxu0 0.0
    %1895 = vmatprep.subr.mxu0 0.0
    %1896 = vmatpush1.msra.mxu0 0.0
    %1897 = vmatprep.subr.mxu0 0.0
    %1898 = vmatpush1.msra.mxu0 0.0
    %1899 = vmatprep.subr.mxu0 0.0
    %1900 = vmatpush1.msra.mxu0 0.0
    %1901 = vmatprep.subr.mxu0 0.0
    %1902 = vmatpush1.msra.mxu0 0.0
    %1903 = vmatprep.subr.mxu0 0.0
    %1904 = vmatpush1.msra.mxu0 0.0
    %1905 = vmatprep.subr.mxu0 0.0
    %1906 = vmatpush1.msra.mxu0 0.0
    %1907 = vmatprep.subr.mxu0 0.0
    %1908 = vmatpush1.msra.mxu0 0.0
    %1909 = vmatprep.subr.mxu0 0.0
    %1910 = vmatpush1.msra.mxu0 0.0
    %1911 = vmatprep.subr.mxu0 0.0
    %1912 = vmatpush1.msra.mxu0 0.0
    %1913 = vmatprep.subr.mxu0 0.0
    %1914 = vmatpush1.msra.mxu0 0.0
    %1915 = vmatprep.subr.mxu0 0.0
    %1916 = vmatpush1.msra.mxu0 0.0
    %1917 = vmatprep.subr.mxu0 0.0
    %1918 = vmatpush1.msra.mxu0 0.0
    %1919 = vmatprep.subr.mxu0 0.0
    %1920 = vmatpush1.msra.mxu0 0.0
    %1921 = vmatprep.subr.mxu0 0.0
    %1922 = vmatpush1.msra.mxu0 0.0
    %1923 = vmatprep.subr.mxu0 0.0
    %1924 = vmatpush1.msra.mxu0 0.0
    %1925 = vmatprep.subr.mxu0 0.0
    %1926 = vmatpush1.msra.mxu0 0.0
    %1927 = vmatprep.subr.mxu0 0.0
    %1928 = vmatpush1.msra.mxu0 0.0
    %1929 = vmatprep.subr.mxu0 0.0
    %1930 = vmatpush1.msra.mxu0 0.0
    %1931 = vmatprep.subr.mxu0 0.0
    %1932 = vmatpush1.msra.mxu0 0.0
    %1933 = vmatprep.subr.mxu0 0.0
    %1934 = vmatpush1.msra.mxu0 0.0
    %1935 = vmatprep.subr.mxu0 0.0
    %1936 = vmatpush1.msra.mxu0 0.0
    %1937 = vmatprep.subr.mxu0 0.0
    %1938 = vmatpush1.msra.mxu0 0.0
    %1939 = vmatprep.subr.mxu0 0.0
    %1940 = vmatpush1.msra.mxu0 0.0
    %1941 = vmatprep.subr.mxu0 0.0
    %1942 = vmatpush1.msra.mxu0 0.0
    %1943 = vmatprep.subr.mxu0 0.0
    %1944 = vmatpush1.msra.mxu0 0.0
    %1945 = vmatprep.subr.mxu0 0.0
    %1946 = vmatpush1.msra.mxu0 0.0
    %1947 = vmatprep.subr.mxu0 0.0
    %1948 = vmatpush1.msra.mxu0 0.0
    %1949 = vmatprep.subr.mxu0 0.0
    %1950 = vmatpush1.msra.mxu0 0.0
    %1951 = vmatprep.subr.mxu0 0.0
    %1952 = vmatpush1.msra.mxu0 0.0
    %1953 = vmatprep.mubr.f32.mxu0 0.0
    %1954 = vmatmul.mubr.f32.gmra.mrb[0].mxu0 %v159
    %v1955 = vpop.f32.mrb[0].mxu0
    %v1956 = vadd.f32 0.0, %v1955
    %v1957 = vpop.f32.mrb[0].mxu0
    %1958 = vmatprep.mubr.f32.mxu0 0.0
    %1959 = vmatmul.mubr.f32.gmra.mrb[0].mxu0 %v162
    %v1960 = vpop.f32.mrb[0].mxu0
    %v1961 = vadd.f32 0.0, %v1960
    %v1962 = vpop.f32.mrb[0].mxu0
    %1963 = vdwg.mxu0
    %1964 = vmatprep.subr.mxu0 0.0
    %1965 = vmatpush1.msra.mxu0 %v125
    %1966 = vmatprep.subr.mxu0 0.0
    %1967 = vmatpush1.msra.mxu0 %v126
    %1968 = vmatprep.subr.mxu0 0.0
    %1969 = vmatpush1.msra.mxu0 0.0
    %1970 = vmatprep.subr.mxu0 0.0
    %1971 = vmatpush1.msra.mxu0 0.0
    %1972 = vmatprep.subr.mxu0 0.0
    %1973 = vmatpush1.msra.mxu0 0.0
    %1974 = vmatprep.subr.mxu0 0.0
    %1975 = vmatpush1.msra.mxu0 0.0
    %1976 = vmatprep.subr.mxu0 0.0
    %1977 = vmatpush1.msra.mxu0 0.0
    %1978 = vmatprep.subr.mxu0 0.0
    %1979 = vmatpush1.msra.mxu0 0.0
    %1980 = vmatprep.subr.mxu0 0.0
    %1981 = vmatpush1.msra.mxu0 0.0
    %1982 = vmatprep.subr.mxu0 0.0
    %1983 = vmatpush1.msra.mxu0 0.0
    %1984 = vmatprep.subr.mxu0 0.0
    %1985 = vmatpush1.msra.mxu0 0.0
    %1986 = vmatprep.subr.mxu0 0.0
    %1987 = vmatpush1.msra.mxu0 0.0
    %1988 = vmatprep.subr.mxu0 0.0
    %1989 = vmatpush1.msra.mxu0 0.0
    %1990 = vmatprep.subr.mxu0 0.0
    %1991 = vmatpush1.msra.mxu0 0.0
    %1992 = vmatprep.subr.mxu0 0.0
    %1993 = vmatpush1.msra.mxu0 0.0
    %1994 = vmatprep.subr.mxu0 0.0
    %1995 = vmatpush1.msra.mxu0 0.0
    %1996 = vmatprep.subr.mxu0 0.0
    %1997 = vmatpush1.msra.mxu0 0.0
    %1998 = vmatprep.subr.mxu0 0.0
    %1999 = vmatpush1.msra.mxu0 0.0
    %2000 = vmatprep.subr.mxu0 0.0
    %2001 = vmatpush1.msra.mxu0 0.0
    %2002 = vmatprep.subr.mxu0 0.0
    %2003 = vmatpush1.msra.mxu0 0.0
    %2004 = vmatprep.subr.mxu0 0.0
    %2005 = vmatpush1.msra.mxu0 0.0
    %2006 = vmatprep.subr.mxu0 0.0
    %2007 = vmatpush1.msra.mxu0 0.0
    %2008 = vmatprep.subr.mxu0 0.0
    %2009 = vmatpush1.msra.mxu0 0.0
    %2010 = vmatprep.subr.mxu0 0.0
    %2011 = vmatpush1.msra.mxu0 0.0
    %2012 = vmatprep.subr.mxu0 0.0
    %2013 = vmatpush1.msra.mxu0 0.0
    %2014 = vmatprep.subr.mxu0 0.0
    %2015 = vmatpush1.msra.mxu0 0.0
    %2016 = vmatprep.subr.mxu0 0.0
    %2017 = vmatpush1.msra.mxu0 0.0
    %2018 = vmatprep.subr.mxu0 0.0
    %2019 = vmatpush1.msra.mxu0 0.0
    %2020 = vmatprep.subr.mxu0 0.0
    %2021 = vmatpush1.msra.mxu0 0.0
    %2022 = vmatprep.subr.mxu0 0.0
    %2023 = vmatpush1.msra.mxu0 0.0
    %2024 = vmatprep.subr.mxu0 0.0
    %2025 = vmatpush1.msra.mxu0 0.0
    %2026 = vmatprep.subr.mxu0 0.0
    %2027 = vmatpush1.msra.mxu0 0.0
    %2028 = vmatprep.mubr.f32.mxu0 0.0
    %2029 = vmatmul.mubr.f32.gmra.mrb[0].mxu0 %v159
    %v2030 = vpop.f32.mrb[0].mxu0
    %v2031 = vadd.f32 0.0, %v2030
    %v2032 = vpop.f32.mrb[0].mxu0
    %2033 = vmatprep.mubr.f32.mxu0 0.0
    %2034 = vmatmul.mubr.f32.gmra.mrb[0].mxu0 %v162
    %v2035 = vpop.f32.mrb[0].mxu0
    %v2036 = vadd.f32 0.0, %v2035
    %v2037 = vpop.f32.mrb[0].mxu0
    %2038 = vdwg.mxu0
    %2039 = vmatprep.subr.mxu0 0.0
    %2040 = vmatpush1.msra.mxu0 %v127
    %2041 = vmatprep.subr.mxu0 0.0
    %2042 = vmatpush1.msra.mxu0 %v128
    %2043 = vmatprep.subr.mxu0 0.0
    %2044 = vmatpush1.msra.mxu0 0.0
    %2045 = vmatprep.subr.mxu0 0.0
    %2046 = vmatpush1.msra.mxu0 0.0
    %2047 = vmatprep.subr.mxu0 0.0
    %2048 = vmatpush1.msra.mxu0 0.0
    %2049 = vmatprep.subr.mxu0 0.0
    %2050 = vmatpush1.msra.mxu0 0.0
    %2051 = vmatprep.subr.mxu0 0.0
    %2052 = vmatpush1.msra.mxu0 0.0
    %2053 = vmatprep.subr.mxu0 0.0
    %2054 = vmatpush1.msra.mxu0 0.0
    %2055 = vmatprep.subr.mxu0 0.0
    %2056 = vmatpush1.msra.mxu0 0.0
    %2057 = vmatprep.subr.mxu0 0.0
    %2058 = vmatpush1.msra.mxu0 0.0
    %2059 = vmatprep.subr.mxu0 0.0
    %2060 = vmatpush1.msra.mxu0 0.0
    %2061 = vmatprep.subr.mxu0 0.0
    %2062 = vmatpush1.msra.mxu0 0.0
    %2063 = vmatprep.subr.mxu0 0.0
    %2064 = vmatpush1.msra.mxu0 0.0
    %2065 = vmatprep.subr.mxu0 0.0
    %2066 = vmatpush1.msra.mxu0 0.0
    %2067 = vmatprep.subr.mxu0 0.0
    %2068 = vmatpush1.msra.mxu0 0.0
    %2069 = vmatprep.subr.mxu0 0.0
    %2070 = vmatpush1.msra.mxu0 0.0
    %2071 = vmatprep.subr.mxu0 0.0
    %2072 = vmatpush1.msra.mxu0 0.0
    %2073 = vmatprep.subr.mxu0 0.0
    %2074 = vmatpush1.msra.mxu0 0.0
    %2075 = vmatprep.subr.mxu0 0.0
    %2076 = vmatpush1.msra.mxu0 0.0
    %2077 = vmatprep.subr.mxu0 0.0
    %2078 = vmatpush1.msra.mxu0 0.0
    %2079 = vmatprep.subr.mxu0 0.0
    %2080 = vmatpush1.msra.mxu0 0.0
    %2081 = vmatprep.subr.mxu0 0.0
    %2082 = vmatpush1.msra.mxu0 0.0
    %2083 = vmatprep.subr.mxu0 0.0
    %2084 = vmatpush1.msra.mxu0 0.0
    %2085 = vmatprep.subr.mxu0 0.0
    %2086 = vmatpush1.msra.mxu0 0.0
    %2087 = vmatprep.subr.mxu0 0.0
    %2088 = vmatpush1.msra.mxu0 0.0
    %2089 = vmatprep.subr.mxu0 0.0
    %2090 = vmatpush1.msra.mxu0 0.0
    %2091 = vmatprep.subr.mxu0 0.0
    %2092 = vmatpush1.msra.mxu0 0.0
    %2093 = vmatprep.subr.mxu0 0.0
    %2094 = vmatpush1.msra.mxu0 0.0
    %2095 = vmatprep.subr.mxu0 0.0
    %2096 = vmatpush1.msra.mxu0 0.0
    %2097 = vmatprep.subr.mxu0 0.0
    %2098 = vmatpush1.msra.mxu0 0.0
    %2099 = vmatprep.subr.mxu0 0.0
    %2100 = vmatpush1.msra.mxu0 0.0
    %2101 = vmatprep.subr.mxu0 0.0
    %2102 = vmatpush1.msra.mxu0 0.0
    %2103 = vmatprep.mubr.f32.mxu0 0.0
    %2104 = vmatmul.mubr.f32.gmra.mrb[0].mxu0 %v159
    %v2105 = vpop.f32.mrb[0].mxu0
    %v2106 = vadd.f32 0.0, %v2105
    %v2107 = vpop.f32.mrb[0].mxu0
    %2108 = vmatprep.mubr.f32.mxu0 0.0
    %2109 = vmatmul.mubr.f32.gmra.mrb[0].mxu0 %v162
    %v2110 = vpop.f32.mrb[0].mxu0
    %v2111 = vadd.f32 0.0, %v2110
    %v2112 = vpop.f32.mrb[0].mxu0
    %2113 = vdwg.mxu0
    %2114 = vmatprep.subr.mxu0 0.0
    %2115 = vmatpush1.msra.mxu0 %v129
    %2116 = vmatprep.subr.mxu0 0.0
    %2117 = vmatpush1.msra.mxu0 %v130
    %2118 = vmatprep.subr.mxu0 0.0
    %2119 = vmatpush1.msra.mxu0 0.0
    %2120 = vmatprep.subr.mxu0 0.0
    %2121 = vmatpush1.msra.mxu0 0.0
    %2122 = vmatprep.subr.mxu0 0.0
    %2123 = vmatpush1.msra.mxu0 0.0
    %2124 = vmatprep.subr.mxu0 0.0
    %2125 = vmatpush1.msra.mxu0 0.0
    %2126 = vmatprep.subr.mxu0 0.0
    %2127 = vmatpush1.msra.mxu0 0.0
    %2128 = vmatprep.subr.mxu0 0.0
    %2129 = vmatpush1.msra.mxu0 0.0
    %2130 = vmatprep.subr.mxu0 0.0
    %2131 = vmatpush1.msra.mxu0 0.0
    %2132 = vmatprep.subr.mxu0 0.0
    %2133 = vmatpush1.msra.mxu0 0.0
    %2134 = vmatprep.subr.mxu0 0.0
    %2135 = vmatpush1.msra.mxu0 0.0
    %2136 = vmatprep.subr.mxu0 0.0
    %2137 = vmatpush1.msra.mxu0 0.0
    %2138 = vmatprep.subr.mxu0 0.0
    %2139 = vmatpush1.msra.mxu0 0.0
    %2140 = vmatprep.subr.mxu0 0.0
    %2141 = vmatpush1.msra.mxu0 0.0
    %2142 = vmatprep.subr.mxu0 0.0
    %2143 = vmatpush1.msra.mxu0 0.0
    %2144 = vmatprep.subr.mxu0 0.0
    %2145 = vmatpush1.msra.mxu0 0.0
    %2146 = vmatprep.subr.mxu0 0.0
    %2147 = vmatpush1.msra.mxu0 0.0
    %2148 = vmatprep.subr.mxu0 0.0
    %2149 = vmatpush1.msra.mxu0 0.0
    %2150 = vmatprep.subr.mxu0 0.0
    %2151 = vmatpush1.msra.mxu0 0.0
    %2152 = vmatprep.subr.mxu0 0.0
    %2153 = vmatpush1.msra.mxu0 0.0
    %2154 = vmatprep.subr.mxu0 0.0
    %2155 = vmatpush1.msra.mxu0 0.0
    %2156 = vmatprep.subr.mxu0 0.0
    %2157 = vmatpush1.msra.mxu0 0.0
    %2158 = vmatprep.subr.mxu0 0.0
    %2159 = vmatpush1.msra.mxu0 0.0
    %2160 = vmatprep.subr.mxu0 0.0
    %2161 = vmatpush1.msra.mxu0 0.0
    %2162 = vmatprep.subr.mxu0 0.0
    %2163 = vmatpush1.msra.mxu0 0.0
    %2164 = vmatprep.subr.mxu0 0.0
    %2165 = vmatpush1.msra.mxu0 0.0
    %2166 = vmatprep.subr.mxu0 0.0
    %2167 = vmatpush1.msra.mxu0 0.0
    %2168 = vmatprep.subr.mxu0 0.0
    %2169 = vmatpush1.msra.mxu0 0.0
    %2170 = vmatprep.subr.mxu0 0.0
    %2171 = vmatpush1.msra.mxu0 0.0
    %2172 = vmatprep.subr.mxu0 0.0
    %2173 = vmatpush1.msra.mxu0 0.0
    %2174 = vmatprep.subr.mxu0 0.0
    %2175 = vmatpush1.msra.mxu0 0.0
    %2176 = vmatprep.subr.mxu0 0.0
    %2177 = vmatpush1.msra.mxu0 0.0
    %2178 = vmatprep.mubr.f32.mxu0 0.0
    %2179 = vmatmul.mubr.f32.gmra.mrb[0].mxu0 %v159
    %v2180 = vpop.f32.mrb[0].mxu0
    %v2181 = vadd.f32 0.0, %v2180
    %v2182 = vpop.f32.mrb[0].mxu0
    %2183 = vmatprep.mubr.f32.mxu0 0.0
    %2184 = vmatmul.mubr.f32.gmra.mrb[0].mxu0 %v162
    %v2185 = vpop.f32.mrb[0].mxu0
    %v2186 = vadd.f32 0.0, %v2185
    %v2187 = vpop.f32.mrb[0].mxu0
    %2188 = vdwg.mxu0
    %2189 = vmatprep.subr.mxu0 0.0
    %2190 = vmatpush1.msra.mxu0 %v131
    %2191 = vmatprep.subr.mxu0 0.0
    %2192 = vmatpush1.msra.mxu0 %v132
    %2193 = vmatprep.subr.mxu0 0.0
    %2194 = vmatpush1.msra.mxu0 0.0
    %2195 = vmatprep.subr.mxu0 0.0
    %2196 = vmatpush1.msra.mxu0 0.0
    %2197 = vmatprep.subr.mxu0 0.0
    %2198 = vmatpush1.msra.mxu0 0.0
    %2199 = vmatprep.subr.mxu0 0.0
    %2200 = vmatpush1.msra.mxu0 0.0
    %2201 = vmatprep.subr.mxu0 0.0
    %2202 = vmatpush1.msra.mxu0 0.0
    %2203 = vmatprep.subr.mxu0 0.0
    %2204 = vmatpush1.msra.mxu0 0.0
    %2205 = vmatprep.subr.mxu0 0.0
    %2206 = vmatpush1.msra.mxu0 0.0
    %2207 = vmatprep.subr.mxu0 0.0
    %2208 = vmatpush1.msra.mxu0 0.0
    %2209 = vmatprep.subr.mxu0 0.0
    %2210 = vmatpush1.msra.mxu0 0.0
    %2211 = vmatprep.subr.mxu0 0.0
    %2212 = vmatpush1.msra.mxu0 0.0
    %2213 = vmatprep.subr.mxu0 0.0
    %2214 = vmatpush1.msra.mxu0 0.0
    %2215 = vmatprep.subr.mxu0 0.0
    %2216 = vmatpush1.msra.mxu0 0.0
    %2217 = vmatprep.subr.mxu0 0.0
    %2218 = vmatpush1.msra.mxu0 0.0
    %2219 = vmatprep.subr.mxu0 0.0
    %2220 = vmatpush1.msra.mxu0 0.0
    %2221 = vmatprep.subr.mxu0 0.0
    %2222 = vmatpush1.msra.mxu0 0.0
    %2223 = vmatprep.subr.mxu0 0.0
    %2224 = vmatpush1.msra.mxu0 0.0
    %2225 = vmatprep.subr.mxu0 0.0
    %2226 = vmatpush1.msra.mxu0 0.0
    %2227 = vmatprep.subr.mxu0 0.0
    %2228 = vmatpush1.msra.mxu0 0.0
    %2229 = vmatprep.subr.mxu0 0.0
    %2230 = vmatpush1.msra.mxu0 0.0
    %2231 = vmatprep.subr.mxu0 0.0
    %2232 = vmatpush1.msra.mxu0 0.0
    %2233 = vmatprep.subr.mxu0 0.0
    %2234 = vmatpush1.msra.mxu0 0.0
    %2235 = vmatprep.subr.mxu0 0.0
    %2236 = vmatpush1.msra.mxu0 0.0
    %2237 = vmatprep.subr.mxu0 0.0
    %2238 = vmatpush1.msra.mxu0 0.0
    %2239 = vmatprep.subr.mxu0 0.0
    %2240 = vmatpush1.msra.mxu0 0.0
    %2241 = vmatprep.subr.mxu0 0.0
    %2242 = vmatpush1.msra.mxu0 0.0
    %2243 = vmatprep.subr.mxu0 0.0
    %2244 = vmatpush1.msra.mxu0 0.0
    %2245 = vmatprep.subr.mxu0 0.0
    %2246 = vmatpush1.msra.mxu0 0.0
    %2247 = vmatprep.subr.mxu0 0.0
    %2248 = vmatpush1.msra.mxu0 0.0
    %2249 = vmatprep.subr.mxu0 0.0
    %2250 = vmatpush1.msra.mxu0 0.0
    %2251 = vmatprep.subr.mxu0 0.0
    %2252 = vmatpush1.msra.mxu0 0.0
    %2253 = vmatprep.mubr.f32.mxu0 0.0
    %2254 = vmatmul.mubr.f32.gmra.mrb[0].mxu0 %v159
    %v2255 = vpop.f32.mrb[0].mxu0
    %v2256 = vadd.f32 0.0, %v2255
    %v2257 = vpop.f32.mrb[0].mxu0
    %2258 = vmatprep.mubr.f32.mxu0 0.0
    %2259 = vmatmul.mubr.f32.gmra.mrb[0].mxu0 %v162
    %v2260 = vpop.f32.mrb[0].mxu0
    %v2261 = vadd.f32 0.0, %v2260
    %v2262 = vpop.f32.mrb[0].mxu0
    %2263 = vdwg.mxu0
    %2264 = vmatprep.subr.mxu0 0.0
    %2265 = vmatpush1.msra.mxu0 %v133
    %2266 = vmatprep.subr.mxu0 0.0
    %2267 = vmatpush1.msra.mxu0 %v134
    %2268 = vmatprep.subr.mxu0 0.0
    %2269 = vmatpush1.msra.mxu0 0.0
    %2270 = vmatprep.subr.mxu0 0.0
    %2271 = vmatpush1.msra.mxu0 0.0
    %2272 = vmatprep.subr.mxu0 0.0
    %2273 = vmatpush1.msra.mxu0 0.0
    %2274 = vmatprep.subr.mxu0 0.0
    %2275 = vmatpush1.msra.mxu0 0.0
    %2276 = vmatprep.subr.mxu0 0.0
    %2277 = vmatpush1.msra.mxu0 0.0
    %2278 = vmatprep.subr.mxu0 0.0
    %2279 = vmatpush1.msra.mxu0 0.0
    %2280 = vmatprep.subr.mxu0 0.0
    %2281 = vmatpush1.msra.mxu0 0.0
    %2282 = vmatprep.subr.mxu0 0.0
    %2283 = vmatpush1.msra.mxu0 0.0
    %2284 = vmatprep.subr.mxu0 0.0
    %2285 = vmatpush1.msra.mxu0 0.0
    %2286 = vmatprep.subr.mxu0 0.0
    %2287 = vmatpush1.msra.mxu0 0.0
    %2288 = vmatprep.subr.mxu0 0.0
    %2289 = vmatpush1.msra.mxu0 0.0
    %2290 = vmatprep.subr.mxu0 0.0
    %2291 = vmatpush1.msra.mxu0 0.0
    %2292 = vmatprep.subr.mxu0 0.0
    %2293 = vmatpush1.msra.mxu0 0.0
    %2294 = vmatprep.subr.mxu0 0.0
    %2295 = vmatpush1.msra.mxu0 0.0
    %2296 = vmatprep.subr.mxu0 0.0
    %2297 = vmatpush1.msra.mxu0 0.0
    %2298 = vmatprep.subr.mxu0 0.0
    %2299 = vmatpush1.msra.mxu0 0.0
    %2300 = vmatprep.subr.mxu0 0.0
    %2301 = vmatpush1.msra.mxu0 0.0
    %2302 = vmatprep.subr.mxu0 0.0
    %2303 = vmatpush1.msra.mxu0 0.0
    %2304 = vmatprep.subr.mxu0 0.0
    %2305 = vmatpush1.msra.mxu0 0.0
    %2306 = vmatprep.subr.mxu0 0.0
    %2307 = vmatpush1.msra.mxu0 0.0
    %2308 = vmatprep.subr.mxu0 0.0
    %2309 = vmatpush1.msra.mxu0 0.0
    %2310 = vmatprep.subr.mxu0 0.0
    %2311 = vmatpush1.msra.mxu0 0.0
    %2312 = vmatprep.subr.mxu0 0.0
    %2313 = vmatpush1.msra.mxu0 0.0
    %2314 = vmatprep.subr.mxu0 0.0
    %2315 = vmatpush1.msra.mxu0 0.0
    %2316 = vmatprep.subr.mxu0 0.0
    %2317 = vmatpush1.msra.mxu0 0.0
    %2318 = vmatprep.subr.mxu0 0.0
    %2319 = vmatpush1.msra.mxu0 0.0
    %2320 = vmatprep.subr.mxu0 0.0
    %2321 = vmatpush1.msra.mxu0 0.0
    %2322 = vmatprep.subr.mxu0 0.0
    %2323 = vmatpush1.msra.mxu0 0.0
    %2324 = vmatprep.subr.mxu0 0.0
    %2325 = vmatpush1.msra.mxu0 0.0
    %2326 = vmatprep.subr.mxu0 0.0
    %2327 = vmatpush1.msra.mxu0 0.0
    %2328 = vmatprep.mubr.f32.mxu0 0.0
    %2329 = vmatmul.mubr.f32.gmra.mrb[0].mxu0 %v159
    %v2330 = vpop.f32.mrb[0].mxu0
    %v2331 = vadd.f32 0.0, %v2330
    %v2332 = vpop.f32.mrb[0].mxu0
    %2333 = vmatprep.mubr.f32.mxu0 0.0
    %2334 = vmatmul.mubr.f32.gmra.mrb[0].mxu0 %v162
    %v2335 = vpop.f32.mrb[0].mxu0
    %v2336 = vadd.f32 0.0, %v2335
    %v2337 = vpop.f32.mrb[0].mxu0
    %2338 = vdwg.mxu0
    %2339 = vmatprep.subr.mxu0 0.0
    %2340 = vmatpush1.msra.mxu0 %v135
    %2341 = vmatprep.subr.mxu0 0.0
    %2342 = vmatpush1.msra.mxu0 %v136
    %2343 = vmatprep.subr.mxu0 0.0
    %2344 = vmatpush1.msra.mxu0 0.0
    %2345 = vmatprep.subr.mxu0 0.0
    %2346 = vmatpush1.msra.mxu0 0.0
    %2347 = vmatprep.subr.mxu0 0.0
    %2348 = vmatpush1.msra.mxu0 0.0
    %2349 = vmatprep.subr.mxu0 0.0
    %2350 = vmatpush1.msra.mxu0 0.0
    %2351 = vmatprep.subr.mxu0 0.0
    %2352 = vmatpush1.msra.mxu0 0.0
    %2353 = vmatprep.subr.mxu0 0.0
    %2354 = vmatpush1.msra.mxu0 0.0
    %2355 = vmatprep.subr.mxu0 0.0
    %2356 = vmatpush1.msra.mxu0 0.0
    %2357 = vmatprep.subr.mxu0 0.0
    %2358 = vmatpush1.msra.mxu0 0.0
    %2359 = vmatprep.subr.mxu0 0.0
    %2360 = vmatpush1.msra.mxu0 0.0
    %2361 = vmatprep.subr.mxu0 0.0
    %2362 = vmatpush1.msra.mxu0 0.0
    %2363 = vmatprep.subr.mxu0 0.0
    %2364 = vmatpush1.msra.mxu0 0.0
    %2365 = vmatprep.subr.mxu0 0.0
    %2366 = vmatpush1.msra.mxu0 0.0
    %2367 = vmatprep.subr.mxu0 0.0
    %2368 = vmatpush1.msra.mxu0 0.0
    %2369 = vmatprep.subr.mxu0 0.0
    %2370 = vmatpush1.msra.mxu0 0.0
    %2371 = vmatprep.subr.mxu0 0.0
    %2372 = vmatpush1.msra.mxu0 0.0
    %2373 = vmatprep.subr.mxu0 0.0
    %2374 = vmatpush1.msra.mxu0 0.0
    %2375 = vmatprep.subr.mxu0 0.0
    %2376 = vmatpush1.msra.mxu0 0.0
    %2377 = vmatprep.subr.mxu0 0.0
    %2378 = vmatpush1.msra.mxu0 0.0
    %2379 = vmatprep.subr.mxu0 0.0
    %2380 = vmatpush1.msra.mxu0 0.0
    %2381 = vmatprep.subr.mxu0 0.0
    %2382 = vmatpush1.msra.mxu0 0.0
    %2383 = vmatprep.subr.mxu0 0.0
    %2384 = vmatpush1.msra.mxu0 0.0
    %2385 = vmatprep.subr.mxu0 0.0
    %2386 = vmatpush1.msra.mxu0 0.0
    %2387 = vmatprep.subr.mxu0 0.0
    %2388 = vmatpush1.msra.mxu0 0.0
    %2389 = vmatprep.subr.mxu0 0.0
    %2390 = vmatpush1.msra.mxu0 0.0
    %2391 = vmatprep.subr.mxu0 0.0
    %2392 = vmatpush1.msra.mxu0 0.0
    %2393 = vmatprep.subr.mxu0 0.0
    %2394 = vmatpush1.msra.mxu0 0.0
    %2395 = vmatprep.subr.mxu0 0.0
    %2396 = vmatpush1.msra.mxu0 0.0
    %2397 = vmatprep.subr.mxu0 0.0
    %2398 = vmatpush1.msra.mxu0 0.0
    %2399 = vmatprep.subr.mxu0 0.0
    %2400 = vmatpush1.msra.mxu0 0.0
    %2401 = vmatprep.subr.mxu0 0.0
    %2402 = vmatpush1.msra.mxu0 0.0
    %2403 = vmatprep.mubr.f32.mxu0 0.0
    %2404 = vmatmul.mubr.f32.gmra.mrb[0].mxu0 %v159
    %v2405 = vpop.f32.mrb[0].mxu0
    %v2406 = vadd.f32 0.0, %v2405
    %v2407 = vpop.f32.mrb[0].mxu0
    %2408 = vmatprep.mubr.f32.mxu0 0.0
    %2409 = vmatmul.mubr.f32.gmra.mrb[0].mxu0 %v162
    %v2410 = vpop.f32.mrb[0].mxu0
    %v2411 = vadd.f32 0.0, %v2410
    %v2412 = vpop.f32.mrb[0].mxu0
    %2413 = vdwg.mxu0
    %2414 = vmatprep.subr.mxu0 0.0
    %2415 = vmatpush1.msra.mxu0 %v137
    %2416 = vmatprep.subr.mxu0 0.0
    %2417 = vmatpush1.msra.mxu0 %v138
    %2418 = vmatprep.subr.mxu0 0.0
    %2419 = vmatpush1.msra.mxu0 0.0
    %2420 = vmatprep.subr.mxu0 0.0
    %2421 = vmatpush1.msra.mxu0 0.0
    %2422 = vmatprep.subr.mxu0 0.0
    %2423 = vmatpush1.msra.mxu0 0.0
    %2424 = vmatprep.subr.mxu0 0.0
    %2425 = vmatpush1.msra.mxu0 0.0
    %2426 = vmatprep.subr.mxu0 0.0
    %2427 = vmatpush1.msra.mxu0 0.0
    %2428 = vmatprep.subr.mxu0 0.0
    %2429 = vmatpush1.msra.mxu0 0.0
    %2430 = vmatprep.subr.mxu0 0.0
    %2431 = vmatpush1.msra.mxu0 0.0
    %2432 = vmatprep.subr.mxu0 0.0
    %2433 = vmatpush1.msra.mxu0 0.0
    %2434 = vmatprep.subr.mxu0 0.0
    %2435 = vmatpush1.msra.mxu0 0.0
    %2436 = vmatprep.subr.mxu0 0.0
    %2437 = vmatpush1.msra.mxu0 0.0
    %2438 = vmatprep.subr.mxu0 0.0
    %2439 = vmatpush1.msra.mxu0 0.0
    %2440 = vmatprep.subr.mxu0 0.0
    %2441 = vmatpush1.msra.mxu0 0.0
    %2442 = vmatprep.subr.mxu0 0.0
    %2443 = vmatpush1.msra.mxu0 0.0
    %2444 = vmatprep.subr.mxu0 0.0
    %2445 = vmatpush1.msra.mxu0 0.0
    %2446 = vmatprep.subr.mxu0 0.0
    %2447 = vmatpush1.msra.mxu0 0.0
    %2448 = vmatprep.subr.mxu0 0.0
    %2449 = vmatpush1.msra.mxu0 0.0
    %2450 = vmatprep.subr.mxu0 0.0
    %2451 = vmatpush1.msra.mxu0 0.0
    %2452 = vmatprep.subr.mxu0 0.0
    %2453 = vmatpush1.msra.mxu0 0.0
    %2454 = vmatprep.subr.mxu0 0.0
    %2455 = vmatpush1.msra.mxu0 0.0
    %2456 = vmatprep.subr.mxu0 0.0
    %2457 = vmatpush1.msra.mxu0 0.0
    %2458 = vmatprep.subr.mxu0 0.0
    %2459 = vmatpush1.msra.mxu0 0.0
    %2460 = vmatprep.subr.mxu0 0.0
    %2461 = vmatpush1.msra.mxu0 0.0
    %2462 = vmatprep.subr.mxu0 0.0
    %2463 = vmatpush1.msra.mxu0 0.0
    %2464 = vmatprep.subr.mxu0 0.0
    %2465 = vmatpush1.msra.mxu0 0.0
    %2466 = vmatprep.subr.mxu0 0.0
    %2467 = vmatpush1.msra.mxu0 0.0
    %2468 = vmatprep.subr.mxu0 0.0
    %2469 = vmatpush1.msra.mxu0 0.0
    %2470 = vmatprep.subr.mxu0 0.0
    %2471 = vmatpush1.msra.mxu0 0.0
    %2472 = vmatprep.subr.mxu0 0.0
    %2473 = vmatpush1.msra.mxu0 0.0
    %2474 = vmatprep.subr.mxu0 0.0
    %2475 = vmatpush1.msra.mxu0 0.0
    %2476 = vmatprep.subr.mxu0 0.0
    %2477 = vmatpush1.msra.mxu0 0.0
    %2478 = vmatprep.mubr.f32.mxu0 0.0
    %2479 = vmatmul.mubr.f32.gmra.mrb[0].mxu0 %v159
    %v2480 = vpop.f32.mrb[0].mxu0
    %v2481 = vadd.f32 0.0, %v2480
    %v2482 = vpop.f32.mrb[0].mxu0
    %2483 = vmatprep.mubr.f32.mxu0 0.0
    %2484 = vmatmul.mubr.f32.gmra.mrb[0].mxu0 %v162
    %v2485 = vpop.f32.mrb[0].mxu0
    %v2486 = vadd.f32 0.0, %v2485
    %v2487 = vpop.f32.mrb[0].mxu0
    %2488 = vdwg.mxu0
    %2489 = vmatprep.subr.mxu0 0.0
    %2490 = vmatpush1.msra.mxu0 %v139
    %2491 = vmatprep.subr.mxu0 0.0
    %2492 = vmatpush1.msra.mxu0 %v140
    %2493 = vmatprep.subr.mxu0 0.0
    %2494 = vmatpush1.msra.mxu0 0.0
    %2495 = vmatprep.subr.mxu0 0.0
    %2496 = vmatpush1.msra.mxu0 0.0
    %2497 = vmatprep.subr.mxu0 0.0
    %2498 = vmatpush1.msra.mxu0 0.0
    %2499 = vmatprep.subr.mxu0 0.0
    %2500 = vmatpush1.msra.mxu0 0.0
    %2501 = vmatprep.subr.mxu0 0.0
    %2502 = vmatpush1.msra.mxu0 0.0
    %2503 = vmatprep.subr.mxu0 0.0
    %2504 = vmatpush1.msra.mxu0 0.0
    %2505 = vmatprep.subr.mxu0 0.0
    %2506 = vmatpush1.msra.mxu0 0.0
    %2507 = vmatprep.subr.mxu0 0.0
    %2508 = vmatpush1.msra.mxu0 0.0
    %2509 = vmatprep.subr.mxu0 0.0
    %2510 = vmatpush1.msra.mxu0 0.0
    %2511 = vmatprep.subr.mxu0 0.0
    %2512 = vmatpush1.msra.mxu0 0.0
    %2513 = vmatprep.subr.mxu0 0.0
    %2514 = vmatpush1.msra.mxu0 0.0
    %2515 = vmatprep.subr.mxu0 0.0
    %2516 = vmatpush1.msra.mxu0 0.0
    %2517 = vmatprep.subr.mxu0 0.0
    %2518 = vmatpush1.msra.mxu0 0.0
    %2519 = vmatprep.subr.mxu0 0.0
    %2520 = vmatpush1.msra.mxu0 0.0
    %2521 = vmatprep.subr.mxu0 0.0
    %2522 = vmatpush1.msra.mxu0 0.0
    %2523 = vmatprep.subr.mxu0 0.0
    %2524 = vmatpush1.msra.mxu0 0.0
    %2525 = vmatprep.subr.mxu0 0.0
    %2526 = vmatpush1.msra.mxu0 0.0
    %2527 = vmatprep.subr.mxu0 0.0
    %2528 = vmatpush1.msra.mxu0 0.0
    %2529 = vmatprep.subr.mxu0 0.0
    %2530 = vmatpush1.msra.mxu0 0.0
    %2531 = vmatprep.subr.mxu0 0.0
    %2532 = vmatpush1.msra.mxu0 0.0
    %2533 = vmatprep.subr.mxu0 0.0
    %2534 = vmatpush1.msra.mxu0 0.0
    %2535 = vmatprep.subr.mxu0 0.0
    %2536 = vmatpush1.msra.mxu0 0.0
    %2537 = vmatprep.subr.mxu0 0.0
    %2538 = vmatpush1.msra.mxu0 0.0
    %2539 = vmatprep.subr.mxu0 0.0
    %2540 = vmatpush1.msra.mxu0 0.0
    %2541 = vmatprep.subr.mxu0 0.0
    %2542 = vmatpush1.msra.mxu0 0.0
    %2543 = vmatprep.subr.mxu0 0.0
    %2544 = vmatpush1.msra.mxu0 0.0
    %2545 = vmatprep.subr.mxu0 0.0
    %2546 = vmatpush1.msra.mxu0 0.0
    %2547 = vmatprep.subr.mxu0 0.0
    %2548 = vmatpush1.msra.mxu0 0.0
    %2549 = vmatprep.subr.mxu0 0.0
    %2550 = vmatpush1.msra.mxu0 0.0
    %2551 = vmatprep.subr.mxu0 0.0
    %2552 = vmatpush1.msra.mxu0 0.0
    %2553 = vmatprep.mubr.f32.mxu0 0.0
    %2554 = vmatmul.mubr.f32.gmra.mrb[0].mxu0 %v159
    %v2555 = vpop.f32.mrb[0].mxu0
    %v2556 = vadd.f32 0.0, %v2555
    %v2557 = vpop.f32.mrb[0].mxu0
    %2558 = vmatprep.mubr.f32.mxu0 0.0
    %2559 = vmatmul.mubr.f32.gmra.mrb[0].mxu0 %v162
    %v2560 = vpop.f32.mrb[0].mxu0
    %v2561 = vadd.f32 0.0, %v2560
    %v2562 = vpop.f32.mrb[0].mxu0
    %2563 = vdwg.mxu0
    %2564 = vmatprep.subr.mxu0 0.0
    %2565 = vmatpush1.msra.mxu0 %v141
    %2566 = vmatprep.subr.mxu0 0.0
    %2567 = vmatpush1.msra.mxu0 %v142
    %2568 = vmatprep.subr.mxu0 0.0
    %2569 = vmatpush1.msra.mxu0 0.0
    %2570 = vmatprep.subr.mxu0 0.0
    %2571 = vmatpush1.msra.mxu0 0.0
    %2572 = vmatprep.subr.mxu0 0.0
    %2573 = vmatpush1.msra.mxu0 0.0
    %2574 = vmatprep.subr.mxu0 0.0
    %2575 = vmatpush1.msra.mxu0 0.0
    %2576 = vmatprep.subr.mxu0 0.0
    %2577 = vmatpush1.msra.mxu0 0.0
    %2578 = vmatprep.subr.mxu0 0.0
    %2579 = vmatpush1.msra.mxu0 0.0
    %2580 = vmatprep.subr.mxu0 0.0
    %2581 = vmatpush1.msra.mxu0 0.0
    %2582 = vmatprep.subr.mxu0 0.0
    %2583 = vmatpush1.msra.mxu0 0.0
    %2584 = vmatprep.subr.mxu0 0.0
    %2585 = vmatpush1.msra.mxu0 0.0
    %2586 = vmatprep.subr.mxu0 0.0
    %2587 = vmatpush1.msra.mxu0 0.0
    %2588 = vmatprep.subr.mxu0 0.0
    %2589 = vmatpush1.msra.mxu0 0.0
    %2590 = vmatprep.subr.mxu0 0.0
    %2591 = vmatpush1.msra.mxu0 0.0
    %2592 = vmatprep.subr.mxu0 0.0
    %2593 = vmatpush1.msra.mxu0 0.0
    %2594 = vmatprep.subr.mxu0 0.0
    %2595 = vmatpush1.msra.mxu0 0.0
    %2596 = vmatprep.subr.mxu0 0.0
    %2597 = vmatpush1.msra.mxu0 0.0
    %2598 = vmatprep.subr.mxu0 0.0
    %2599 = vmatpush1.msra.mxu0 0.0
    %2600 = vmatprep.subr.mxu0 0.0
    %2601 = vmatpush1.msra.mxu0 0.0
    %2602 = vmatprep.subr.mxu0 0.0
    %2603 = vmatpush1.msra.mxu0 0.0
    %2604 = vmatprep.subr.mxu0 0.0
    %2605 = vmatpush1.msra.mxu0 0.0
    %2606 = vmatprep.subr.mxu0 0.0
    %2607 = vmatpush1.msra.mxu0 0.0
    %2608 = vmatprep.subr.mxu0 0.0
    %2609 = vmatpush1.msra.mxu0 0.0
    %2610 = vmatprep.subr.mxu0 0.0
    %2611 = vmatpush1.msra.mxu0 0.0
    %2612 = vmatprep.subr.mxu0 0.0
    %2613 = vmatpush1.msra.mxu0 0.0
    %2614 = vmatprep.subr.mxu0 0.0
    %2615 = vmatpush1.msra.mxu0 0.0
    %2616 = vmatprep.subr.mxu0 0.0
    %2617 = vmatpush1.msra.mxu0 0.0
    %2618 = vmatprep.subr.mxu0 0.0
    %2619 = vmatpush1.msra.mxu0 0.0
    %2620 = vmatprep.subr.mxu0 0.0
    %2621 = vmatpush1.msra.mxu0 0.0
    %2622 = vmatprep.subr.mxu0 0.0
    %2623 = vmatpush1.msra.mxu0 0.0
    %2624 = vmatprep.subr.mxu0 0.0
    %2625 = vmatpush1.msra.mxu0 0.0
    %2626 = vmatprep.subr.mxu0 0.0
    %2627 = vmatpush1.msra.mxu0 0.0
    %2628 = vmatprep.mubr.f32.mxu0 0.0
    %2629 = vmatmul.mubr.f32.gmra.mrb[0].mxu0 %v159
    %v2630 = vpop.f32.mrb[0].mxu0
    %v2631 = vadd.f32 0.0, %v2630
    %v2632 = vpop.f32.mrb[0].mxu0
    %2633 = vmatprep.mubr.f32.mxu0 0.0
    %2634 = vmatmul.mubr.f32.gmra.mrb[0].mxu0 %v162
    %v2635 = vpop.f32.mrb[0].mxu0
    %v2636 = vadd.f32 0.0, %v2635
    %v2637 = vpop.f32.mrb[0].mxu0
    %2638 = vdwg.mxu0
    %2639 = vmatprep.subr.mxu0 0.0
    %2640 = vmatpush1.msra.mxu0 %v143
    %2641 = vmatprep.subr.mxu0 0.0
    %2642 = vmatpush1.msra.mxu0 %v144
    %2643 = vmatprep.subr.mxu0 0.0
    %2644 = vmatpush1.msra.mxu0 0.0
    %2645 = vmatprep.subr.mxu0 0.0
    %2646 = vmatpush1.msra.mxu0 0.0
    %2647 = vmatprep.subr.mxu0 0.0
    %2648 = vmatpush1.msra.mxu0 0.0
    %2649 = vmatprep.subr.mxu0 0.0
    %2650 = vmatpush1.msra.mxu0 0.0
    %2651 = vmatprep.subr.mxu0 0.0
    %2652 = vmatpush1.msra.mxu0 0.0
    %2653 = vmatprep.subr.mxu0 0.0
    %2654 = vmatpush1.msra.mxu0 0.0
    %2655 = vmatprep.subr.mxu0 0.0
    %2656 = vmatpush1.msra.mxu0 0.0
    %2657 = vmatprep.subr.mxu0 0.0
    %2658 = vmatpush1.msra.mxu0 0.0
    %2659 = vmatprep.subr.mxu0 0.0
    %2660 = vmatpush1.msra.mxu0 0.0
    %2661 = vmatprep.subr.mxu0 0.0
    %2662 = vmatpush1.msra.mxu0 0.0
    %2663 = vmatprep.subr.mxu0 0.0
    %2664 = vmatpush1.msra.mxu0 0.0
    %2665 = vmatprep.subr.mxu0 0.0
    %2666 = vmatpush1.msra.mxu0 0.0
    %2667 = vmatprep.subr.mxu0 0.0
    %2668 = vmatpush1.msra.mxu0 0.0
    %2669 = vmatprep.subr.mxu0 0.0
    %2670 = vmatpush1.msra.mxu0 0.0
    %2671 = vmatprep.subr.mxu0 0.0
    %2672 = vmatpush1.msra.mxu0 0.0
    %2673 = vmatprep.subr.mxu0 0.0
    %2674 = vmatpush1.msra.mxu0 0.0
    %2675 = vmatprep.subr.mxu0 0.0
    %2676 = vmatpush1.msra.mxu0 0.0
    %2677 = vmatprep.subr.mxu0 0.0
    %2678 = vmatpush1.msra.mxu0 0.0
    %2679 = vmatprep.subr.mxu0 0.0
    %2680 = vmatpush1.msra.mxu0 0.0
    %2681 = vmatprep.subr.mxu0 0.0
    %2682 = vmatpush1.msra.mxu0 0.0
    %2683 = vmatprep.subr.mxu0 0.0
    %2684 = vmatpush1.msra.mxu0 0.0
    %2685 = vmatprep.subr.mxu0 0.0
    %2686 = vmatpush1.msra.mxu0 0.0
    %2687 = vmatprep.subr.mxu0 0.0
    %2688 = vmatpush1.msra.mxu0 0.0
    %2689 = vmatprep.subr.mxu0 0.0
    %2690 = vmatpush1.msra.mxu0 0.0
    %2691 = vmatprep.subr.mxu0 0.0
    %2692 = vmatpush1.msra.mxu0 0.0
    %2693 = vmatprep.subr.mxu0 0.0
    %2694 = vmatpush1.msra.mxu0 0.0
    %2695 = vmatprep.subr.mxu0 0.0
    %2696 = vmatpush1.msra.mxu0 0.0
    %2697 = vmatprep.subr.mxu0 0.0
    %2698 = vmatpush1.msra.mxu0 0.0
    %2699 = vmatprep.subr.mxu0 0.0
    %2700 = vmatpush1.msra.mxu0 0.0
    %2701 = vmatprep.subr.mxu0 0.0
    %2702 = vmatpush1.msra.mxu0 0.0
    %2703 = vmatprep.mubr.f32.mxu0 0.0
    %2704 = vmatmul.mubr.f32.gmra.mrb[0].mxu0 %v159
    %v2705 = vpop.f32.mrb[0].mxu0
    %v2706 = vadd.f32 0.0, %v2705
    %v2707 = vpop.f32.mrb[0].mxu0
    %2708 = vmatprep.mubr.f32.mxu0 0.0
    %2709 = vmatmul.mubr.f32.gmra.mrb[0].mxu0 %v162
    %v2710 = vpop.f32.mrb[0].mxu0
    %v2711 = vadd.f32 0.0, %v2710
    %v2712 = vpop.f32.mrb[0].mxu0
    %2713 = vdwg.mxu0
    %2714 = vmatprep.subr.mxu0 0.0
    %2715 = vmatpush1.msra.mxu0 %v145
    %2716 = vmatprep.subr.mxu0 0.0
    %2717 = vmatpush1.msra.mxu0 %v146
    %2718 = vmatprep.subr.mxu0 0.0
    %2719 = vmatpush1.msra.mxu0 0.0
    %2720 = vmatprep.subr.mxu0 0.0
    %2721 = vmatpush1.msra.mxu0 0.0
    %2722 = vmatprep.subr.mxu0 0.0
    %2723 = vmatpush1.msra.mxu0 0.0
    %2724 = vmatprep.subr.mxu0 0.0
    %2725 = vmatpush1.msra.mxu0 0.0
    %2726 = vmatprep.subr.mxu0 0.0
    %2727 = vmatpush1.msra.mxu0 0.0
    %2728 = vmatprep.subr.mxu0 0.0
    %2729 = vmatpush1.msra.mxu0 0.0
    %2730 = vmatprep.subr.mxu0 0.0
    %2731 = vmatpush1.msra.mxu0 0.0
    %2732 = vmatprep.subr.mxu0 0.0
    %2733 = vmatpush1.msra.mxu0 0.0
    %2734 = vmatprep.subr.mxu0 0.0
    %2735 = vmatpush1.msra.mxu0 0.0
    %2736 = vmatprep.subr.mxu0 0.0
    %2737 = vmatpush1.msra.mxu0 0.0
    %2738 = vmatprep.subr.mxu0 0.0
    %2739 = vmatpush1.msra.mxu0 0.0
    %2740 = vmatprep.subr.mxu0 0.0
    %2741 = vmatpush1.msra.mxu0 0.0
    %2742 = vmatprep.subr.mxu0 0.0
    %2743 = vmatpush1.msra.mxu0 0.0
    %2744 = vmatprep.subr.mxu0 0.0
    %2745 = vmatpush1.msra.mxu0 0.0
    %2746 = vmatprep.subr.mxu0 0.0
    %2747 = vmatpush1.msra.mxu0 0.0
    %2748 = vmatprep.subr.mxu0 0.0
    %2749 = vmatpush1.msra.mxu0 0.0
    %2750 = vmatprep.subr.mxu0 0.0
    %2751 = vmatpush1.msra.mxu0 0.0
    %2752 = vmatprep.subr.mxu0 0.0
    %2753 = vmatpush1.msra.mxu0 0.0
    %2754 = vmatprep.subr.mxu0 0.0
    %2755 = vmatpush1.msra.mxu0 0.0
    %2756 = vmatprep.subr.mxu0 0.0
    %2757 = vmatpush1.msra.mxu0 0.0
    %2758 = vmatprep.subr.mxu0 0.0
    %2759 = vmatpush1.msra.mxu0 0.0
    %2760 = vmatprep.subr.mxu0 0.0
    %2761 = vmatpush1.msra.mxu0 0.0
    %2762 = vmatprep.subr.mxu0 0.0
    %2763 = vmatpush1.msra.mxu0 0.0
    %2764 = vmatprep.subr.mxu0 0.0
    %2765 = vmatpush1.msra.mxu0 0.0
    %2766 = vmatprep.subr.mxu0 0.0
    %2767 = vmatpush1.msra.mxu0 0.0
    %2768 = vmatprep.subr.mxu0 0.0
    %2769 = vmatpush1.msra.mxu0 0.0
    %2770 = vmatprep.subr.mxu0 0.0
    %2771 = vmatpush1.msra.mxu0 0.0
    %2772 = vmatprep.subr.mxu0 0.0
    %2773 = vmatpush1.msra.mxu0 0.0
    %2774 = vmatprep.subr.mxu0 0.0
    %2775 = vmatpush1.msra.mxu0 0.0
    %2776 = vmatprep.subr.mxu0 0.0
    %2777 = vmatpush1.msra.mxu0 0.0
    %2778 = vmatprep.mubr.f32.mxu0 0.0
    %2779 = vmatmul.mubr.f32.gmra.mrb[0].mxu0 %v159
    %v2780 = vpop.f32.mrb[0].mxu0
    %v2781 = vadd.f32 0.0, %v2780
    %v2782 = vpop.f32.mrb[0].mxu0
    %2783 = vmatprep.mubr.f32.mxu0 0.0
    %2784 = vmatmul.mubr.f32.gmra.mrb[0].mxu0 %v162
    %v2785 = vpop.f32.mrb[0].mxu0
    %v2786 = vadd.f32 0.0, %v2785
    %v2787 = vpop.f32.mrb[0].mxu0
    %2788 = vdwg.mxu0
    %2789 = vmatprep.subr.mxu0 0.0
    %2790 = vmatpush1.msra.mxu0 %v147
    %2791 = vmatprep.subr.mxu0 0.0
    %2792 = vmatpush1.msra.mxu0 %v148
    %2793 = vmatprep.subr.mxu0 0.0
    %2794 = vmatpush1.msra.mxu0 0.0
    %2795 = vmatprep.subr.mxu0 0.0
    %2796 = vmatpush1.msra.mxu0 0.0
    %2797 = vmatprep.subr.mxu0 0.0
    %2798 = vmatpush1.msra.mxu0 0.0
    %2799 = vmatprep.subr.mxu0 0.0
    %2800 = vmatpush1.msra.mxu0 0.0
    %2801 = vmatprep.subr.mxu0 0.0
    %2802 = vmatpush1.msra.mxu0 0.0
    %2803 = vmatprep.subr.mxu0 0.0
    %2804 = vmatpush1.msra.mxu0 0.0
    %2805 = vmatprep.subr.mxu0 0.0
    %2806 = vmatpush1.msra.mxu0 0.0
    %2807 = vmatprep.subr.mxu0 0.0
    %2808 = vmatpush1.msra.mxu0 0.0
    %2809 = vmatprep.subr.mxu0 0.0
    %2810 = vmatpush1.msra.mxu0 0.0
    %2811 = vmatprep.subr.mxu0 0.0
    %2812 = vmatpush1.msra.mxu0 0.0
    %2813 = vmatprep.subr.mxu0 0.0
    %2814 = vmatpush1.msra.mxu0 0.0
    %2815 = vmatprep.subr.mxu0 0.0
    %2816 = vmatpush1.msra.mxu0 0.0
    %2817 = vmatprep.subr.mxu0 0.0
    %2818 = vmatpush1.msra.mxu0 0.0
    %2819 = vmatprep.subr.mxu0 0.0
    %2820 = vmatpush1.msra.mxu0 0.0
    %2821 = vmatprep.subr.mxu0 0.0
    %2822 = vmatpush1.msra.mxu0 0.0
    %2823 = vmatprep.subr.mxu0 0.0
    %2824 = vmatpush1.msra.mxu0 0.0
    %2825 = vmatprep.subr.mxu0 0.0
    %2826 = vmatpush1.msra.mxu0 0.0
    %2827 = vmatprep.subr.mxu0 0.0
    %2828 = vmatpush1.msra.mxu0 0.0
    %2829 = vmatprep.subr.mxu0 0.0
    %2830 = vmatpush1.msra.mxu0 0.0
    %2831 = vmatprep.subr.mxu0 0.0
    %2832 = vmatpush1.msra.mxu0 0.0
    %2833 = vmatprep.subr.mxu0 0.0
    %2834 = vmatpush1.msra.mxu0 0.0
    %2835 = vmatprep.subr.mxu0 0.0
    %2836 = vmatpush1.msra.mxu0 0.0
    %2837 = vmatprep.subr.mxu0 0.0
    %2838 = vmatpush1.msra.mxu0 0.0
    %2839 = vmatprep.subr.mxu0 0.0
    %2840 = vmatpush1.msra.mxu0 0.0
    %2841 = vmatprep.subr.mxu0 0.0
    %2842 = vmatpush1.msra.mxu0 0.0
    %2843 = vmatprep.subr.mxu0 0.0
    %2844 = vmatpush1.msra.mxu0 0.0
    %2845 = vmatprep.subr.mxu0 0.0
    %2846 = vmatpush1.msra.mxu0 0.0
    %2847 = vmatprep.subr.mxu0 0.0
    %2848 = vmatpush1.msra.mxu0 0.0
    %2849 = vmatprep.subr.mxu0 0.0
    %2850 = vmatpush1.msra.mxu0 0.0
    %2851 = vmatprep.subr.mxu0 0.0
    %2852 = vmatpush1.msra.mxu0 0.0
    %2853 = vmatprep.mubr.f32.mxu0 0.0
    %2854 = vmatmul.mubr.f32.gmra.mrb[0].mxu0 %v159
    %v2855 = vpop.f32.mrb[0].mxu0
    %v2856 = vadd.f32 0.0, %v2855
    %v2857 = vpop.f32.mrb[0].mxu0
    %2858 = vmatprep.mubr.f32.mxu0 0.0
    %2859 = vmatmul.mubr.f32.gmra.mrb[0].mxu0 %v162
    %v2860 = vpop.f32.mrb[0].mxu0
    %v2861 = vadd.f32 0.0, %v2860
    %v2862 = vpop.f32.mrb[0].mxu0
    %2863 = vdwg.mxu0
    %2864 = vmatprep.subr.mxu0 0.0
    %2865 = vmatpush1.msra.mxu0 %v149
    %2866 = vmatprep.subr.mxu0 0.0
    %2867 = vmatpush1.msra.mxu0 %v150
    %2868 = vmatprep.subr.mxu0 0.0
    %2869 = vmatpush1.msra.mxu0 0.0
    %2870 = vmatprep.subr.mxu0 0.0
    %2871 = vmatpush1.msra.mxu0 0.0
    %2872 = vmatprep.subr.mxu0 0.0
    %2873 = vmatpush1.msra.mxu0 0.0
    %2874 = vmatprep.subr.mxu0 0.0
    %2875 = vmatpush1.msra.mxu0 0.0
    %2876 = vmatprep.subr.mxu0 0.0
    %2877 = vmatpush1.msra.mxu0 0.0
    %2878 = vmatprep.subr.mxu0 0.0
    %2879 = vmatpush1.msra.mxu0 0.0
    %2880 = vmatprep.subr.mxu0 0.0
    %2881 = vmatpush1.msra.mxu0 0.0
    %2882 = vmatprep.subr.mxu0 0.0
    %2883 = vmatpush1.msra.mxu0 0.0
    %2884 = vmatprep.subr.mxu0 0.0
    %2885 = vmatpush1.msra.mxu0 0.0
    %2886 = vmatprep.subr.mxu0 0.0
    %2887 = vmatpush1.msra.mxu0 0.0
    %2888 = vmatprep.subr.mxu0 0.0
    %2889 = vmatpush1.msra.mxu0 0.0
    %2890 = vmatprep.subr.mxu0 0.0
    %2891 = vmatpush1.msra.mxu0 0.0
    %2892 = vmatprep.subr.mxu0 0.0
    %2893 = vmatpush1.msra.mxu0 0.0
    %2894 = vmatprep.subr.mxu0 0.0
    %2895 = vmatpush1.msra.mxu0 0.0
    %2896 = vmatprep.subr.mxu0 0.0
    %2897 = vmatpush1.msra.mxu0 0.0
    %2898 = vmatprep.subr.mxu0 0.0
    %2899 = vmatpush1.msra.mxu0 0.0
    %2900 = vmatprep.subr.mxu0 0.0
    %2901 = vmatpush1.msra.mxu0 0.0
    %2902 = vmatprep.subr.mxu0 0.0
    %2903 = vmatpush1.msra.mxu0 0.0
    %2904 = vmatprep.subr.mxu0 0.0
    %2905 = vmatpush1.msra.mxu0 0.0
    %2906 = vmatprep.subr.mxu0 0.0
    %2907 = vmatpush1.msra.mxu0 0.0
    %2908 = vmatprep.subr.mxu0 0.0
    %2909 = vmatpush1.msra.mxu0 0.0
    %2910 = vmatprep.subr.mxu0 0.0
    %2911 = vmatpush1.msra.mxu0 0.0
    %2912 = vmatprep.subr.mxu0 0.0
    %2913 = vmatpush1.msra.mxu0 0.0
    %2914 = vmatprep.subr.mxu0 0.0
    %2915 = vmatpush1.msra.mxu0 0.0
    %2916 = vmatprep.subr.mxu0 0.0
    %2917 = vmatpush1.msra.mxu0 0.0
    %2918 = vmatprep.subr.mxu0 0.0
    %2919 = vmatpush1.msra.mxu0 0.0
    %2920 = vmatprep.subr.mxu0 0.0
    %2921 = vmatpush1.msra.mxu0 0.0
    %2922 = vmatprep.subr.mxu0 0.0
    %2923 = vmatpush1.msra.mxu0 0.0
    %2924 = vmatprep.subr.mxu0 0.0
    %2925 = vmatpush1.msra.mxu0 0.0
    %2926 = vmatprep.subr.mxu0 0.0
    %2927 = vmatpush1.msra.mxu0 0.0
    %2928 = vmatprep.mubr.f32.mxu0 0.0
    %2929 = vmatmul.mubr.f32.gmra.mrb[0].mxu0 %v159
    %v2930 = vpop.f32.mrb[0].mxu0
    %v2931 = vadd.f32 0.0, %v2930
    %v2932 = vpop.f32.mrb[0].mxu0
    %2933 = vmatprep.mubr.f32.mxu0 0.0
    %2934 = vmatmul.mubr.f32.gmra.mrb[0].mxu0 %v162
    %v2935 = vpop.f32.mrb[0].mxu0
    %v2936 = vadd.f32 0.0, %v2935
    %v2937 = vpop.f32.mrb[0].mxu0
    %2938 = vdwg.mxu0
    %2939 = vmatprep.subr.mxu0 0.0
    %2940 = vmatpush1.msra.mxu0 %v151
    %2941 = vmatprep.subr.mxu0 0.0
    %2942 = vmatpush1.msra.mxu0 %v152
    %2943 = vmatprep.subr.mxu0 0.0
    %2944 = vmatpush1.msra.mxu0 0.0
    %2945 = vmatprep.subr.mxu0 0.0
    %2946 = vmatpush1.msra.mxu0 0.0
    %2947 = vmatprep.subr.mxu0 0.0
    %2948 = vmatpush1.msra.mxu0 0.0
    %2949 = vmatprep.subr.mxu0 0.0
    %2950 = vmatpush1.msra.mxu0 0.0
    %2951 = vmatprep.subr.mxu0 0.0
    %2952 = vmatpush1.msra.mxu0 0.0
    %2953 = vmatprep.subr.mxu0 0.0
    %2954 = vmatpush1.msra.mxu0 0.0
    %2955 = vmatprep.subr.mxu0 0.0
    %2956 = vmatpush1.msra.mxu0 0.0
    %2957 = vmatprep.subr.mxu0 0.0
    %2958 = vmatpush1.msra.mxu0 0.0
    %2959 = vmatprep.subr.mxu0 0.0
    %2960 = vmatpush1.msra.mxu0 0.0
    %2961 = vmatprep.subr.mxu0 0.0
    %2962 = vmatpush1.msra.mxu0 0.0
    %2963 = vmatprep.subr.mxu0 0.0
    %2964 = vmatpush1.msra.mxu0 0.0
    %2965 = vmatprep.subr.mxu0 0.0
    %2966 = vmatpush1.msra.mxu0 0.0
    %2967 = vmatprep.subr.mxu0 0.0
    %2968 = vmatpush1.msra.mxu0 0.0
    %2969 = vmatprep.subr.mxu0 0.0
    %2970 = vmatpush1.msra.mxu0 0.0
    %2971 = vmatprep.subr.mxu0 0.0
    %2972 = vmatpush1.msra.mxu0 0.0
    %2973 = vmatprep.subr.mxu0 0.0
    %2974 = vmatpush1.msra.mxu0 0.0
    %2975 = vmatprep.subr.mxu0 0.0
    %2976 = vmatpush1.msra.mxu0 0.0
    %2977 = vmatprep.subr.mxu0 0.0
    %2978 = vmatpush1.msra.mxu0 0.0
    %2979 = vmatprep.subr.mxu0 0.0
    %2980 = vmatpush1.msra.mxu0 0.0
    %2981 = vmatprep.subr.mxu0 0.0
    %2982 = vmatpush1.msra.mxu0 0.0
    %2983 = vmatprep.subr.mxu0 0.0
    %2984 = vmatpush1.msra.mxu0 0.0
    %2985 = vmatprep.subr.mxu0 0.0
    %2986 = vmatpush1.msra.mxu0 0.0
    %2987 = vmatprep.subr.mxu0 0.0
    %2988 = vmatpush1.msra.mxu0 0.0
    %2989 = vmatprep.subr.mxu0 0.0
    %2990 = vmatpush1.msra.mxu0 0.0
    %2991 = vmatprep.subr.mxu0 0.0
    %2992 = vmatpush1.msra.mxu0 0.0
    %2993 = vmatprep.subr.mxu0 0.0
    %2994 = vmatpush1.msra.mxu0 0.0
    %2995 = vmatprep.subr.mxu0 0.0
    %2996 = vmatpush1.msra.mxu0 0.0
    %2997 = vmatprep.subr.mxu0 0.0
    %2998 = vmatpush1.msra.mxu0 0.0
    %2999 = vmatprep.subr.mxu0 0.0
    %3000 = vmatpush1.msra.mxu0 0.0
    %3001 = vmatprep.subr.mxu0 0.0
    %3002 = vmatpush1.msra.mxu0 0.0
    %3003 = vmatprep.mubr.f32.mxu0 0.0
    %3004 = vmatmul.mubr.f32.gmra.mrb[0].mxu0 %v159
    %v3005 = vpop.f32.mrb[0].mxu0
    %v3006 = vadd.f32 0.0, %v3005
    %v3007 = vpop.f32.mrb[0].mxu0
    %3008 = vmatprep.mubr.f32.mxu0 0.0
    %3009 = vmatmul.mubr.f32.gmra.mrb[0].mxu0 %v162
    %v3010 = vpop.f32.mrb[0].mxu0
    %v3011 = vadd.f32 0.0, %v3010
    %v3012 = vpop.f32.mrb[0].mxu0
    %3013 = vdwg.mxu0
    %3014 = vmatprep.subr.mxu0 0.0
    %3015 = vmatpush1.msra.mxu0 %v153
    %3016 = vmatprep.subr.mxu0 0.0
    %3017 = vmatpush1.msra.mxu0 %v154
    %3018 = vmatprep.subr.mxu0 0.0
    %3019 = vmatpush1.msra.mxu0 0.0
    %3020 = vmatprep.subr.mxu0 0.0
    %3021 = vmatpush1.msra.mxu0 0.0
    %3022 = vmatprep.subr.mxu0 0.0
    %3023 = vmatpush1.msra.mxu0 0.0
    %3024 = vmatprep.subr.mxu0 0.0
    %3025 = vmatpush1.msra.mxu0 0.0
    %3026 = vmatprep.subr.mxu0 0.0
    %3027 = vmatpush1.msra.mxu0 0.0
    %3028 = vmatprep.subr.mxu0 0.0
    %3029 = vmatpush1.msra.mxu0 0.0
    %3030 = vmatprep.subr.mxu0 0.0
    %3031 = vmatpush1.msra.mxu0 0.0
    %3032 = vmatprep.subr.mxu0 0.0
    %3033 = vmatpush1.msra.mxu0 0.0
    %3034 = vmatprep.subr.mxu0 0.0
    %3035 = vmatpush1.msra.mxu0 0.0
    %3036 = vmatprep.subr.mxu0 0.0
    %3037 = vmatpush1.msra.mxu0 0.0
    %3038 = vmatprep.subr.mxu0 0.0
    %3039 = vmatpush1.msra.mxu0 0.0
    %3040 = vmatprep.subr.mxu0 0.0
    %3041 = vmatpush1.msra.mxu0 0.0
    %3042 = vmatprep.subr.mxu0 0.0
    %3043 = vmatpush1.msra.mxu0 0.0
    %3044 = vmatprep.subr.mxu0 0.0
    %3045 = vmatpush1.msra.mxu0 0.0
    %3046 = vmatprep.subr.mxu0 0.0
    %3047 = vmatpush1.msra.mxu0 0.0
    %3048 = vmatprep.subr.mxu0 0.0
    %3049 = vmatpush1.msra.mxu0 0.0
    %3050 = vmatprep.subr.mxu0 0.0
    %3051 = vmatpush1.msra.mxu0 0.0
    %3052 = vmatprep.subr.mxu0 0.0
    %3053 = vmatpush1.msra.mxu0 0.0
    %3054 = vmatprep.subr.mxu0 0.0
    %3055 = vmatpush1.msra.mxu0 0.0
    %3056 = vmatprep.subr.mxu0 0.0
    %3057 = vmatpush1.msra.mxu0 0.0
    %3058 = vmatprep.subr.mxu0 0.0
    %3059 = vmatpush1.msra.mxu0 0.0
    %3060 = vmatprep.subr.mxu0 0.0
    %3061 = vmatpush1.msra.mxu0 0.0
    %3062 = vmatprep.subr.mxu0 0.0
    %3063 = vmatpush1.msra.mxu0 0.0
    %3064 = vmatprep.subr.mxu0 0.0
    %3065 = vmatpush1.msra.mxu0 0.0
    %3066 = vmatprep.subr.mxu0 0.0
    %3067 = vmatpush1.msra.mxu0 0.0
    %3068 = vmatprep.subr.mxu0 0.0
    %3069 = vmatpush1.msra.mxu0 0.0
    %3070 = vmatprep.subr.mxu0 0.0
    %3071 = vmatpush1.msra.mxu0 0.0
    %3072 = vmatprep.subr.mxu0 0.0
    %3073 = vmatpush1.msra.mxu0 0.0
    %3074 = vmatprep.subr.mxu0 0.0
    %3075 = vmatpush1.msra.mxu0 0.0
    %3076 = vmatprep.subr.mxu0 0.0
    %3077 = vmatpush1.msra.mxu0 0.0
    %3078 = vmatprep.mubr.f32.mxu0 0.0
    %3079 = vmatmul.mubr.f32.gmra.mrb[0].mxu0 %v159
    %v3080 = vpop.f32.mrb[0].mxu0
    %v3081 = vadd.f32 0.0, %v3080
    %v3082 = vpop.f32.mrb[0].mxu0
    %3083 = vmatprep.mubr.f32.mxu0 0.0
    %3084 = vmatmul.mubr.f32.gmra.mrb[0].mxu0 %v162
    %v3085 = vpop.f32.mrb[0].mxu0
    %v3086 = vadd.f32 0.0, %v3085
    %v3087 = vpop.f32.mrb[0].mxu0
    %3088 = vdwg.mxu0
    %3089 = vmatprep.subr.mxu0 0.0
    %3090 = vmatpush1.msra.mxu0 %v155
    %3091 = vmatprep.subr.mxu0 0.0
    %3092 = vmatpush1.msra.mxu0 %v156
    %3093 = vmatprep.subr.mxu0 0.0
    %3094 = vmatpush1.msra.mxu0 0.0
    %3095 = vmatprep.subr.mxu0 0.0
    %3096 = vmatpush1.msra.mxu0 0.0
    %3097 = vmatprep.subr.mxu0 0.0
    %3098 = vmatpush1.msra.mxu0 0.0
    %3099 = vmatprep.subr.mxu0 0.0
    %3100 = vmatpush1.msra.mxu0 0.0
    %3101 = vmatprep.subr.mxu0 0.0
    %3102 = vmatpush1.msra.mxu0 0.0
    %3103 = vmatprep.subr.mxu0 0.0
    %3104 = vmatpush1.msra.mxu0 0.0
    %3105 = vmatprep.subr.mxu0 0.0
    %3106 = vmatpush1.msra.mxu0 0.0
    %3107 = vmatprep.subr.mxu0 0.0
    %3108 = vmatpush1.msra.mxu0 0.0
    %3109 = vmatprep.subr.mxu0 0.0
    %3110 = vmatpush1.msra.mxu0 0.0
    %3111 = vmatprep.subr.mxu0 0.0
    %3112 = vmatpush1.msra.mxu0 0.0
    %3113 = vmatprep.subr.mxu0 0.0
    %3114 = vmatpush1.msra.mxu0 0.0
    %3115 = vmatprep.subr.mxu0 0.0
    %3116 = vmatpush1.msra.mxu0 0.0
    %3117 = vmatprep.subr.mxu0 0.0
    %3118 = vmatpush1.msra.mxu0 0.0
    %3119 = vmatprep.subr.mxu0 0.0
    %3120 = vmatpush1.msra.mxu0 0.0
    %3121 = vmatprep.subr.mxu0 0.0
    %3122 = vmatpush1.msra.mxu0 0.0
    %3123 = vmatprep.subr.mxu0 0.0
    %3124 = vmatpush1.msra.mxu0 0.0
    %3125 = vmatprep.subr.mxu0 0.0
    %3126 = vmatpush1.msra.mxu0 0.0
    %3127 = vmatprep.subr.mxu0 0.0
    %3128 = vmatpush1.msra.mxu0 0.0
    %3129 = vmatprep.subr.mxu0 0.0
    %3130 = vmatpush1.msra.mxu0 0.0
    %3131 = vmatprep.subr.mxu0 0.0
    %3132 = vmatpush1.msra.mxu0 0.0
    %3133 = vmatprep.subr.mxu0 0.0
    %3134 = vmatpush1.msra.mxu0 0.0
    %3135 = vmatprep.subr.mxu0 0.0
    %3136 = vmatpush1.msra.mxu0 0.0
    %3137 = vmatprep.subr.mxu0 0.0
    %3138 = vmatpush1.msra.mxu0 0.0
    %3139 = vmatprep.subr.mxu0 0.0
    %3140 = vmatpush1.msra.mxu0 0.0
    %3141 = vmatprep.subr.mxu0 0.0
    %3142 = vmatpush1.msra.mxu0 0.0
    %3143 = vmatprep.subr.mxu0 0.0
    %3144 = vmatpush1.msra.mxu0 0.0
    %3145 = vmatprep.subr.mxu0 0.0
    %3146 = vmatpush1.msra.mxu0 0.0
    %3147 = vmatprep.subr.mxu0 0.0
    %3148 = vmatpush1.msra.mxu0 0.0
    %3149 = vmatprep.subr.mxu0 0.0
    %3150 = vmatpush1.msra.mxu0 0.0
    %3151 = vmatprep.subr.mxu0 0.0
    %3152 = vmatpush1.msra.mxu0 0.0
    %3153 = vmatprep.mubr.f32.mxu0 0.0
    %3154 = vmatmul.mubr.f32.gmra.mrb[0].mxu0 %v159
    %v3155 = vpop.f32.mrb[0].mxu0
    %v3156 = vadd.f32 0.0, %v3155
    %v3157 = vpop.f32.mrb[0].mxu0
    %3158 = vmatprep.mubr.f32.mxu0 0.0
    %3159 = vmatmul.mubr.f32.gmra.mrb[0].mxu0 %v162
    %v3160 = vpop.f32.mrb[0].mxu0
    %v3161 = vadd.f32 0.0, %v3160
    %v3162 = vpop.f32.mrb[0].mxu0
    %3163 = vdwg.mxu0
    %v3165 = vsel %vm157, %v231, 0
    %v3168 = vsel %vm157, %v236, 0
    %v3171 = vsel %vm157, %v306, 0
    %v3174 = vsel %vm157, %v311, 0
    %v3177 = vsel %vm157, %v381, 0
    %v3180 = vsel %vm157, %v386, 0
    %v3183 = vsel %vm157, %v456, 0
    %v3186 = vsel %vm157, %v461, 0
    %v3189 = vsel %vm157, %v531, 0
    %v3192 = vsel %vm157, %v536, 0
    %v3195 = vsel %vm157, %v606, 0
    %v3198 = vsel %vm157, %v611, 0
    %v3201 = vsel %vm157, %v681, 0
    %v3204 = vsel %vm157, %v686, 0
    %v3207 = vsel %vm157, %v756, 0
    %v3210 = vsel %vm157, %v761, 0
    %v3213 = vsel %vm157, %v831, 0
    %v3216 = vsel %vm157, %v836, 0
    %v3219 = vsel %vm157, %v906, 0
    %v3222 = vsel %vm157, %v911, 0
    %v3225 = vsel %vm157, %v981, 0
    %v3228 = vsel %vm157, %v986, 0
    %v3231 = vsel %vm157, %v1056, 0
    %v3234 = vsel %vm157, %v1061, 0
    %v3237 = vsel %vm157, %v1131, 0
    %v3240 = vsel %vm157, %v1136, 0
    %v3243 = vsel %vm157, %v1206, 0
    %v3246 = vsel %vm157, %v1211, 0
    %v3249 = vsel %vm157, %v1281, 0
    %v3252 = vsel %vm157, %v1286, 0
    %v3255 = vsel %vm157, %v1356, 0
    %v3258 = vsel %vm157, %v1361, 0
    %v3261 = vsel %vm157, %v1431, 0
    %v3264 = vsel %vm157, %v1436, 0
    %v3267 = vsel %vm157, %v1506, 0
    %v3270 = vsel %vm157, %v1511, 0
    %v3273 = vsel %vm157, %v1581, 0
    %v3276 = vsel %vm157, %v1586, 0
    %v3279 = vsel %vm157, %v1656, 0
    %v3282 = vsel %vm157, %v1661, 0
    %v3285 = vsel %vm157, %v1731, 0
    %v3288 = vsel %vm157, %v1736, 0
    %v3291 = vsel %vm157, %v1806, 0
    %v3294 = vsel %vm157, %v1811, 0
    %v3297 = vsel %vm157, %v1881, 0
    %v3300 = vsel %vm157, %v1886, 0
    %v3303 = vsel %vm157, %v1956, 0
    %v3306 = vsel %vm157, %v1961, 0
    %v3309 = vsel %vm157, %v2031, 0
    %v3312 = vsel %vm157, %v2036, 0
    %v3315 = vsel %vm157, %v2106, 0
    %v3318 = vsel %vm157, %v2111, 0
    %v3321 = vsel %vm157, %v2181, 0
    %v3324 = vsel %vm157, %v2186, 0
    %v3327 = vsel %vm157, %v2256, 0
    %v3330 = vsel %vm157, %v2261, 0
    %v3333 = vsel %vm157, %v2331, 0
    %v3336 = vsel %vm157, %v2336, 0
    %v3339 = vsel %vm157, %v2406, 0
    %v3342 = vsel %vm157, %v2411, 0
    %v3345 = vsel %vm157, %v2481, 0
    %v3348 = vsel %vm157, %v2486, 0
    %v3351 = vsel %vm157, %v2556, 0
    %v3354 = vsel %vm157, %v2561, 0
    %v3357 = vsel %vm157, %v2631, 0
    %v3360 = vsel %vm157, %v2636, 0
    %v3363 = vsel %vm157, %v2706, 0
    %v3366 = vsel %vm157, %v2711, 0
    %v3369 = vsel %vm157, %v2781, 0
    %v3372 = vsel %vm157, %v2786, 0
    %v3375 = vsel %vm157, %v2856, 0
    %v3378 = vsel %vm157, %v2861, 0
    %v3381 = vsel %vm157, %v2931, 0
    %v3384 = vsel %vm157, %v2936, 0
    %v3387 = vsel %vm157, %v3006, 0
    %v3390 = vsel %vm157, %v3011, 0
    %v3393 = vsel %vm157, %v3081, 0
    %v3396 = vsel %vm157, %v3086, 0
    %v3399 = vsel %vm157, %v3156, 0
    %v3402 = vsel %vm157, %v3161, 0
    %3404 = vmatprep.subr.mxu0 0.0
    %3405 = vmatpush1.msra.mxu0 %v107
    %3406 = vmatprep.subr.mxu0 0.0
    %3407 = vmatpush1.msra.mxu0 %v108
    %3408 = vmatprep.subr.mxu0 0.0
    %3409 = vmatpush1.msra.mxu0 0.0
    %3410 = vmatprep.subr.mxu0 0.0
    %3411 = vmatpush1.msra.mxu0 0.0
    %3412 = vmatprep.subr.mxu0 0.0
    %3413 = vmatpush1.msra.mxu0 0.0
    %3414 = vmatprep.subr.mxu0 0.0
    %3415 = vmatpush1.msra.mxu0 0.0
    %3416 = vmatprep.subr.mxu0 0.0
    %3417 = vmatpush1.msra.mxu0 0.0
    %3418 = vmatprep.subr.mxu0 0.0
    %3419 = vmatpush1.msra.mxu0 0.0
    %3420 = vmatprep.subr.mxu0 0.0
    %3421 = vmatpush1.msra.mxu0 0.0
    %3422 = vmatprep.subr.mxu0 0.0
    %3423 = vmatpush1.msra.mxu0 0.0
    %3424 = vmatprep.subr.mxu0 0.0
    %3425 = vmatpush1.msra.mxu0 0.0
    %3426 = vmatprep.subr.mxu0 0.0
    %3427 = vmatpush1.msra.mxu0 0.0
    %3428 = vmatprep.subr.mxu0 0.0
    %3429 = vmatpush1.msra.mxu0 0.0
    %3430 = vmatprep.subr.mxu0 0.0
    %3431 = vmatpush1.msra.mxu0 0.0
    %3432 = vmatprep.subr.mxu0 0.0
    %3433 = vmatpush1.msra.mxu0 0.0
    %3434 = vmatprep.subr.mxu0 0.0
    %3435 = vmatpush1.msra.mxu0 0.0
    %3436 = vmatprep.subr.mxu0 0.0
    %3437 = vmatpush1.msra.mxu0 0.0
    %3438 = vmatprep.subr.mxu0 0.0
    %3439 = vmatpush1.msra.mxu0 0.0
    %3440 = vmatprep.subr.mxu0 0.0
    %3441 = vmatpush1.msra.mxu0 0.0
    %3442 = vmatprep.subr.mxu0 0.0
    %3443 = vmatpush1.msra.mxu0 0.0
    %3444 = vmatprep.subr.mxu0 0.0
    %3445 = vmatpush1.msra.mxu0 0.0
    %3446 = vmatprep.subr.mxu0 0.0
    %3447 = vmatpush1.msra.mxu0 0.0
    %3448 = vmatprep.subr.mxu0 0.0
    %3449 = vmatpush1.msra.mxu0 0.0
    %3450 = vmatprep.subr.mxu0 0.0
    %3451 = vmatpush1.msra.mxu0 0.0
    %3452 = vmatprep.subr.mxu0 0.0
    %3453 = vmatpush1.msra.mxu0 0.0
    %3454 = vmatprep.subr.mxu0 0.0
    %3455 = vmatpush1.msra.mxu0 0.0
    %3456 = vmatprep.subr.mxu0 0.0
    %3457 = vmatpush1.msra.mxu0 0.0
    %3458 = vmatprep.subr.mxu0 0.0
    %3459 = vmatpush1.msra.mxu0 0.0
    %3460 = vmatprep.subr.mxu0 0.0
    %3461 = vmatpush1.msra.mxu0 0.0
    %3462 = vmatprep.subr.mxu0 0.0
    %3463 = vmatpush1.msra.mxu0 0.0
    %3464 = vmatprep.subr.mxu0 0.0
    %3465 = vmatpush1.msra.mxu0 0.0
    %3466 = vmatprep.subr.mxu0 0.0
    %3467 = vmatpush1.msra.mxu0 0.0
    %3468 = vmatprep.mubr.f32.mxu0 0.0
    %3469 = vmatmul.mubr.f32.gmra.mrb[0].mxu0 %v3165
    %v3470 = vpop.f32.mrb[0].mxu0
    %v3471 = vadd.f32 0.0, %v3470
    %v3472 = vpop.f32.mrb[0].mxu0
    %3473 = vmatprep.mubr.f32.mxu0 0.0
    %3474 = vmatmul.mubr.f32.gmra.mrb[0].mxu0 %v3168
    %v3475 = vpop.f32.mrb[0].mxu0
    %v3476 = vadd.f32 0.0, %v3475
    %v3477 = vpop.f32.mrb[0].mxu0
    %3478 = vmatprep.mubr.f32.mxu0 0.0
    %3479 = vmatmul.mubr.f32.gmra.mrb[0].mxu0 %v3171
    %v3480 = vpop.f32.mrb[0].mxu0
    %v3481 = vadd.f32 0.0, %v3480
    %v3482 = vpop.f32.mrb[0].mxu0
    %3483 = vmatprep.mubr.f32.mxu0 0.0
    %3484 = vmatmul.mubr.f32.gmra.mrb[0].mxu0 %v3174
    %v3485 = vpop.f32.mrb[0].mxu0
    %v3486 = vadd.f32 0.0, %v3485
    %v3487 = vpop.f32.mrb[0].mxu0
    %3488 = vmatprep.mubr.f32.mxu0 0.0
    %3489 = vmatmul.mubr.f32.gmra.mrb[0].mxu0 %v3177
    %v3490 = vpop.f32.mrb[0].mxu0
    %v3491 = vadd.f32 0.0, %v3490
    %v3492 = vpop.f32.mrb[0].mxu0
    %3493 = vmatprep.mubr.f32.mxu0 0.0
    %3494 = vmatmul.mubr.f32.gmra.mrb[0].mxu0 %v3180
    %v3495 = vpop.f32.mrb[0].mxu0
    %v3496 = vadd.f32 0.0, %v3495
    %v3497 = vpop.f32.mrb[0].mxu0
    %3498 = vmatprep.mubr.f32.mxu0 0.0
    %3499 = vmatmul.mubr.f32.gmra.mrb[0].mxu0 %v3183
    %v3500 = vpop.f32.mrb[0].mxu0
    %v3501 = vadd.f32 0.0, %v3500
    %v3502 = vpop.f32.mrb[0].mxu0
    %3503 = vmatprep.mubr.f32.mxu0 0.0
    %3504 = vmatmul.mubr.f32.gmra.mrb[0].mxu0 %v3186
    %v3505 = vpop.f32.mrb[0].mxu0
    %v3506 = vadd.f32 0.0, %v3505
    %v3507 = vpop.f32.mrb[0].mxu0
    %3508 = vmatprep.mubr.f32.mxu0 0.0
    %3509 = vmatmul.mubr.f32.gmra.mrb[0].mxu0 %v3189
    %v3510 = vpop.f32.mrb[0].mxu0
    %v3511 = vadd.f32 0.0, %v3510
    %v3512 = vpop.f32.mrb[0].mxu0
    %3513 = vmatprep.mubr.f32.mxu0 0.0
    %3514 = vmatmul.mubr.f32.gmra.mrb[0].mxu0 %v3192
    %v3515 = vpop.f32.mrb[0].mxu0
    %v3516 = vadd.f32 0.0, %v3515
    %v3517 = vpop.f32.mrb[0].mxu0
    %3518 = vmatprep.mubr.f32.mxu0 0.0
    %3519 = vmatmul.mubr.f32.gmra.mrb[0].mxu0 %v3195
    %v3520 = vpop.f32.mrb[0].mxu0
    %v3521 = vadd.f32 0.0, %v3520
    %v3522 = vpop.f32.mrb[0].mxu0
    %3523 = vmatprep.mubr.f32.mxu0 0.0
    %3524 = vmatmul.mubr.f32.gmra.mrb[0].mxu0 %v3198
    %v3525 = vpop.f32.mrb[0].mxu0
    %v3526 = vadd.f32 0.0, %v3525
    %v3527 = vpop.f32.mrb[0].mxu0
    %3528 = vmatprep.mubr.f32.mxu0 0.0
    %3529 = vmatmul.mubr.f32.gmra.mrb[0].mxu0 %v3201
    %v3530 = vpop.f32.mrb[0].mxu0
    %v3531 = vadd.f32 0.0, %v3530
    %v3532 = vpop.f32.mrb[0].mxu0
    %3533 = vmatprep.mubr.f32.mxu0 0.0
    %3534 = vmatmul.mubr.f32.gmra.mrb[0].mxu0 %v3204
    %v3535 = vpop.f32.mrb[0].mxu0
    %v3536 = vadd.f32 0.0, %v3535
    %v3537 = vpop.f32.mrb[0].mxu0
    %3538 = vmatprep.mubr.f32.mxu0 0.0
    %3539 = vmatmul.mubr.f32.gmra.mrb[0].mxu0 %v3207
    %v3540 = vpop.f32.mrb[0].mxu0
    %v3541 = vadd.f32 0.0, %v3540
    %v3542 = vpop.f32.mrb[0].mxu0
    %3543 = vmatprep.mubr.f32.mxu0 0.0
    %3544 = vmatmul.mubr.f32.gmra.mrb[0].mxu0 %v3210
    %v3545 = vpop.f32.mrb[0].mxu0
    %v3546 = vadd.f32 0.0, %v3545
    %v3547 = vpop.f32.mrb[0].mxu0
    %3548 = vmatprep.mubr.f32.mxu0 0.0
    %3549 = vmatmul.mubr.f32.gmra.mrb[0].mxu0 %v3213
    %v3550 = vpop.f32.mrb[0].mxu0
    %v3551 = vadd.f32 0.0, %v3550
    %v3552 = vpop.f32.mrb[0].mxu0
    %3553 = vmatprep.mubr.f32.mxu0 0.0
    %3554 = vmatmul.mubr.f32.gmra.mrb[0].mxu0 %v3216
    %v3555 = vpop.f32.mrb[0].mxu0
    %v3556 = vadd.f32 0.0, %v3555
    %v3557 = vpop.f32.mrb[0].mxu0
    %3558 = vmatprep.mubr.f32.mxu0 0.0
    %3559 = vmatmul.mubr.f32.gmra.mrb[0].mxu0 %v3219
    %v3560 = vpop.f32.mrb[0].mxu0
    %v3561 = vadd.f32 0.0, %v3560
    %v3562 = vpop.f32.mrb[0].mxu0
    %3563 = vmatprep.mubr.f32.mxu0 0.0
    %3564 = vmatmul.mubr.f32.gmra.mrb[0].mxu0 %v3222
    %v3565 = vpop.f32.mrb[0].mxu0
    %v3566 = vadd.f32 0.0, %v3565
    %v3567 = vpop.f32.mrb[0].mxu0
    %3568 = vmatprep.mubr.f32.mxu0 0.0
    %3569 = vmatmul.mubr.f32.gmra.mrb[0].mxu0 %v3225
    %v3570 = vpop.f32.mrb[0].mxu0
    %v3571 = vadd.f32 0.0, %v3570
    %v3572 = vpop.f32.mrb[0].mxu0
    %3573 = vmatprep.mubr.f32.mxu0 0.0
    %3574 = vmatmul.mubr.f32.gmra.mrb[0].mxu0 %v3228
    %v3575 = vpop.f32.mrb[0].mxu0
    %v3576 = vadd.f32 0.0, %v3575
    %v3577 = vpop.f32.mrb[0].mxu0
    %3578 = vmatprep.mubr.f32.mxu0 0.0
    %3579 = vmatmul.mubr.f32.gmra.mrb[0].mxu0 %v3231
    %v3580 = vpop.f32.mrb[0].mxu0
    %v3581 = vadd.f32 0.0, %v3580
    %v3582 = vpop.f32.mrb[0].mxu0
    %3583 = vmatprep.mubr.f32.mxu0 0.0
    %3584 = vmatmul.mubr.f32.gmra.mrb[0].mxu0 %v3234
    %v3585 = vpop.f32.mrb[0].mxu0
    %v3586 = vadd.f32 0.0, %v3585
    %v3587 = vpop.f32.mrb[0].mxu0
    %3588 = vmatprep.mubr.f32.mxu0 0.0
    %3589 = vmatmul.mubr.f32.gmra.mrb[0].mxu0 %v3237
    %v3590 = vpop.f32.mrb[0].mxu0
    %v3591 = vadd.f32 0.0, %v3590
    %v3592 = vpop.f32.mrb[0].mxu0
    %3593 = vmatprep.mubr.f32.mxu0 0.0
    %3594 = vmatmul.mubr.f32.gmra.mrb[0].mxu0 %v3240
    %v3595 = vpop.f32.mrb[0].mxu0
    %v3596 = vadd.f32 0.0, %v3595
    %v3597 = vpop.f32.mrb[0].mxu0
    %3598 = vmatprep.mubr.f32.mxu0 0.0
    %3599 = vmatmul.mubr.f32.gmra.mrb[0].mxu0 %v3243
    %v3600 = vpop.f32.mrb[0].mxu0
    %v3601 = vadd.f32 0.0, %v3600
    %v3602 = vpop.f32.mrb[0].mxu0
    %3603 = vmatprep.mubr.f32.mxu0 0.0
    %3604 = vmatmul.mubr.f32.gmra.mrb[0].mxu0 %v3246
    %v3605 = vpop.f32.mrb[0].mxu0
    %v3606 = vadd.f32 0.0, %v3605
    %v3607 = vpop.f32.mrb[0].mxu0
    %3608 = vmatprep.mubr.f32.mxu0 0.0
    %3609 = vmatmul.mubr.f32.gmra.mrb[0].mxu0 %v3249
    %v3610 = vpop.f32.mrb[0].mxu0
    %v3611 = vadd.f32 0.0, %v3610
    %v3612 = vpop.f32.mrb[0].mxu0
    %3613 = vmatprep.mubr.f32.mxu0 0.0
    %3614 = vmatmul.mubr.f32.gmra.mrb[0].mxu0 %v3252
    %v3615 = vpop.f32.mrb[0].mxu0
    %v3616 = vadd.f32 0.0, %v3615
    %v3617 = vpop.f32.mrb[0].mxu0
    %3618 = vmatprep.mubr.f32.mxu0 0.0
    %3619 = vmatmul.mubr.f32.gmra.mrb[0].mxu0 %v3255
    %v3620 = vpop.f32.mrb[0].mxu0
    %v3621 = vadd.f32 0.0, %v3620
    %v3622 = vpop.f32.mrb[0].mxu0
    %3623 = vmatprep.mubr.f32.mxu0 0.0
    %3624 = vmatmul.mubr.f32.gmra.mrb[0].mxu0 %v3258
    %v3625 = vpop.f32.mrb[0].mxu0
    %v3626 = vadd.f32 0.0, %v3625
    %v3627 = vpop.f32.mrb[0].mxu0
    %3628 = vmatprep.mubr.f32.mxu0 0.0
    %3629 = vmatmul.mubr.f32.gmra.mrb[0].mxu0 %v3261
    %v3630 = vpop.f32.mrb[0].mxu0
    %v3631 = vadd.f32 0.0, %v3630
    %v3632 = vpop.f32.mrb[0].mxu0
    %3633 = vmatprep.mubr.f32.mxu0 0.0
    %3634 = vmatmul.mubr.f32.gmra.mrb[0].mxu0 %v3264
    %v3635 = vpop.f32.mrb[0].mxu0
    %v3636 = vadd.f32 0.0, %v3635
    %v3637 = vpop.f32.mrb[0].mxu0
    %3638 = vmatprep.mubr.f32.mxu0 0.0
    %3639 = vmatmul.mubr.f32.gmra.mrb[0].mxu0 %v3267
    %v3640 = vpop.f32.mrb[0].mxu0
    %v3641 = vadd.f32 0.0, %v3640
    %v3642 = vpop.f32.mrb[0].mxu0
    %3643 = vmatprep.mubr.f32.mxu0 0.0
    %3644 = vmatmul.mubr.f32.gmra.mrb[0].mxu0 %v3270
    %v3645 = vpop.f32.mrb[0].mxu0
    %v3646 = vadd.f32 0.0, %v3645
    %v3647 = vpop.f32.mrb[0].mxu0
    %3648 = vmatprep.mubr.f32.mxu0 0.0
    %3649 = vmatmul.mubr.f32.gmra.mrb[0].mxu0 %v3273
    %v3650 = vpop.f32.mrb[0].mxu0
    %v3651 = vadd.f32 0.0, %v3650
    %v3652 = vpop.f32.mrb[0].mxu0
    %3653 = vmatprep.mubr.f32.mxu0 0.0
    %3654 = vmatmul.mubr.f32.gmra.mrb[0].mxu0 %v3276
    %v3655 = vpop.f32.mrb[0].mxu0
    %v3656 = vadd.f32 0.0, %v3655
    %v3657 = vpop.f32.mrb[0].mxu0
    %3658 = vmatprep.mubr.f32.mxu0 0.0
    %3659 = vmatmul.mubr.f32.gmra.mrb[0].mxu0 %v3279
    %v3660 = vpop.f32.mrb[0].mxu0
    %v3661 = vadd.f32 0.0, %v3660
    %v3662 = vpop.f32.mrb[0].mxu0
    %3663 = vmatprep.mubr.f32.mxu0 0.0
    %3664 = vmatmul.mubr.f32.gmra.mrb[0].mxu0 %v3282
    %v3665 = vpop.f32.mrb[0].mxu0
    %v3666 = vadd.f32 0.0, %v3665
    %v3667 = vpop.f32.mrb[0].mxu0
    %3668 = vmatprep.mubr.f32.mxu0 0.0
    %3669 = vmatmul.mubr.f32.gmra.mrb[0].mxu0 %v3285
    %v3670 = vpop.f32.mrb[0].mxu0
    %v3671 = vadd.f32 0.0, %v3670
    %v3672 = vpop.f32.mrb[0].mxu0
    %3673 = vmatprep.mubr.f32.mxu0 0.0
    %3674 = vmatmul.mubr.f32.gmra.mrb[0].mxu0 %v3288
    %v3675 = vpop.f32.mrb[0].mxu0
    %v3676 = vadd.f32 0.0, %v3675
    %v3677 = vpop.f32.mrb[0].mxu0
    %3678 = vmatprep.mubr.f32.mxu0 0.0
    %3679 = vmatmul.mubr.f32.gmra.mrb[0].mxu0 %v3291
    %v3680 = vpop.f32.mrb[0].mxu0
    %v3681 = vadd.f32 0.0, %v3680
    %v3682 = vpop.f32.mrb[0].mxu0
    %3683 = vmatprep.mubr.f32.mxu0 0.0
    %3684 = vmatmul.mubr.f32.gmra.mrb[0].mxu0 %v3294
    %v3685 = vpop.f32.mrb[0].mxu0
    %v3686 = vadd.f32 0.0, %v3685
    %v3687 = vpop.f32.mrb[0].mxu0
    %3688 = vmatprep.mubr.f32.mxu0 0.0
    %3689 = vmatmul.mubr.f32.gmra.mrb[0].mxu0 %v3297
    %v3690 = vpop.f32.mrb[0].mxu0
    %v3691 = vadd.f32 0.0, %v3690
    %v3692 = vpop.f32.mrb[0].mxu0
    %3693 = vmatprep.mubr.f32.mxu0 0.0
    %3694 = vmatmul.mubr.f32.gmra.mrb[0].mxu0 %v3300
    %v3695 = vpop.f32.mrb[0].mxu0
    %v3696 = vadd.f32 0.0, %v3695
    %v3697 = vpop.f32.mrb[0].mxu0
    %3698 = vmatprep.mubr.f32.mxu0 0.0
    %3699 = vmatmul.mubr.f32.gmra.mrb[0].mxu0 %v3303
    %v3700 = vpop.f32.mrb[0].mxu0
    %v3701 = vadd.f32 0.0, %v3700
    %v3702 = vpop.f32.mrb[0].mxu0
    %3703 = vmatprep.mubr.f32.mxu0 0.0
    %3704 = vmatmul.mubr.f32.gmra.mrb[0].mxu0 %v3306
    %v3705 = vpop.f32.mrb[0].mxu0
    %v3706 = vadd.f32 0.0, %v3705
    %v3707 = vpop.f32.mrb[0].mxu0
    %3708 = vmatprep.mubr.f32.mxu0 0.0
    %3709 = vmatmul.mubr.f32.gmra.mrb[0].mxu0 %v3309
    %v3710 = vpop.f32.mrb[0].mxu0
    %v3711 = vadd.f32 0.0, %v3710
    %v3712 = vpop.f32.mrb[0].mxu0
    %3713 = vmatprep.mubr.f32.mxu0 0.0
    %3714 = vmatmul.mubr.f32.gmra.mrb[0].mxu0 %v3312
    %v3715 = vpop.f32.mrb[0].mxu0
    %v3716 = vadd.f32 0.0, %v3715
    %v3717 = vpop.f32.mrb[0].mxu0
    %3718 = vmatprep.mubr.f32.mxu0 0.0
    %3719 = vmatmul.mubr.f32.gmra.mrb[0].mxu0 %v3315
    %v3720 = vpop.f32.mrb[0].mxu0
    %v3721 = vadd.f32 0.0, %v3720
    %v3722 = vpop.f32.mrb[0].mxu0
    %3723 = vmatprep.mubr.f32.mxu0 0.0
    %3724 = vmatmul.mubr.f32.gmra.mrb[0].mxu0 %v3318
    %v3725 = vpop.f32.mrb[0].mxu0
    %v3726 = vadd.f32 0.0, %v3725
    %v3727 = vpop.f32.mrb[0].mxu0
    %3728 = vmatprep.mubr.f32.mxu0 0.0
    %3729 = vmatmul.mubr.f32.gmra.mrb[0].mxu0 %v3321
    %v3730 = vpop.f32.mrb[0].mxu0
    %v3731 = vadd.f32 0.0, %v3730
    %v3732 = vpop.f32.mrb[0].mxu0
    %3733 = vmatprep.mubr.f32.mxu0 0.0
    %3734 = vmatmul.mubr.f32.gmra.mrb[0].mxu0 %v3324
    %v3735 = vpop.f32.mrb[0].mxu0
    %v3736 = vadd.f32 0.0, %v3735
    %v3737 = vpop.f32.mrb[0].mxu0
    %3738 = vmatprep.mubr.f32.mxu0 0.0
    %3739 = vmatmul.mubr.f32.gmra.mrb[0].mxu0 %v3327
    %v3740 = vpop.f32.mrb[0].mxu0
    %v3741 = vadd.f32 0.0, %v3740
    %v3742 = vpop.f32.mrb[0].mxu0
    %3743 = vmatprep.mubr.f32.mxu0 0.0
    %3744 = vmatmul.mubr.f32.gmra.mrb[0].mxu0 %v3330
    %v3745 = vpop.f32.mrb[0].mxu0
    %v3746 = vadd.f32 0.0, %v3745
    %v3747 = vpop.f32.mrb[0].mxu0
    %3748 = vmatprep.mubr.f32.mxu0 0.0
    %3749 = vmatmul.mubr.f32.gmra.mrb[0].mxu0 %v3333
    %v3750 = vpop.f32.mrb[0].mxu0
    %v3751 = vadd.f32 0.0, %v3750
    %v3752 = vpop.f32.mrb[0].mxu0
    %3753 = vmatprep.mubr.f32.mxu0 0.0
    %3754 = vmatmul.mubr.f32.gmra.mrb[0].mxu0 %v3336
    %v3755 = vpop.f32.mrb[0].mxu0
    %v3756 = vadd.f32 0.0, %v3755
    %v3757 = vpop.f32.mrb[0].mxu0
    %3758 = vmatprep.mubr.f32.mxu0 0.0
    %3759 = vmatmul.mubr.f32.gmra.mrb[0].mxu0 %v3339
    %v3760 = vpop.f32.mrb[0].mxu0
    %v3761 = vadd.f32 0.0, %v3760
    %v3762 = vpop.f32.mrb[0].mxu0
    %3763 = vmatprep.mubr.f32.mxu0 0.0
    %3764 = vmatmul.mubr.f32.gmra.mrb[0].mxu0 %v3342
    %v3765 = vpop.f32.mrb[0].mxu0
    %v3766 = vadd.f32 0.0, %v3765
    %v3767 = vpop.f32.mrb[0].mxu0
    %3768 = vmatprep.mubr.f32.mxu0 0.0
    %3769 = vmatmul.mubr.f32.gmra.mrb[0].mxu0 %v3345
    %v3770 = vpop.f32.mrb[0].mxu0
    %v3771 = vadd.f32 0.0, %v3770
    %v3772 = vpop.f32.mrb[0].mxu0
    %3773 = vmatprep.mubr.f32.mxu0 0.0
    %3774 = vmatmul.mubr.f32.gmra.mrb[0].mxu0 %v3348
    %v3775 = vpop.f32.mrb[0].mxu0
    %v3776 = vadd.f32 0.0, %v3775
    %v3777 = vpop.f32.mrb[0].mxu0
    %3778 = vmatprep.mubr.f32.mxu0 0.0
    %3779 = vmatmul.mubr.f32.gmra.mrb[0].mxu0 %v3351
    %v3780 = vpop.f32.mrb[0].mxu0
    %v3781 = vadd.f32 0.0, %v3780
    %v3782 = vpop.f32.mrb[0].mxu0
    %3783 = vmatprep.mubr.f32.mxu0 0.0
    %3784 = vmatmul.mubr.f32.gmra.mrb[0].mxu0 %v3354
    %v3785 = vpop.f32.mrb[0].mxu0
    %v3786 = vadd.f32 0.0, %v3785
    %v3787 = vpop.f32.mrb[0].mxu0
    %3788 = vmatprep.mubr.f32.mxu0 0.0
    %3789 = vmatmul.mubr.f32.gmra.mrb[0].mxu0 %v3357
    %v3790 = vpop.f32.mrb[0].mxu0
    %v3791 = vadd.f32 0.0, %v3790
    %v3792 = vpop.f32.mrb[0].mxu0
    %3793 = vmatprep.mubr.f32.mxu0 0.0
    %3794 = vmatmul.mubr.f32.gmra.mrb[0].mxu0 %v3360
    %v3795 = vpop.f32.mrb[0].mxu0
    %v3796 = vadd.f32 0.0, %v3795
    %v3797 = vpop.f32.mrb[0].mxu0
    %3798 = vmatprep.mubr.f32.mxu0 0.0
    %3799 = vmatmul.mubr.f32.gmra.mrb[0].mxu0 %v3363
    %v3800 = vpop.f32.mrb[0].mxu0
    %v3801 = vadd.f32 0.0, %v3800
    %v3802 = vpop.f32.mrb[0].mxu0
    %3803 = vmatprep.mubr.f32.mxu0 0.0
    %3804 = vmatmul.mubr.f32.gmra.mrb[0].mxu0 %v3366
    %v3805 = vpop.f32.mrb[0].mxu0
    %v3806 = vadd.f32 0.0, %v3805
    %v3807 = vpop.f32.mrb[0].mxu0
    %3808 = vmatprep.mubr.f32.mxu0 0.0
    %3809 = vmatmul.mubr.f32.gmra.mrb[0].mxu0 %v3369
    %v3810 = vpop.f32.mrb[0].mxu0
    %v3811 = vadd.f32 0.0, %v3810
    %v3812 = vpop.f32.mrb[0].mxu0
    %3813 = vmatprep.mubr.f32.mxu0 0.0
    %3814 = vmatmul.mubr.f32.gmra.mrb[0].mxu0 %v3372
    %v3815 = vpop.f32.mrb[0].mxu0
    %v3816 = vadd.f32 0.0, %v3815
    %v3817 = vpop.f32.mrb[0].mxu0
    %3818 = vmatprep.mubr.f32.mxu0 0.0
    %3819 = vmatmul.mubr.f32.gmra.mrb[0].mxu0 %v3375
    %v3820 = vpop.f32.mrb[0].mxu0
    %v3821 = vadd.f32 0.0, %v3820
    %v3822 = vpop.f32.mrb[0].mxu0
    %3823 = vmatprep.mubr.f32.mxu0 0.0
    %3824 = vmatmul.mubr.f32.gmra.mrb[0].mxu0 %v3378
    %v3825 = vpop.f32.mrb[0].mxu0
    %v3826 = vadd.f32 0.0, %v3825
    %v3827 = vpop.f32.mrb[0].mxu0
    %3828 = vmatprep.mubr.f32.mxu0 0.0
    %3829 = vmatmul.mubr.f32.gmra.mrb[0].mxu0 %v3381
    %v3830 = vpop.f32.mrb[0].mxu0
    %v3831 = vadd.f32 0.0, %v3830
    %v3832 = vpop.f32.mrb[0].mxu0
    %3833 = vmatprep.mubr.f32.mxu0 0.0
    %3834 = vmatmul.mubr.f32.gmra.mrb[0].mxu0 %v3384
    %v3835 = vpop.f32.mrb[0].mxu0
    %v3836 = vadd.f32 0.0, %v3835
    %v3837 = vpop.f32.mrb[0].mxu0
    %3838 = vmatprep.mubr.f32.mxu0 0.0
    %3839 = vmatmul.mubr.f32.gmra.mrb[0].mxu0 %v3387
    %v3840 = vpop.f32.mrb[0].mxu0
    %v3841 = vadd.f32 0.0, %v3840
    %v3842 = vpop.f32.mrb[0].mxu0
    %3843 = vmatprep.mubr.f32.mxu0 0.0
    %3844 = vmatmul.mubr.f32.gmra.mrb[0].mxu0 %v3390
    %v3845 = vpop.f32.mrb[0].mxu0
    %v3846 = vadd.f32 0.0, %v3845
    %v3847 = vpop.f32.mrb[0].mxu0
    %3848 = vmatprep.mubr.f32.mxu0 0.0
    %3849 = vmatmul.mubr.f32.gmra.mrb[0].mxu0 %v3393
    %v3850 = vpop.f32.mrb[0].mxu0
    %v3851 = vadd.f32 0.0, %v3850
    %v3852 = vpop.f32.mrb[0].mxu0
    %3853 = vmatprep.mubr.f32.mxu0 0.0
    %3854 = vmatmul.mubr.f32.gmra.mrb[0].mxu0 %v3396
    %v3855 = vpop.f32.mrb[0].mxu0
    %v3856 = vadd.f32 0.0, %v3855
    %v3857 = vpop.f32.mrb[0].mxu0
    %3858 = vmatprep.mubr.f32.mxu0 0.0
    %3859 = vmatmul.mubr.f32.gmra.mrb[0].mxu0 %v3399
    %v3860 = vpop.f32.mrb[0].mxu0
    %v3861 = vadd.f32 0.0, %v3860
    %v3862 = vpop.f32.mrb[0].mxu0
    %3863 = vmatprep.mubr.f32.mxu0 0.0
    %3864 = vmatmul.mubr.f32.gmra.mrb[0].mxu0 %v3402
    %v3865 = vpop.f32.mrb[0].mxu0
    %v3866 = vadd.f32 0.0, %v3865
    %v3867 = vpop.f32.mrb[0].mxu0
    %3868 = vdwg.mxu0
    %v3869 = vmul.f32 %v3471, %v3471
    %v3870 = vmul.f32 %v3476, %v3476
    %v3871 = vmul.f32 %v3481, %v3481
    %v3872 = vmul.f32 %v3486, %v3486
    %v3873 = vmul.f32 %v3491, %v3491
    %v3874 = vmul.f32 %v3496, %v3496
    %v3875 = vmul.f32 %v3501, %v3501
    %v3876 = vmul.f32 %v3506, %v3506
    %v3877 = vmul.f32 %v3511, %v3511
    %v3878 = vmul.f32 %v3516, %v3516
    %v3879 = vmul.f32 %v3521, %v3521
    %v3880 = vmul.f32 %v3526, %v3526
    %v3881 = vmul.f32 %v3531, %v3531
    %v3882 = vmul.f32 %v3536, %v3536
    %v3883 = vmul.f32 %v3541, %v3541
    %v3884 = vmul.f32 %v3546, %v3546
    %v3885 = vmul.f32 %v3551, %v3551
    %v3886 = vmul.f32 %v3556, %v3556
    %v3887 = vmul.f32 %v3561, %v3561
    %v3888 = vmul.f32 %v3566, %v3566
    %v3889 = vmul.f32 %v3571, %v3571
    %v3890 = vmul.f32 %v3576, %v3576
    %v3891 = vmul.f32 %v3581, %v3581
    %v3892 = vmul.f32 %v3586, %v3586
    %v3893 = vmul.f32 %v3591, %v3591
    %v3894 = vmul.f32 %v3596, %v3596
    %v3895 = vmul.f32 %v3601, %v3601
    %v3896 = vmul.f32 %v3606, %v3606
    %v3897 = vmul.f32 %v3611, %v3611
    %v3898 = vmul.f32 %v3616, %v3616
    %v3899 = vmul.f32 %v3621, %v3621
    %v3900 = vmul.f32 %v3626, %v3626
    %v3901 = vmul.f32 %v3471, %v3551
    %v3902 = vmul.f32 %v3476, %v3556
    %v3903 = vmul.f32 %v3481, %v3561
    %v3904 = vmul.f32 %v3486, %v3566
    %v3905 = vmul.f32 %v3491, %v3571
    %v3906 = vmul.f32 %v3496, %v3576
    %v3907 = vmul.f32 %v3501, %v3581
    %v3908 = vmul.f32 %v3506, %v3586
    %v3909 = vmul.f32 %v3511, %v3591
    %v3910 = vmul.f32 %v3516, %v3596
    %v3911 = vmul.f32 %v3521, %v3601
    %v3912 = vmul.f32 %v3526, %v3606
    %v3913 = vmul.f32 %v3531, %v3611
    %v3914 = vmul.f32 %v3536, %v3616
    %v3915 = vmul.f32 %v3541, %v3621
    %v3916 = vmul.f32 %v3546, %v3626
    %v3917 = vsub.f32 %v3631, %v3869
    %v3918 = vsub.f32 %v3636, %v3870
    %v3919 = vsub.f32 %v3641, %v3871
    %v3920 = vsub.f32 %v3646, %v3872
    %v3921 = vsub.f32 %v3651, %v3873
    %v3922 = vsub.f32 %v3656, %v3874
    %v3923 = vsub.f32 %v3661, %v3875
    %v3924 = vsub.f32 %v3666, %v3876
    %v3925 = vsub.f32 %v3671, %v3877
    %v3926 = vsub.f32 %v3676, %v3878
    %v3927 = vsub.f32 %v3681, %v3879
    %v3928 = vsub.f32 %v3686, %v3880
    %v3929 = vsub.f32 %v3691, %v3881
    %v3930 = vsub.f32 %v3696, %v3882
    %v3931 = vsub.f32 %v3701, %v3883
    %v3932 = vsub.f32 %v3706, %v3884
    %v3933 = vsub.f32 %v3711, %v3885
    %v3934 = vsub.f32 %v3716, %v3886
    %v3935 = vsub.f32 %v3721, %v3887
    %v3936 = vsub.f32 %v3726, %v3888
    %v3937 = vsub.f32 %v3731, %v3889
    %v3938 = vsub.f32 %v3736, %v3890
    %v3939 = vsub.f32 %v3741, %v3891
    %v3940 = vsub.f32 %v3746, %v3892
    %v3941 = vsub.f32 %v3751, %v3893
    %v3942 = vsub.f32 %v3756, %v3894
    %v3943 = vsub.f32 %v3761, %v3895
    %v3944 = vsub.f32 %v3766, %v3896
    %v3945 = vsub.f32 %v3771, %v3897
    %v3946 = vsub.f32 %v3776, %v3898
    %v3947 = vsub.f32 %v3781, %v3899
    %v3948 = vsub.f32 %v3786, %v3900
    %v3949 = vsub.f32 %v3791, %v3901
    %v3950 = vsub.f32 %v3796, %v3902
    %v3951 = vsub.f32 %v3801, %v3903
    %v3952 = vsub.f32 %v3806, %v3904
    %v3953 = vsub.f32 %v3811, %v3905
    %v3954 = vsub.f32 %v3816, %v3906
    %v3955 = vsub.f32 %v3821, %v3907
    %v3956 = vsub.f32 %v3826, %v3908
    %v3957 = vsub.f32 %v3831, %v3909
    %v3958 = vsub.f32 %v3836, %v3910
    %v3959 = vsub.f32 %v3841, %v3911
    %v3960 = vsub.f32 %v3846, %v3912
    %v3961 = vsub.f32 %v3851, %v3913
    %v3962 = vsub.f32 %v3856, %v3914
    %v3963 = vsub.f32 %v3861, %v3915
    %v3964 = vsub.f32 %v3866, %v3916
    %v3965 = vmul.f32 %v3901, 2.0
    %v3966 = vmul.f32 %v3902, 2.0
    %v3967 = vmul.f32 %v3903, 2.0
    %v3968 = vmul.f32 %v3904, 2.0
    %v3969 = vmul.f32 %v3905, 2.0
    %v3970 = vmul.f32 %v3906, 2.0
    %v3971 = vmul.f32 %v3907, 2.0
    %v3972 = vmul.f32 %v3908, 2.0
    %v3973 = vmul.f32 %v3909, 2.0
    %v3974 = vmul.f32 %v3910, 2.0
    %v3975 = vmul.f32 %v3911, 2.0
    %v3976 = vmul.f32 %v3912, 2.0
    %v3977 = vmul.f32 %v3913, 2.0
    %v3978 = vmul.f32 %v3914, 2.0
    %v3979 = vmul.f32 %v3915, 2.0
    %v3980 = vmul.f32 %v3916, 2.0
    %v3981 = vadd.f32 %v3965, 0.0001
    %v3982 = vadd.f32 %v3966, 0.0001
    %v3983 = vadd.f32 %v3967, 0.0001
    %v3984 = vadd.f32 %v3968, 0.0001
    %v3985 = vadd.f32 %v3969, 0.0001
    %v3986 = vadd.f32 %v3970, 0.0001
    %v3987 = vadd.f32 %v3971, 0.0001
    %v3988 = vadd.f32 %v3972, 0.0001
    %v3989 = vadd.f32 %v3973, 0.0001
    %v3990 = vadd.f32 %v3974, 0.0001
    %v3991 = vadd.f32 %v3975, 0.0001
    %v3992 = vadd.f32 %v3976, 0.0001
    %v3993 = vadd.f32 %v3977, 0.0001
    %v3994 = vadd.f32 %v3978, 0.0001
    %v3995 = vadd.f32 %v3979, 0.0001
    %v3996 = vadd.f32 %v3980, 0.0001
    %v3997 = vmul.f32 %v3949, 2.0
    %v3998 = vmul.f32 %v3950, 2.0
    %v3999 = vmul.f32 %v3951, 2.0
    %v4000 = vmul.f32 %v3952, 2.0
    %v4001 = vmul.f32 %v3953, 2.0
    %v4002 = vmul.f32 %v3954, 2.0
    %v4003 = vmul.f32 %v3955, 2.0
    %v4004 = vmul.f32 %v3956, 2.0
    %v4005 = vmul.f32 %v3957, 2.0
    %v4006 = vmul.f32 %v3958, 2.0
    %v4007 = vmul.f32 %v3959, 2.0
    %v4008 = vmul.f32 %v3960, 2.0
    %v4009 = vmul.f32 %v3961, 2.0
    %v4010 = vmul.f32 %v3962, 2.0
    %v4011 = vmul.f32 %v3963, 2.0
    %v4012 = vmul.f32 %v3964, 2.0
    %v4013 = vadd.f32 %v3997, 0.0009
    %v4014 = vadd.f32 %v3998, 0.0009
    %v4015 = vadd.f32 %v3999, 0.0009
    %v4016 = vadd.f32 %v4000, 0.0009
    %v4017 = vadd.f32 %v4001, 0.0009
    %v4018 = vadd.f32 %v4002, 0.0009
    %v4019 = vadd.f32 %v4003, 0.0009
    %v4020 = vadd.f32 %v4004, 0.0009
    %v4021 = vadd.f32 %v4005, 0.0009
    %v4022 = vadd.f32 %v4006, 0.0009
    %v4023 = vadd.f32 %v4007, 0.0009
    %v4024 = vadd.f32 %v4008, 0.0009
    %v4025 = vadd.f32 %v4009, 0.0009
    %v4026 = vadd.f32 %v4010, 0.0009
    %v4027 = vadd.f32 %v4011, 0.0009
    %v4028 = vadd.f32 %v4012, 0.0009
    %v4029 = vmul.f32 %v3981, %v4013
    %v4030 = vmul.f32 %v3982, %v4014
    %v4031 = vmul.f32 %v3983, %v4015
    %v4032 = vmul.f32 %v3984, %v4016
    %v4033 = vmul.f32 %v3985, %v4017
    %v4034 = vmul.f32 %v3986, %v4018
    %v4035 = vmul.f32 %v3987, %v4019
    %v4036 = vmul.f32 %v3988, %v4020
    %v4037 = vmul.f32 %v3989, %v4021
    %v4038 = vmul.f32 %v3990, %v4022
    %v4039 = vmul.f32 %v3991, %v4023
    %v4040 = vmul.f32 %v3992, %v4024
    %v4041 = vmul.f32 %v3993, %v4025
    %v4042 = vmul.f32 %v3994, %v4026
    %v4043 = vmul.f32 %v3995, %v4027
    %v4044 = vmul.f32 %v3996, %v4028
    %v4045 = vadd.f32 %v3869, %v3885
    %v4046 = vadd.f32 %v3870, %v3886
    %v4047 = vadd.f32 %v3871, %v3887
    %v4048 = vadd.f32 %v3872, %v3888
    %v4049 = vadd.f32 %v3873, %v3889
    %v4050 = vadd.f32 %v3874, %v3890
    %v4051 = vadd.f32 %v3875, %v3891
    %v4052 = vadd.f32 %v3876, %v3892
    %v4053 = vadd.f32 %v3877, %v3893
    %v4054 = vadd.f32 %v3878, %v3894
    %v4055 = vadd.f32 %v3879, %v3895
    %v4056 = vadd.f32 %v3880, %v3896
    %v4057 = vadd.f32 %v3881, %v3897
    %v4058 = vadd.f32 %v3882, %v3898
    %v4059 = vadd.f32 %v3883, %v3899
    %v4060 = vadd.f32 %v3884, %v3900
    %v4061 = vadd.f32 %v4045, 0.0001
    %v4062 = vadd.f32 %v4046, 0.0001
    %v4063 = vadd.f32 %v4047, 0.0001
    %v4064 = vadd.f32 %v4048, 0.0001
    %v4065 = vadd.f32 %v4049, 0.0001
    %v4066 = vadd.f32 %v4050, 0.0001
    %v4067 = vadd.f32 %v4051, 0.0001
    %v4068 = vadd.f32 %v4052, 0.0001
    %v4069 = vadd.f32 %v4053, 0.0001
    %v4070 = vadd.f32 %v4054, 0.0001
    %v4071 = vadd.f32 %v4055, 0.0001
    %v4072 = vadd.f32 %v4056, 0.0001
    %v4073 = vadd.f32 %v4057, 0.0001
    %v4074 = vadd.f32 %v4058, 0.0001
    %v4075 = vadd.f32 %v4059, 0.0001
    %v4076 = vadd.f32 %v4060, 0.0001
    %v4077 = vadd.f32 %v3917, %v3933
    %v4078 = vadd.f32 %v3918, %v3934
    %v4079 = vadd.f32 %v3919, %v3935
    %v4080 = vadd.f32 %v3920, %v3936
    %v4081 = vadd.f32 %v3921, %v3937
    %v4082 = vadd.f32 %v3922, %v3938
    %v4083 = vadd.f32 %v3923, %v3939
    %v4084 = vadd.f32 %v3924, %v3940
    %v4085 = vadd.f32 %v3925, %v3941
    %v4086 = vadd.f32 %v3926, %v3942
    %v4087 = vadd.f32 %v3927, %v3943
    %v4088 = vadd.f32 %v3928, %v3944
    %v4089 = vadd.f32 %v3929, %v3945
    %v4090 = vadd.f32 %v3930, %v3946
    %v4091 = vadd.f32 %v3931, %v3947
    %v4092 = vadd.f32 %v3932, %v3948
    %v4093 = vadd.f32 %v4077, 0.0009
    %v4094 = vadd.f32 %v4078, 0.0009
    %v4095 = vadd.f32 %v4079, 0.0009
    %v4096 = vadd.f32 %v4080, 0.0009
    %v4097 = vadd.f32 %v4081, 0.0009
    %v4098 = vadd.f32 %v4082, 0.0009
    %v4099 = vadd.f32 %v4083, 0.0009
    %v4100 = vadd.f32 %v4084, 0.0009
    %v4101 = vadd.f32 %v4085, 0.0009
    %v4102 = vadd.f32 %v4086, 0.0009
    %v4103 = vadd.f32 %v4087, 0.0009
    %v4104 = vadd.f32 %v4088, 0.0009
    %v4105 = vadd.f32 %v4089, 0.0009
    %v4106 = vadd.f32 %v4090, 0.0009
    %v4107 = vadd.f32 %v4091, 0.0009
    %v4108 = vadd.f32 %v4092, 0.0009
    %v4109 = vmul.f32 %v4061, %v4093
    %v4110 = vmul.f32 %v4062, %v4094
    %v4111 = vmul.f32 %v4063, %v4095
    %v4112 = vmul.f32 %v4064, %v4096
    %v4113 = vmul.f32 %v4065, %v4097
    %v4114 = vmul.f32 %v4066, %v4098
    %v4115 = vmul.f32 %v4067, %v4099
    %v4116 = vmul.f32 %v4068, %v4100
    %v4117 = vmul.f32 %v4069, %v4101
    %v4118 = vmul.f32 %v4070, %v4102
    %v4119 = vmul.f32 %v4071, %v4103
    %v4120 = vmul.f32 %v4072, %v4104
    %v4121 = vmul.f32 %v4073, %v4105
    %v4122 = vmul.f32 %v4074, %v4106
    %v4123 = vmul.f32 %v4075, %v4107
    %v4124 = vmul.f32 %v4076, %v4108
    %v4125 = vrcp.pop %v4109
    %v4126 = vmul.f32 %v4029, %v4125
    %v4127 = vrcp.pop %v4110
    %v4128 = vmul.f32 %v4030, %v4127
    %v4129 = vrcp.pop %v4111
    %v4130 = vmul.f32 %v4031, %v4129
    %v4131 = vrcp.pop %v4112
    %v4132 = vmul.f32 %v4032, %v4131
    %v4133 = vrcp.pop %v4113
    %v4134 = vmul.f32 %v4033, %v4133
    %v4135 = vrcp.pop %v4114
    %v4136 = vmul.f32 %v4034, %v4135
    %v4137 = vrcp.pop %v4115
    %v4138 = vmul.f32 %v4035, %v4137
    %v4139 = vrcp.pop %v4116
    %v4140 = vmul.f32 %v4036, %v4139
    %v4141 = vrcp.pop %v4117
    %v4142 = vmul.f32 %v4037, %v4141
    %v4143 = vrcp.pop %v4118
    %v4144 = vmul.f32 %v4038, %v4143
    %v4145 = vrcp.pop %v4119
    %v4146 = vmul.f32 %v4039, %v4145
    %v4147 = vrcp.pop %v4120
    %v4148 = vmul.f32 %v4040, %v4147
    %v4149 = vrcp.pop %v4121
    %v4150 = vmul.f32 %v4041, %v4149
    %v4151 = vrcp.pop %v4122
    %v4152 = vmul.f32 %v4042, %v4151
    %v4153 = vrcp.pop %v4123
    %v4154 = vmul.f32 %v4043, %v4153
    %v4155 = vrcp.pop %v4124
    %v4156 = vmul.f32 %v4044, %v4155
    %v4157 = vsel %vm157, %v4126, 0.0
    %v4158 = vsel %vm157, %v4128, 0.0
    %v4159 = vadd.f32 %v4157, %v4158
    %v4160 = vsel %vm157, %v4130, 0.0
    %v4161 = vadd.f32 %v4159, %v4160
    %v4162 = vsel %vm157, %v4132, 0.0
    %v4163 = vadd.f32 %v4161, %v4162
    %v4164 = vsel %vm157, %v4134, 0.0
    %v4165 = vadd.f32 %v4163, %v4164
    %v4166 = vsel %vm157, %v4136, 0.0
    %v4167 = vadd.f32 %v4165, %v4166
    %v4168 = vsel %vm157, %v4138, 0.0
    %v4169 = vadd.f32 %v4167, %v4168
    %v4170 = vsel %vm157, %v4140, 0.0
    %v4171 = vadd.f32 %v4169, %v4170
    %v4172 = vsel %vm157, %v4142, 0.0
    %v4173 = vadd.f32 %v4171, %v4172
    %v4174 = vsel %vm157, %v4144, 0.0
    %v4175 = vadd.f32 %v4173, %v4174
    %v4176 = vsel %vm157, %v4146, 0.0
    %v4177 = vadd.f32 %v4175, %v4176
    %v4178 = vsel %vm157, %v4148, 0.0
    %v4179 = vadd.f32 %v4177, %v4178
    %v4180 = vsel %vm157, %v4150, 0.0
    %v4181 = vadd.f32 %v4179, %v4180
    %v4182 = vsel %vm157, %v4152, 0.0
    %v4183 = vadd.f32 %v4181, %v4182
    %v4184 = vsel %vm157, %v4154, 0.0
    %v4185 = vadd.f32 %v4183, %v4184
    %v4186 = vsel %vm157, %v4156, 0.0
    %v4187 = vadd.f32 %v4185, %v4186
    %4188 = vadd.xlane.f32.xlu0 %v4187
    %v4189 = vpop.xlane.xlu0 %4188
    %v4190 = vrot.slane %v4189, 4
    %v4191 = vadd.f32 %v4189, %v4190
    %v4192 = vrot.slane %v4191, 2
    %v4193 = vadd.f32 %v4191, %v4192
    %v4194 = vrot.slane %v4193, 1
    %v4195 = vadd.f32 %v4193, %v4194
    %s4196 = vtos %v4195
    %v4197 = vstv %s4196
    %4198 = vst [vmem:[#allocation10] sm:$0xff] %v4197
    // Predicated region
    $region34: #{tpu_custom_call.1} parent=1 // pred_check
      _
    $region35: #{tpu_custom_call.1} parent=1 // pred_check_branch
      %4200 = sbr.rel (0) target = $region37
    $region36: #{tpu_custom_call.1} parent=1 // pred_region
      %s4202 = ssub.s32 128, 128
      %4203 = vsyncadd [#allocation4], %s4202
      %s4205 = sshll.u32 [#allocation10], 4
      %s4206 = int_to_ptr.vmem [resolvable:$true] %s4205
      %4208 = dma.vmem_to_hbm [thread:$0]  %s4206, 128, %s4, [#allocation4]
    $region37: #{tpu_custom_call.1} parent=1 // pred_fallthru
      _
    // Predicated region
    $region38: #{tpu_custom_call.1} parent=1 // pred_check
      _
    $region39: #{tpu_custom_call.1} parent=1 // pred_check_branch
      %4210 = sbr.rel (0) target = $region41
    $region40: #{tpu_custom_call.1} parent=1 // pred_region
      %4211 = dma.done [#allocation4], 128
    $region41: #{tpu_custom_call.1} parent=1 // pred_fallthru
      _
    %4212 = vsyncpa [#allocation3], 1
    %4213 = vsyncpa [#allocation6], 1
    %4214 = vsyncpa [#allocation9], 1
    %4215 = vsyncpa [#allocation4], 1

</llo_original>
